<compile_context>
chip_gen: v7x
topology: tpu7x:2x2x1
jax: 0.10.0
libtpu: 0.0.40
codegen_flags: <defaults>
</compile_context>

<pallas_src>
import jax
import jax.numpy as jnp
from jax.experimental import pallas as pl
from jax.experimental.pallas import tpu as pltpu

# ----- problem sizes (chosen so x.view(-1, 32*input_size) keeps the batch dim) -----
B = 2                         # batch for the demo run
C_IN = 8                      # input_size (Conv1d in_channels)
K = 5                         # Conv1d kernel_size
L_IN = C_IN + 3 * (K - 1)     # = 20, so that length after three VALID convs == C_IN
L1 = L_IN - (K - 1)           # 16
L2 = L1 - (K - 1)             # 12
L3 = L2 - (K - 1)             # 8  (== C_IN)
F1_IN = 32 * C_IN             # 256 (== 32 * L3, required for the .view to be shape-consistent)
HID = 256
X_FLAT = C_IN * L_IN          # 160

N1 = 32 * L1                  # 512  (conv1 out, flattened)
N2 = 64 * L2                  # 768  (conv2 out, flattened)
N3 = 32 * L3                  # 256  (conv3 out, flattened == F1_IN)
NB_TOT = N1 + N2 + N3 + HID + 1   # 1793 packed bias slab width (offsets all 128-aligned)

B_TILE = 256                  # batch rows per grid step (use 128 on v5e if profiling says so)


# --------------------------- fused Pallas kernel ---------------------------

def fused_kernel(x_ref, w1_ref, w2_ref, w3_ref, fc1_ref, fc2_ref, b_ref, out_ref):
    """One grid step = B_TILE samples through the whole network.

    x_ref   : (B_TILE, C_IN*L_IN) f32   flattened input slab (grid-indexed)
    w1_ref  : (C_IN*L_IN, N1)     bf16  conv1 as dense Toeplitz (grid-resident)
    w2_ref  : (N1, N2)            bf16  conv2 as dense Toeplitz (grid-resident)
    w3_ref  : (N2, N3)            bf16  conv3 as dense Toeplitz (grid-resident)
    fc1_ref : (F1_IN, HID)        bf16  fc1 weight, transposed  (grid-resident)
    fc2_ref : (1, HID)            f32   fc2 weight as a row     (grid-resident)
    b_ref   : (1, NB_TOT)         f32   packed biases [b1|b2|b3|fc1_b|fc2_b] (grid-resident)
    out_ref : (B_TILE, 1)         f32
    """
    b1 = b_ref[:, 0:N1]
    b2 = b_ref[:, N1:N1 + N2]
    b3 = b_ref[:, N1 + N2:N1 + N2 + N3]
    b4 = b_ref[:, N1 + N2 + N3:N1 + N2 + N3 + HID]
    b5 = b_ref[:, NB_TOT - 1:NB_TOT]

    # bf16 x bf16 -> f32 on the MXU; bias-add / ReLU stay f32 (VPU-legal on all generations).
    h = x_ref[...].astype(jnp.bfloat16)                                                   # (Bt, 160)
    h = jnp.maximum(jnp.dot(h, w1_ref[...],
                            preferred_element_type=jnp.float32) + b1, 0.0)                # (Bt, 512)
    h = jnp.maximum(jnp.dot(h.astype(jnp.bfloat16), w2_ref[...],
                            preferred_element_type=jnp.float32) + b2, 0.0)                # (Bt, 768)
    h = jnp.maximum(jnp.dot(h.astype(jnp.bfloat16), w3_ref[...],
                            preferred_element_type=jnp.float32) + b3, 0.0)                # (Bt, 256) == flatten
    h = jnp.maximum(jnp.dot(h.astype(jnp.bfloat16), fc1_ref[...],
                            preferred_element_type=jnp.float32) + b4, 0.0)                # (Bt, 256)
    # fc2: N=1 output -> VPU multiply + lane reduce instead of a lane-sparse matmul.
    out_ref[...] = jnp.sum(h * fc2_ref[...], axis=-1, keepdims=True) + b5                 # (Bt, 1)


# --------------------------- param preparation (hoisted out of forward) ---------------------------

def _conv_to_dense(w, b, l_in, l_out):
    """Conv1d (VALID, stride 1) weight (Cout, Cin, K) -> dense (Cin*l_in, Cout*l_out) Toeplitz.

    Column ordering is Cout-major / l-minor, row ordering Cin-major / position-minor, so
    flattened (channel-major) activations pass straight through, matching torch semantics.
    """
    c_out, c_in, k = w.shape
    wt = jnp.zeros((c_in, l_in, c_out, l_out), jnp.float32)
    for t in range(k):
        eye_t = jnp.eye(l_in, l_out, k=-t, dtype=jnp.float32)   # eye_t[l + t, l] = 1
        wt = wt + jnp.einsum('oi,pl->ipol', w[:, :, t].astype(jnp.float32), eye_t)
    wt = wt.reshape(c_in * l_in, c_out * l_out)
    bt = jnp.repeat(b.astype(jnp.float32), l_out)[None, :]       # (1, Cout*l_out)
    return wt, bt


def prepare_params(params):
    """One-time layout prep: bf16 Toeplitz conv weights, bf16 transposed fc1, packed f32 biases."""
    w1, b1, w2, b2, w3, b3, fc1_w, fc1_b, fc2_w, fc2_b = params
    w1d, b1d = _conv_to_dense(w1, b1, L_IN, L1)     # (160, 512), (1, 512)
    w2d, b2d = _conv_to_dense(w2, b2, L1, L2)       # (512, 768), (1, 768)
    w3d, b3d = _conv_to_dense(w3, b3, L2, L3)       # (768, 256), (1, 256)
    bias_all = jnp.concatenate(
        [b1d, b2d, b3d,
         fc1_b.astype(jnp.float32)[None, :],
         fc2_b.astype(jnp.float32)[None, :]], axis=1)            # (1, 1793)
    return (w1d.astype(jnp.bfloat16),
            w2d.astype(jnp.bfloat16),
            w3d.astype(jnp.bfloat16),
            fc1_w.T.astype(jnp.bfloat16),                        # (F1_IN, HID)
            fc2_w.astype(jnp.float32),                           # (1, HID) row
            bias_all)


# --------------------------- forward ---------------------------

@jax.jit
def cnn_smem_forward(x, prepped):
    w1d, w2d, w3d, fc1_wt, fc2_row, bias_all = prepped
    n = x.shape[0]
    x_flat = x.reshape(n, X_FLAT)                    # contiguous flatten, free at the XLA level
    n_pad = pl.cdiv(n, B_TILE) * B_TILE
    if n_pad != n:
        x_flat = jnp.pad(x_flat, ((0, n_pad - n), (0, 0)))
    grid = (n_pad // B_TILE,)

    out = pl.pallas_call(
        fused_kernel,
        grid_spec=pltpu.PrefetchScalarGridSpec(
            num_scalar_prefetch=0,
            grid=grid,
            in_specs=[
                pl.BlockSpec((B_TILE, X_FLAT), lambda i: (i, 0)),   # streamed input slab
                pl.BlockSpec((X_FLAT, N1), lambda i: (0, 0)),       # grid-resident weights
                pl.BlockSpec((N1, N2), lambda i: (0, 0)),
                pl.BlockSpec((N2, N3), lambda i: (0, 0)),
                pl.BlockSpec((F1_IN, HID), lambda i: (0, 0)),
                pl.BlockSpec((1, HID), lambda i: (0, 0)),
                pl.BlockSpec((1, NB_TOT), lambda i: (0, 0)),        # packed biases
            ],
            out_specs=pl.BlockSpec((B_TILE, 1), lambda i: (i, 0)),
        ),
        out_shape=jax.ShapeDtypeStruct((n_pad, 1), jnp.float32),
        compiler_params=pltpu.CompilerParams(
            dimension_semantics=("parallel",)),                     # megacore sharding on v7x
    )(x_flat, w1d, w2d, w3d, fc1_wt, fc2_row, bias_all)
    return out[:n]


# --------------------------- pure-JAX references ---------------------------

def conv1d_ref(x, w, b):
    out = jax.lax.conv_general_dilated(
        x, w, window_strides=(1,), padding="VALID",
        dimension_numbers=("NCH", "OIH", "NCH"))
    return out + b[None, :, None]


def forward_ref_f32(x, params):
    """Exact f32 reference matching the PyTorch module semantics."""
    w1, b1, w2, b2, w3, b3, fc1_w, fc1_b, fc2_w, fc2_b = params
    h = jax.nn.relu(conv1d_ref(x, w1, b1))
    h = jax.nn.relu(conv1d_ref(h, w2, b2))
    h = jax.nn.relu(conv1d_ref(h, w3, b3))
    flat = h.reshape(-1, F1_IN)
    h = jax.nn.relu(flat @ fc1_w.T + fc1_b)
    return h @ fc2_w.T + fc2_b


def forward_ref_bf16(x, params):
    """Reference with the same bf16-weight / bf16-activation quantization as the kernel."""
    w1, b1, w2, b2, w3, b3, fc1_w, fc1_b, fc2_w, fc2_b = params
    bf = jnp.bfloat16

    def conv(h, w, b):
        out = jax.lax.conv_general_dilated(
            h.astype(bf), w.astype(bf), window_strides=(1,), padding="VALID",
            dimension_numbers=("NCH", "OIH", "NCH"),
            preferred_element_type=jnp.float32)
        return out + b.astype(jnp.float32)[None, :, None]

    h = jax.nn.relu(conv(x, w1, b1))
    h = jax.nn.relu(conv(h, w2, b2))
    h = jax.nn.relu(conv(h, w3, b3))
    flat = h.reshape(-1, F1_IN)
    h = jax.nn.relu(jnp.dot(flat.astype(bf), fc1_w.T.astype(bf),
                            preferred_element_type=jnp.float32) + fc1_b)
    return h @ fc2_w.T.astype(jnp.float32) + fc2_b


# --------------------------- init + main ---------------------------

def init_params(key):
    def uinit(k, shape, fan_in):
        bound = 1.0 / jnp.sqrt(jnp.float32(fan_in))
        return jax.random.uniform(k, shape, jnp.float32, -bound, bound)

    ks = jax.random.split(key, 10)
    w1 = uinit(ks[0], (32, C_IN, K), C_IN * K)
    b1 = uinit(ks[1], (32,), C_IN * K)
    w2 = uinit(ks[2], (64, 32, K), 32 * K)
    b2 = uinit(ks[3], (64,), 32 * K)
    w3 = uinit(ks[4], (32, 64, K), 64 * K)
    b3 = uinit(ks[5], (32,), 64 * K)
    fc1_w = uinit(ks[6], (HID, F1_IN), F1_IN)
    fc1_b = uinit(ks[7], (HID,), F1_IN)
    fc2_w = uinit(ks[8], (1, HID), HID)
    fc2_b = uinit(ks[9], (1,), HID)
    return (w1, b1, w2, b2, w3, b3, fc1_w, fc1_b, fc2_w, fc2_b)


if __name__ == "__main__":
    key = jax.random.PRNGKey(0)
    kx, kp = jax.random.split(key)
    x = jax.random.normal(kx, (B, C_IN, L_IN), jnp.float32)
    params = init_params(kp)

    prepped = jax.block_until_ready(prepare_params(params))   # one-time layout prep

    out = cnn_smem_forward(x, prepped)
    out = jax.block_until_ready(out)
    assert out.shape == (B, 1), out.shape

    # Primary check: match a reference with the identical bf16-weight quantization.
    ref_bf16 = forward_ref_bf16(x, params)
    err_bf16 = float(jnp.max(jnp.abs(out - ref_bf16)))
    assert err_bf16 < 2e-3, f"max abs error vs bf16-matched reference {err_bf16}"

    # Secondary check: still close to the exact f32 module semantics (bf16 weights only).
    ref_f32 = forward_ref_f32(x, params)
    err_f32 = float(jnp.max(jnp.abs(out - ref_f32)))
    assert err_f32 < 5e-2, f"max abs error vs f32 reference {err_f32}"

    print("KERNEL_OK")
</pallas_src>

<mosaic_0001>
module attributes {stable_mosaic.version = 11 : i64} {
  func.func @fused_kernel(%arg0: i32, %arg1: memref<256x160xf32, #tpu.memory_space<vmem>>, %arg2: memref<160x512xbf16, #tpu.memory_space<vmem>>, %arg3: memref<512x768xbf16, #tpu.memory_space<vmem>>, %arg4: memref<768x256xbf16, #tpu.memory_space<vmem>>, %arg5: memref<256x256xbf16, #tpu.memory_space<vmem>>, %arg6: memref<1x256xf32, #tpu.memory_space<vmem>>, %arg7: memref<1x1793xf32, #tpu.memory_space<vmem>>, %arg8: memref<256x1xf32, #tpu.memory_space<vmem>>) attributes {dimension_semantics = [#tpu.dimension_semantics<parallel>], iteration_bounds = array<i64: 1>, scalar_prefetch = 0 : i64, scratch_operands = 0 : i64, tpu.core_type = #tpu.core_type<tc>, window_params = [{transform_indices = @transform_0, window_bounds = array<i64: 256, 160>}, {pipeline_mode = #tpu.pipeline_mode<synchronous>, transform_indices = @transform_1, window_bounds = array<i64: 160, 512>}, {pipeline_mode = #tpu.pipeline_mode<synchronous>, transform_indices = @transform_2, window_bounds = array<i64: 512, 768>}, {pipeline_mode = #tpu.pipeline_mode<synchronous>, transform_indices = @transform_3, window_bounds = array<i64: 768, 256>}, {pipeline_mode = #tpu.pipeline_mode<synchronous>, transform_indices = @transform_4, window_bounds = array<i64: 256, 256>}, {pipeline_mode = #tpu.pipeline_mode<synchronous>, transform_indices = @transform_5, window_bounds = array<i64: 1, 256>}, {pipeline_mode = #tpu.pipeline_mode<synchronous>, transform_indices = @transform_6, window_bounds = array<i64: 1, 1793>}, {transform_indices = @transform_7, window_bounds = array<i64: 256, 1>}]} {
    %c0 = arith.constant 0 : index
    %c0_0 = arith.constant 0 : index
    %0 = vector.load %arg7[%c0, %c0_0] : memref<1x1793xf32, #tpu.memory_space<vmem>>, vector<1x512xf32>
    %c0_1 = arith.constant 0 : index
    %c512 = arith.constant 512 : index
    %1 = vector.load %arg7[%c0_1, %c512] : memref<1x1793xf32, #tpu.memory_space<vmem>>, vector<1x768xf32>
    %c0_2 = arith.constant 0 : index
    %c1280 = arith.constant 1280 : index
    %2 = vector.load %arg7[%c0_2, %c1280] : memref<1x1793xf32, #tpu.memory_space<vmem>>, vector<1x256xf32>
    %c0_3 = arith.constant 0 : index
    %c1536 = arith.constant 1536 : index
    %3 = vector.load %arg7[%c0_3, %c1536] : memref<1x1793xf32, #tpu.memory_space<vmem>>, vector<1x256xf32>
    %c0_4 = arith.constant 0 : index
    %c1792 = arith.constant 1792 : index
    %4 = vector.load %arg7[%c0_4, %c1792] : memref<1x1793xf32, #tpu.memory_space<vmem>>, vector<1x1xf32>
    %c0_5 = arith.constant 0 : index
    %c0_6 = arith.constant 0 : index
    %5 = vector.load %arg1[%c0_5, %c0_6] : memref<256x160xf32, #tpu.memory_space<vmem>>, vector<256x160xf32>
    %6 = arith.truncf %5 : vector<256x160xf32> to vector<256x160xbf16>
    %c0_7 = arith.constant 0 : index
    %c0_8 = arith.constant 0 : index
    %7 = vector.load %arg2[%c0_7, %c0_8] : memref<160x512xbf16, #tpu.memory_space<vmem>>, vector<160x512xbf16>
    %cst = arith.constant dense<0.000000e+00> : vector<256x512xf32>
    %8 = tpu.matmul %6, %7, %cst {dimension_numbers = #tpu.dot_dimension_numbers<[1], [0], [0], [1], [0, 0, 1, 1], [], []>} : vector<256x160xbf16>, vector<160x512xbf16>, vector<256x512xf32> -> vector<256x512xf32>
    %9 = vector.broadcast %0 : vector<1x512xf32> to vector<256x512xf32>
    %10 = arith.addf %8, %9 : vector<256x512xf32>
    %cst_9 = arith.constant 0.000000e+00 : f32
    %11 = vector.broadcast %cst_9 : f32 to vector<256x512xf32>
    %12 = arith.maximumf %10, %11 : vector<256x512xf32>
    %13 = arith.truncf %12 : vector<256x512xf32> to vector<256x512xbf16>
    %c0_10 = arith.constant 0 : index
    %c0_11 = arith.constant 0 : index
    %14 = vector.load %arg3[%c0_10, %c0_11] : memref<512x768xbf16, #tpu.memory_space<vmem>>, vector<512x768xbf16>
    %cst_12 = arith.constant dense<0.000000e+00> : vector<256x768xf32>
    %15 = tpu.matmul %13, %14, %cst_12 {dimension_numbers = #tpu.dot_dimension_numbers<[1], [0], [0], [1], [0, 0, 1, 1], [], []>} : vector<256x512xbf16>, vector<512x768xbf16>, vector<256x768xf32> -> vector<256x768xf32>
    %16 = vector.broadcast %1 : vector<1x768xf32> to vector<256x768xf32>
    %17 = arith.addf %15, %16 : vector<256x768xf32>
    %cst_13 = arith.constant 0.000000e+00 : f32
    %18 = vector.broadcast %cst_13 : f32 to vector<256x768xf32>
    %19 = arith.maximumf %17, %18 : vector<256x768xf32>
    %20 = arith.truncf %19 : vector<256x768xf32> to vector<256x768xbf16>
    %c0_14 = arith.constant 0 : index
    %c0_15 = arith.constant 0 : index
    %21 = vector.load %arg4[%c0_14, %c0_15] : memref<768x256xbf16, #tpu.memory_space<vmem>>, vector<768x256xbf16>
    %cst_16 = arith.constant dense<0.000000e+00> : vector<256x256xf32>
    %22 = tpu.matmul %20, %21, %cst_16 {dimension_numbers = #tpu.dot_dimension_numbers<[1], [0], [0], [1], [0, 0, 1, 1], [], []>} : vector<256x768xbf16>, vector<768x256xbf16>, vector<256x256xf32> -> vector<256x256xf32>
    %23 = vector.broadcast %2 : vector<1x256xf32> to vector<256x256xf32>
    %24 = arith.addf %22, %23 : vector<256x256xf32>
    %cst_17 = arith.constant 0.000000e+00 : f32
    %25 = vector.broadcast %cst_17 : f32 to vector<256x256xf32>
    %26 = arith.maximumf %24, %25 : vector<256x256xf32>
    %27 = arith.truncf %26 : vector<256x256xf32> to vector<256x256xbf16>
    %c0_18 = arith.constant 0 : index
    %c0_19 = arith.constant 0 : index
    %28 = vector.load %arg5[%c0_18, %c0_19] : memref<256x256xbf16, #tpu.memory_space<vmem>>, vector<256x256xbf16>
    %cst_20 = arith.constant dense<0.000000e+00> : vector<256x256xf32>
    %29 = tpu.matmul %27, %28, %cst_20 {dimension_numbers = #tpu.dot_dimension_numbers<[1], [0], [0], [1], [0, 0, 1, 1], [], []>} : vector<256x256xbf16>, vector<256x256xbf16>, vector<256x256xf32> -> vector<256x256xf32>
    %30 = vector.broadcast %3 : vector<1x256xf32> to vector<256x256xf32>
    %31 = arith.addf %29, %30 : vector<256x256xf32>
    %cst_21 = arith.constant 0.000000e+00 : f32
    %32 = vector.broadcast %cst_21 : f32 to vector<256x256xf32>
    %33 = arith.maximumf %31, %32 : vector<256x256xf32>
    %c0_22 = arith.constant 0 : index
    %c0_23 = arith.constant 0 : index
    %34 = vector.load %arg6[%c0_22, %c0_23] : memref<1x256xf32, #tpu.memory_space<vmem>>, vector<1x256xf32>
    %35 = vector.broadcast %34 : vector<1x256xf32> to vector<256x256xf32>
    %36 = arith.mulf %33, %35 : vector<256x256xf32>
    %cst_24 = arith.constant dense<0.000000e+00> : vector<256xf32>
    %37 = vector.multi_reduction <add>, %36, %cst_24 [1] : vector<256x256xf32> to vector<256xf32>
    %38 = vector.shape_cast %37 : vector<256xf32> to vector<256x1xf32>
    %39 = vector.broadcast %4 : vector<1x1xf32> to vector<256x1xf32>
    %40 = arith.addf %38, %39 : vector<256x1xf32>
    %c0_25 = arith.constant 0 : index
    %c0_26 = arith.constant 0 : index
    %41 = vector.load %arg8[%c0_25, %c0_26] : memref<256x1xf32, #tpu.memory_space<vmem>>, vector<256x1xf32>
    tpu.vector_store %arg8[%c0_25, %c0_26], %40 {strides = array<i32>} : memref<256x1xf32, #tpu.memory_space<vmem>>, vector<256x1xf32>,
    return
  }
  func.func @transform_0(%arg0: i32) -> (i32, i32) {
    %c0_i32 = arith.constant 0 : i32
    %c0_i32_0 = arith.constant 0 : i32
    return %arg0, %c0_i32 : i32, i32
  }
  func.func @transform_1(%arg0: i32) -> (i32, i32) {
    %c0_i32 = arith.constant 0 : i32
    %c0_i32_0 = arith.constant 0 : i32
    %c0_i32_1 = arith.constant 0 : i32
    return %c0_i32, %c0_i32_0 : i32, i32
  }
  func.func @transform_2(%arg0: i32) -> (i32, i32) {
    %c0_i32 = arith.constant 0 : i32
    %c0_i32_0 = arith.constant 0 : i32
    %c0_i32_1 = arith.constant 0 : i32
    return %c0_i32, %c0_i32_0 : i32, i32
  }
  func.func @transform_3(%arg0: i32) -> (i32, i32) {
    %c0_i32 = arith.constant 0 : i32
    %c0_i32_0 = arith.constant 0 : i32
    %c0_i32_1 = arith.constant 0 : i32
    return %c0_i32, %c0_i32_0 : i32, i32
  }
  func.func @transform_4(%arg0: i32) -> (i32, i32) {
    %c0_i32 = arith.constant 0 : i32
    %c0_i32_0 = arith.constant 0 : i32
    %c0_i32_1 = arith.constant 0 : i32
    return %c0_i32, %c0_i32_0 : i32, i32
  }
  func.func @transform_5(%arg0: i32) -> (i32, i32) {
    %c0_i32 = arith.constant 0 : i32
    %c0_i32_0 = arith.constant 0 : i32
    %c0_i32_1 = arith.constant 0 : i32
    return %c0_i32, %c0_i32_0 : i32, i32
  }
  func.func @transform_6(%arg0: i32) -> (i32, i32) {
    %c0_i32 = arith.constant 0 : i32
    %c0_i32_0 = arith.constant 0 : i32
    %c0_i32_1 = arith.constant 0 : i32
    return %c0_i32, %c0_i32_0 : i32, i32
  }
  func.func @transform_7(%arg0: i32) -> (i32, i32) {
    %c0_i32 = arith.constant 0 : i32
    %c0_i32_0 = arith.constant 0 : i32
    return %arg0, %c0_i32 : i32, i32
  }
}

</mosaic_0001>

<llo_original>
// kernel: cnn_smem_forward.1
$region0: #{cnn_smem_forward.1}
  #allocation0 [shape = 'u32[]', space=smem, size = 0x4, offset = 0x4, fixed_abs, tag = 'smem constant byte address 0x4 - core index']
  #allocation1 [shape = 'u32[144,128]{1,0:T(1,128)}', space=vmem, size = 0x12000, scoped, tag = 'internal scratch']
  %s0 = inlined_call_operand.vmem [shape: f32[256,160], index: 0, kind: input, shape index: {}]
  %s1 = inlined_call_operand.vmem [shape: bf16[160,512], index: 1, kind: input, shape index: {}]
  %s2 = inlined_call_operand.hbm [shape: bf16[512,768], index: 2, kind: input, shape index: {}]
  %s3 = inlined_call_operand.hbm [shape: bf16[768,256], index: 3, kind: input, shape index: {}]
  %s4 = inlined_call_operand.hbm [shape: bf16[256,256], index: 4, kind: input, shape index: {}]
  %s5 = inlined_call_operand.vmem [shape: f32[1,256], index: 5, kind: input, shape index: {}]
  %s6 = inlined_call_operand.vmem [shape: f32[1,1793], index: 6, kind: input, shape index: {}]
  %s7 = inlined_call_operand.vmem [shape: f32[256,1], index: 7, kind: output, shape index: {}]
  %s8 = sld [smem:[#allocation0]]
  $region50: #{cnn_smem_forward.1} parent=0
    _
  %s10 = ssub.s32 1, %s8
  %s11 = scalar_select 0, %s10, %s8
  $region1: #{cnn_smem_forward.1} parent=0
    #allocation2 [shape = 'u8[786432]{0}', space=vmem, size = 0xc0000, scoped, tag = 'input window, operand 2, single buffered']
    #allocation3 [shape = 's32[1]{0}', space=sflag, size = 0x4, scoped, tag = 'scoped memory for cnn_smem_forward.1']
    #allocation4 [shape = 'u8[393216]{0}', space=vmem, size = 0x60000, scoped, tag = 'input window, operand 3, single buffered']
    #allocation5 [shape = 's32[1]{0}', space=sflag, size = 0x4, scoped, tag = 'scoped memory for cnn_smem_forward.1']
    #allocation6 [shape = 'u8[131072]{0}', space=vmem, size = 0x20000, scoped, tag = 'input window, operand 4, single buffered']
    %12 = vsyncpa [#allocation3], 0
    %13 = vsyncpa [#allocation5], 0
    // Predicated region
    $region2: #{cnn_smem_forward.1} parent=1 // pred_check
      _
    $region3: #{cnn_smem_forward.1} parent=1 // pred_check_branch
      %15 = sbr.rel (0) target = $region5
    $region4: #{cnn_smem_forward.1} parent=1 // pred_region
      _
    $region5: #{cnn_smem_forward.1} parent=1 // pred_fallthru
      _
    // Predicated region
    $region6: #{cnn_smem_forward.1} parent=1 // pred_check
      _
    $region7: #{cnn_smem_forward.1} parent=1 // pred_check_branch
      %17 = sbr.rel (0) target = $region9
    $region8: #{cnn_smem_forward.1} parent=1 // pred_region
      _
    $region9: #{cnn_smem_forward.1} parent=1 // pred_fallthru
      _
    // Predicated region
    $region10: #{cnn_smem_forward.1} parent=1 // pred_check
      _
    $region11: #{cnn_smem_forward.1} parent=1 // pred_check_branch
      %19 = sbr.rel (0) target = $region13
    $region12: #{cnn_smem_forward.1} parent=1 // pred_region
      %s21 = ssub.s32 24576, 24576
      %22 = vsyncadd [#allocation3], %s21
      %s23 = sshll.u32 [#allocation2], 4
      %s24 = int_to_ptr.vmem [resolvable:$true] %s23
      %29 = dma.hbm_to_vmem [thread:$0]  %s2, 24576, %s24, [#allocation3], 384, 384, 24
    $region13: #{cnn_smem_forward.1} parent=1 // pred_fallthru
      _
    // Predicated region
    $region14: #{cnn_smem_forward.1} parent=1 // pred_check
      _
    $region15: #{cnn_smem_forward.1} parent=1 // pred_check_branch
      %31 = sbr.rel (0) target = $region17
    $region16: #{cnn_smem_forward.1} parent=1 // pred_region
      %s33 = ssub.s32 12288, 12288
      %34 = vsyncadd [#allocation5], %s33
      %s35 = sshll.u32 [#allocation4], 4
      %s36 = int_to_ptr.vmem [resolvable:$true] %s35
      %41 = dma.hbm_to_vmem [thread:$0]  %s3, 12288, %s36, [#allocation5], 128, 128, 8
    $region17: #{cnn_smem_forward.1} parent=1 // pred_fallthru
      _
    // Predicated region
    $region18: #{cnn_smem_forward.1} parent=1 // pred_check
      _
    $region19: #{cnn_smem_forward.1} parent=1 // pred_check_branch
      %43 = sbr.rel (0) target = $region21
    $region20: #{cnn_smem_forward.1} parent=1 // pred_region
      %s45 = ssub.s32 4096, 4096
      %46 = vsyncadd [#allocation5], %s45
      %s47 = sshll.u32 [#allocation6], 4
      %s48 = int_to_ptr.vmem [resolvable:$true] %s47
      %53 = dma.hbm_to_vmem [thread:$0]  %s4, 4096, %s48, [#allocation5], 128, 128, 8
    $region21: #{cnn_smem_forward.1} parent=1 // pred_fallthru
      _
    // Predicated region
    $region22: #{cnn_smem_forward.1} parent=1 // pred_check
      _
    $region23: #{cnn_smem_forward.1} parent=1 // pred_check_branch
      %55 = sbr.rel (0) target = $region25
    $region24: #{cnn_smem_forward.1} parent=1 // pred_region
      _
    $region25: #{cnn_smem_forward.1} parent=1 // pred_fallthru
      _
    // Predicated region
    $region26: #{cnn_smem_forward.1} parent=1 // pred_check
      _
    $region27: #{cnn_smem_forward.1} parent=1 // pred_check_branch
      %57 = sbr.rel (0) target = $region29
    $region28: #{cnn_smem_forward.1} parent=1 // pred_region
      _
    $region29: #{cnn_smem_forward.1} parent=1 // pred_fallthru
      _
    // Predicated region
    $region30: #{cnn_smem_forward.1} parent=1 // pred_check
      _
    $region31: #{cnn_smem_forward.1} parent=1 // pred_check_branch
      %59 = sbr.rel (0) target = $region33
    $region32: #{cnn_smem_forward.1} parent=1 // pred_region
      %60 = dma.done [#allocation3], 24576
    $region33: #{cnn_smem_forward.1} parent=1 // pred_fallthru
      _
    // Predicated region
    $region34: #{cnn_smem_forward.1} parent=1 // pred_check
      _
    $region35: #{cnn_smem_forward.1} parent=1 // pred_check_branch
      %62 = sbr.rel (0) target = $region37
    $region36: #{cnn_smem_forward.1} parent=1 // pred_region
      %63 = dma.done [#allocation5], 12288
    $region37: #{cnn_smem_forward.1} parent=1 // pred_fallthru
      _
    // Predicated region
    $region38: #{cnn_smem_forward.1} parent=1 // pred_check
      _
    $region39: #{cnn_smem_forward.1} parent=1 // pred_check_branch
      %65 = sbr.rel (0) target = $region41
    $region40: #{cnn_smem_forward.1} parent=1 // pred_region
      %66 = dma.done [#allocation5], 4096
    $region41: #{cnn_smem_forward.1} parent=1 // pred_fallthru
      _
    %v68 = vld [vmem:[%s6] sm:$0xf]
    %v69 = vld [vmem:[%s6 + $0x4] sm:$0x3f]
    %v70 = vld [vmem:[%s6 + $0xa] sm:$0x3]
    %v71 = vld [vmem:[%s6 + $0xc] sm:$0x3]
    %v72 = vld [vmem:[%s6 + $0xe] sm:$0x1]
    %v73 = vld [vmem:[%s0] sm:$0xff]
    %v74 = vld [vmem:[%s0 + $0x8] sm:$0xff]
    %v75 = vld [vmem:[%s0 + $0x10] sm:$0xff]
    %v76 = vld [vmem:[%s0 + $0x18] sm:$0xff]
    %v77 = vld [vmem:[%s0 + $0x20] sm:$0xff]
    %v78 = vld [vmem:[%s0 + $0x28] sm:$0xff]
    %v79 = vld [vmem:[%s0 + $0x30] sm:$0xff]
    %v80 = vld [vmem:[%s0 + $0x38] sm:$0xff]
    %v81 = vld [vmem:[%s0 + $0x40] sm:$0xff]
    %v82 = vld [vmem:[%s0 + $0x48] sm:$0xff]
    %v83 = vld [vmem:[%s0 + $0x50] sm:$0xff]
    %v84 = vld [vmem:[%s0 + $0x58] sm:$0xff]
    %v85 = vld [vmem:[%s0 + $0x60] sm:$0xff]
    %v86 = vld [vmem:[%s0 + $0x68] sm:$0xff]
    %v87 = vld [vmem:[%s0 + $0x70] sm:$0xff]
    %v88 = vld [vmem:[%s0 + $0x78] sm:$0xff]
    %v89 = vld [vmem:[%s0 + $0x80] sm:$0xff]
    %v90 = vld [vmem:[%s0 + $0x88] sm:$0xff]
    %v91 = vld [vmem:[%s0 + $0x90] sm:$0xff]
    %v92 = vld [vmem:[%s0 + $0x98] sm:$0xff]
    %v93 = vld [vmem:[%s0 + $0xa0] sm:$0xff]
    %v94 = vld [vmem:[%s0 + $0xa8] sm:$0xff]
    %v95 = vld [vmem:[%s0 + $0xb0] sm:$0xff]
    %v96 = vld [vmem:[%s0 + $0xb8] sm:$0xff]
    %v97 = vld [vmem:[%s0 + $0xc0] sm:$0xff]
    %v98 = vld [vmem:[%s0 + $0xc8] sm:$0xff]
    %v99 = vld [vmem:[%s0 + $0xd0] sm:$0xff]
    %v100 = vld [vmem:[%s0 + $0xd8] sm:$0xff]
    %v101 = vld [vmem:[%s0 + $0xe0] sm:$0xff]
    %v102 = vld [vmem:[%s0 + $0xe8] sm:$0xff]
    %v103 = vld [vmem:[%s0 + $0xf0] sm:$0xff]
    %v104 = vld [vmem:[%s0 + $0xf8] sm:$0xff]
    %v105 = vld [vmem:[%s0 + $0x100] sm:$0xff]
    %v106 = vld [vmem:[%s0 + $0x108] sm:$0xff]
    %v107 = vld [vmem:[%s0 + $0x110] sm:$0xff]
    %v108 = vld [vmem:[%s0 + $0x118] sm:$0xff]
    %v109 = vld [vmem:[%s0 + $0x120] sm:$0xff]
    %v110 = vld [vmem:[%s0 + $0x128] sm:$0xff]
    %v111 = vld [vmem:[%s0 + $0x130] sm:$0xff]
    %v112 = vld [vmem:[%s0 + $0x138] sm:$0xff]
    %v113 = vld [vmem:[%s0 + $0x140] sm:$0xff]
    %v114 = vld [vmem:[%s0 + $0x148] sm:$0xff]
    %v115 = vld [vmem:[%s0 + $0x150] sm:$0xff]
    %v116 = vld [vmem:[%s0 + $0x158] sm:$0xff]
    %v117 = vld [vmem:[%s0 + $0x160] sm:$0xff]
    %v118 = vld [vmem:[%s0 + $0x168] sm:$0xff]
    %v119 = vld [vmem:[%s0 + $0x170] sm:$0xff]
    %v120 = vld [vmem:[%s0 + $0x178] sm:$0xff]
    %v121 = vld [vmem:[%s0 + $0x180] sm:$0xff]
    %v122 = vld [vmem:[%s0 + $0x188] sm:$0xff]
    %v123 = vld [vmem:[%s0 + $0x190] sm:$0xff]
    %v124 = vld [vmem:[%s0 + $0x198] sm:$0xff]
    %v125 = vld [vmem:[%s0 + $0x1a0] sm:$0xff]
    %v126 = vld [vmem:[%s0 + $0x1a8] sm:$0xff]
    %v127 = vld [vmem:[%s0 + $0x1b0] sm:$0xff]
    %v128 = vld [vmem:[%s0 + $0x1b8] sm:$0xff]
    %v129 = vld [vmem:[%s0 + $0x1c0] sm:$0xff]
    %v130 = vld [vmem:[%s0 + $0x1c8] sm:$0xff]
    %v131 = vld [vmem:[%s0 + $0x1d0] sm:$0xff]
    %v132 = vld [vmem:[%s0 + $0x1d8] sm:$0xff]
    %v133 = vld [vmem:[%s0 + $0x1e0] sm:$0xff]
    %v134 = vld [vmem:[%s0 + $0x1e8] sm:$0xff]
    %v135 = vld [vmem:[%s0 + $0x1f0] sm:$0xff]
    %v136 = vld [vmem:[%s0 + $0x1f8] sm:$0xff]
    %v137 = vpack.c.bf16 %v75, %v73
    %v138 = vpack.c.bf16 %v76, %v74
    %v139 = vpack.c.bf16 %v79, %v77
    %v140 = vpack.c.bf16 %v80, %v78
    %v141 = vpack.c.bf16 %v83, %v81
    %v142 = vpack.c.bf16 %v84, %v82
    %v143 = vpack.c.bf16 %v87, %v85
    %v144 = vpack.c.bf16 %v88, %v86
    %v145 = vpack.c.bf16 %v91, %v89
    %v146 = vpack.c.bf16 %v92, %v90
    %v147 = vpack.c.bf16 %v95, %v93
    %v148 = vpack.c.bf16 %v96, %v94
    %v149 = vpack.c.bf16 %v99, %v97
    %v150 = vpack.c.bf16 %v100, %v98
    %v151 = vpack.c.bf16 %v103, %v101
    %v152 = vpack.c.bf16 %v104, %v102
    %v153 = vpack.c.bf16 %v107, %v105
    %v154 = vpack.c.bf16 %v108, %v106
    %v155 = vpack.c.bf16 %v111, %v109
    %v156 = vpack.c.bf16 %v112, %v110
    %v157 = vpack.c.bf16 %v115, %v113
    %v158 = vpack.c.bf16 %v116, %v114
    %v159 = vpack.c.bf16 %v119, %v117
    %v160 = vpack.c.bf16 %v120, %v118
    %v161 = vpack.c.bf16 %v123, %v121
    %v162 = vpack.c.bf16 %v124, %v122
    %v163 = vpack.c.bf16 %v127, %v125
    %v164 = vpack.c.bf16 %v128, %v126
    %v165 = vpack.c.bf16 %v131, %v129
    %v166 = vpack.c.bf16 %v132, %v130
    %v167 = vpack.c.bf16 %v135, %v133
    %v168 = vpack.c.bf16 %v136, %v134
    %v169 = vld [vmem:[%s1] sm:$0xff]
    %v170 = vld [vmem:[%s1 + $0x8] sm:$0xff]
    %v171 = vld [vmem:[%s1 + $0x10] sm:$0xff]
    %v172 = vld [vmem:[%s1 + $0x18] sm:$0xff]
    %v173 = vld [vmem:[%s1 + $0x20] sm:$0xff]
    %v174 = vld [vmem:[%s1 + $0x28] sm:$0xff]
    %v175 = vld [vmem:[%s1 + $0x30] sm:$0xff]
    %v176 = vld [vmem:[%s1 + $0x38] sm:$0xff]
    %v177 = vld [vmem:[%s1 + $0x40] sm:$0xff]
    %v178 = vld [vmem:[%s1 + $0x48] sm:$0xff]
    %v179 = vld [vmem:[%s1 + $0x50] sm:$0xff]
    %v180 = vld [vmem:[%s1 + $0x58] sm:$0xff]
    %v181 = vld [vmem:[%s1 + $0x60] sm:$0xff]
    %v182 = vld [vmem:[%s1 + $0x68] sm:$0xff]
    %v183 = vld [vmem:[%s1 + $0x70] sm:$0xff]
    %v184 = vld [vmem:[%s1 + $0x78] sm:$0xff]
    %v185 = vld [vmem:[%s1 + $0x80] sm:$0xff]
    %v186 = vld [vmem:[%s1 + $0x88] sm:$0xff]
    %v187 = vld [vmem:[%s1 + $0x90] sm:$0xff]
    %v188 = vld [vmem:[%s1 + $0x98] sm:$0xff]
    %v189 = vld [vmem:[%s1 + $0xa0] sm:$0xff]
    %v190 = vld [vmem:[%s1 + $0xa8] sm:$0xff]
    %v191 = vld [vmem:[%s1 + $0xb0] sm:$0xff]
    %v192 = vld [vmem:[%s1 + $0xb8] sm:$0xff]
    %v193 = vld [vmem:[%s1 + $0xc0] sm:$0xff]
    %v194 = vld [vmem:[%s1 + $0xc8] sm:$0xff]
    %v195 = vld [vmem:[%s1 + $0xd0] sm:$0xff]
    %v196 = vld [vmem:[%s1 + $0xd8] sm:$0xff]
    %v197 = vld [vmem:[%s1 + $0xe0] sm:$0xff]
    %v198 = vld [vmem:[%s1 + $0xe8] sm:$0xff]
    %v199 = vld [vmem:[%s1 + $0xf0] sm:$0xff]
    %v200 = vld [vmem:[%s1 + $0xf8] sm:$0xff]
    %v201 = vld [vmem:[%s1 + $0x100] sm:$0xff]
    %v202 = vld [vmem:[%s1 + $0x108] sm:$0xff]
    %v203 = vld [vmem:[%s1 + $0x110] sm:$0xff]
    %v204 = vld [vmem:[%s1 + $0x118] sm:$0xff]
    %v205 = vld [vmem:[%s1 + $0x120] sm:$0xff]
    %v206 = vld [vmem:[%s1 + $0x128] sm:$0xff]
    %v207 = vld [vmem:[%s1 + $0x130] sm:$0xff]
    %v208 = vld [vmem:[%s1 + $0x138] sm:$0xff]
    %v210 = vlaneseq
    %v211 = vshrl.u32 %v210, 7
    %v212 = vsub.s32 0, %v211
    %v213 = vrot.slane %v68, %v212
    %v214 = vlaneseq
    %v215 = vshrl.u32 %v214, 7
    %v216 = vsub.s32 1, %v215
    %v217 = vrot.slane %v68, %v216
    %v218 = vlaneseq
    %v219 = vshrl.u32 %v218, 7
    %v220 = vsub.s32 2, %v219
    %v221 = vrot.slane %v68, %v220
    %v222 = vlaneseq
    %v223 = vshrl.u32 %v222, 7
    %v224 = vsub.s32 3, %v223
    %v225 = vrot.slane %v68, %v224
    %v270 = vunpack.c.l.b16 %v169
    %v271 = vunpack.c.h.b16 %v169
    %v272 = vunpack.c.l.b16 %v170
    %v273 = vunpack.c.h.b16 %v170
    %v274 = vunpack.c.l.b16 %v171
    %v275 = vunpack.c.h.b16 %v171
    %v276 = vunpack.c.l.b16 %v172
    %v277 = vunpack.c.h.b16 %v172
    %v278 = vunpack.c.l.b16 %v173
    %v279 = vunpack.c.h.b16 %v173
    %v280 = vunpack.c.l.b16 %v174
    %v281 = vunpack.c.h.b16 %v174
    %v282 = vunpack.c.l.b16 %v175
    %v283 = vunpack.c.h.b16 %v175
    %v284 = vunpack.c.l.b16 %v176
    %v285 = vunpack.c.h.b16 %v176
    %v286 = vunpack.c.l.b16 %v177
    %v287 = vunpack.c.h.b16 %v177
    %v288 = vunpack.c.l.b16 %v178
    %v289 = vunpack.c.h.b16 %v178
    %v290 = vunpack.c.l.b16 %v179
    %v291 = vunpack.c.h.b16 %v179
    %v292 = vunpack.c.l.b16 %v180
    %v293 = vunpack.c.h.b16 %v180
    %v294 = vunpack.c.l.b16 %v181
    %v295 = vunpack.c.h.b16 %v181
    %v296 = vunpack.c.l.b16 %v182
    %v297 = vunpack.c.h.b16 %v182
    %v298 = vunpack.c.l.b16 %v183
    %v299 = vunpack.c.h.b16 %v183
    %v300 = vunpack.c.l.b16 %v184
    %v301 = vunpack.c.h.b16 %v184
    %v302 = vunpack.c.l.b16 %v185
    %v303 = vunpack.c.h.b16 %v185
    %v304 = vunpack.c.l.b16 %v186
    %v305 = vunpack.c.h.b16 %v186
    %v306 = vunpack.c.l.b16 %v187
    %v307 = vunpack.c.h.b16 %v187
    %v308 = vunpack.c.l.b16 %v188
    %v309 = vunpack.c.h.b16 %v188
    %v310 = vunpack.c.l.b16 %v189
    %v311 = vunpack.c.h.b16 %v189
    %v312 = vunpack.c.l.b16 %v190
    %v313 = vunpack.c.h.b16 %v190
    %v314 = vunpack.c.l.b16 %v191
    %v315 = vunpack.c.h.b16 %v191
    %v316 = vunpack.c.l.b16 %v192
    %v317 = vunpack.c.h.b16 %v192
    %v318 = vunpack.c.l.b16 %v193
    %v319 = vunpack.c.h.b16 %v193
    %v320 = vunpack.c.l.b16 %v194
    %v321 = vunpack.c.h.b16 %v194
    %v322 = vunpack.c.l.b16 %v195
    %v323 = vunpack.c.h.b16 %v195
    %v324 = vunpack.c.l.b16 %v196
    %v325 = vunpack.c.h.b16 %v196
    %v326 = vunpack.c.l.b16 %v197
    %v327 = vunpack.c.h.b16 %v197
    %v328 = vunpack.c.l.b16 %v198
    %v329 = vunpack.c.h.b16 %v198
    %v330 = vunpack.c.l.b16 %v199
    %v331 = vunpack.c.h.b16 %v199
    %v332 = vunpack.c.l.b16 %v200
    %v333 = vunpack.c.h.b16 %v200
    %v334 = vunpack.c.l.b16 %v201
    %v335 = vunpack.c.h.b16 %v201
    %v336 = vunpack.c.l.b16 %v202
    %v337 = vunpack.c.h.b16 %v202
    %v338 = vunpack.c.l.b16 %v203
    %v339 = vunpack.c.h.b16 %v203
    %v340 = vunpack.c.l.b16 %v204
    %v341 = vunpack.c.h.b16 %v204
    %v342 = vunpack.c.l.b16 %v205
    %v343 = vunpack.c.h.b16 %v205
    %v344 = vunpack.c.l.b16 %v206
    %v345 = vunpack.c.h.b16 %v206
    %v346 = vunpack.c.l.b16 %v207
    %v347 = vunpack.c.h.b16 %v207
    %v348 = vunpack.c.l.b16 %v208
    %v349 = vunpack.c.h.b16 %v208
    %v350 = vpack.c.b16 %v274, %v270
    %v351 = vpack.c.b16 %v275, %v271
    %v352 = vpack.c.b16 %v276, %v272
    %v353 = vpack.c.b16 %v277, %v273
    %v354 = vpack.c.b16 %v282, %v278
    %v355 = vpack.c.b16 %v283, %v279
    %v356 = vpack.c.b16 %v284, %v280
    %v357 = vpack.c.b16 %v285, %v281
    %v358 = vpack.c.b16 %v290, %v286
    %v359 = vpack.c.b16 %v291, %v287
    %v360 = vpack.c.b16 %v292, %v288
    %v361 = vpack.c.b16 %v293, %v289
    %v362 = vpack.c.b16 %v298, %v294
    %v363 = vpack.c.b16 %v299, %v295
    %v364 = vpack.c.b16 %v300, %v296
    %v365 = vpack.c.b16 %v301, %v297
    %v366 = vpack.c.b16 %v306, %v302
    %v367 = vpack.c.b16 %v307, %v303
    %v368 = vpack.c.b16 %v308, %v304
    %v369 = vpack.c.b16 %v309, %v305
    %v370 = vpack.c.b16 %v314, %v310
    %v371 = vpack.c.b16 %v315, %v311
    %v372 = vpack.c.b16 %v316, %v312
    %v373 = vpack.c.b16 %v317, %v313
    %v374 = vpack.c.b16 %v322, %v318
    %v375 = vpack.c.b16 %v323, %v319
    %v376 = vpack.c.b16 %v324, %v320
    %v377 = vpack.c.b16 %v325, %v321
    %v378 = vpack.c.b16 %v330, %v326
    %v379 = vpack.c.b16 %v331, %v327
    %v380 = vpack.c.b16 %v332, %v328
    %v381 = vpack.c.b16 %v333, %v329
    %v382 = vpack.c.b16 %v338, %v334
    %v383 = vpack.c.b16 %v339, %v335
    %v384 = vpack.c.b16 %v340, %v336
    %v385 = vpack.c.b16 %v341, %v337
    %v386 = vpack.c.b16 %v346, %v342
    %v387 = vpack.c.b16 %v347, %v343
    %v388 = vpack.c.b16 %v348, %v344
    %v389 = vpack.c.b16 %v349, %v345
    %vm430 = vcmask 261120
    %v432 = vsel %vm430, %v138, 0
    %v435 = vsel %vm430, %v140, 0
    %v438 = vsel %vm430, %v142, 0
    %v441 = vsel %vm430, %v144, 0
    %v444 = vsel %vm430, %v146, 0
    %v447 = vsel %vm430, %v148, 0
    %v450 = vsel %vm430, %v150, 0
    %v453 = vsel %vm430, %v152, 0
    %v456 = vsel %vm430, %v154, 0
    %v459 = vsel %vm430, %v156, 0
    %v462 = vsel %vm430, %v158, 0
    %v465 = vsel %vm430, %v160, 0
    %v468 = vsel %vm430, %v162, 0
    %v471 = vsel %vm430, %v164, 0
    %v474 = vsel %vm430, %v166, 0
    %v477 = vsel %vm430, %v168, 0
    %479 = vmatprep.subr.bf16.mxu0 %v351
    %480 = vmatpush1.bf16.msra.mxu0 %v350
    %481 = vmatprep.subr.bf16.mxu0 %v355
    %482 = vmatpush1.bf16.msra.mxu0 %v354
    %483 = vmatprep.subr.bf16.mxu0 %v359
    %484 = vmatpush1.bf16.msra.mxu0 %v358
    %485 = vmatprep.subr.bf16.mxu0 %v363
    %486 = vmatpush1.bf16.msra.mxu0 %v362
    %487 = vmatprep.subr.bf16.mxu0 %v367
    %488 = vmatpush1.bf16.msra.mxu0 %v366
    %489 = vmatprep.subr.bf16.mxu0 %v371
    %490 = vmatpush1.bf16.msra.mxu0 %v370
    %491 = vmatprep.subr.bf16.mxu0 %v375
    %492 = vmatpush1.bf16.msra.mxu0 %v374
    %493 = vmatprep.subr.bf16.mxu0 %v379
    %494 = vmatpush1.bf16.msra.mxu0 %v378
    %495 = vmatprep.subr.bf16.mxu0 %v383
    %496 = vmatpush1.bf16.msra.mxu0 %v382
    %497 = vmatprep.subr.bf16.mxu0 %v387
    %498 = vmatpush1.bf16.msra.mxu0 %v386
    %499 = vmatprep.subr.bf16.mxu0 0
    %500 = vmatpush1.bf16.msra.mxu0 0
    %501 = vmatprep.subr.bf16.mxu0 0
    %502 = vmatpush1.bf16.msra.mxu0 0
    %503 = vmatprep.subr.bf16.mxu0 0
    %504 = vmatpush1.bf16.msra.mxu0 0
    %505 = vmatprep.subr.bf16.mxu0 0
    %506 = vmatpush1.bf16.msra.mxu0 0
    %507 = vmatprep.subr.bf16.mxu0 0
    %508 = vmatpush1.bf16.msra.mxu0 0
    %509 = vmatprep.subr.bf16.mxu0 0
    %510 = vmatpush1.bf16.msra.mxu0 0
    %511 = vmatprep.mubr.bf16.mxu0 %v432
    %512 = vmatmul.mubr.bf16.gmra.mrb[0].mxu0 %v137
    %v513 = vpop.f32.mrb[0].mxu0
    %v514 = vadd.f32 %v213, %v513
    %v515 = vpop.f32.mrb[0].mxu0
    %v516 = vadd.f32 %v217, %v515
    %v517 = vpop.f32.mrb[0].mxu0
    %v518 = vadd.f32 %v213, %v517
    %v519 = vpop.f32.mrb[0].mxu0
    %v520 = vadd.f32 %v217, %v519
    %521 = vmatprep.mubr.bf16.mxu0 %v435
    %522 = vmatmul.mubr.bf16.gmra.mrb[0].mxu0 %v139
    %v523 = vpop.f32.mrb[0].mxu0
    %v524 = vadd.f32 %v213, %v523
    %v525 = vpop.f32.mrb[0].mxu0
    %v526 = vadd.f32 %v217, %v525
    %v527 = vpop.f32.mrb[0].mxu0
    %v528 = vadd.f32 %v213, %v527
    %v529 = vpop.f32.mrb[0].mxu0
    %v530 = vadd.f32 %v217, %v529
    %531 = vmatprep.mubr.bf16.mxu0 %v438
    %532 = vmatmul.mubr.bf16.gmra.mrb[0].mxu0 %v141
    %v533 = vpop.f32.mrb[0].mxu0
    %v534 = vadd.f32 %v213, %v533
    %v535 = vpop.f32.mrb[0].mxu0
    %v536 = vadd.f32 %v217, %v535
    %v537 = vpop.f32.mrb[0].mxu0
    %v538 = vadd.f32 %v213, %v537
    %v539 = vpop.f32.mrb[0].mxu0
    %v540 = vadd.f32 %v217, %v539
    %541 = vmatprep.mubr.bf16.mxu0 %v441
    %542 = vmatmul.mubr.bf16.gmra.mrb[0].mxu0 %v143
    %v543 = vpop.f32.mrb[0].mxu0
    %v544 = vadd.f32 %v213, %v543
    %v545 = vpop.f32.mrb[0].mxu0
    %v546 = vadd.f32 %v217, %v545
    %v547 = vpop.f32.mrb[0].mxu0
    %v548 = vadd.f32 %v213, %v547
    %v549 = vpop.f32.mrb[0].mxu0
    %v550 = vadd.f32 %v217, %v549
    %551 = vmatprep.mubr.bf16.mxu0 %v444
    %552 = vmatmul.mubr.bf16.gmra.mrb[0].mxu0 %v145
    %v553 = vpop.f32.mrb[0].mxu0
    %v554 = vadd.f32 %v213, %v553
    %v555 = vpop.f32.mrb[0].mxu0
    %v556 = vadd.f32 %v217, %v555
    %v557 = vpop.f32.mrb[0].mxu0
    %v558 = vadd.f32 %v213, %v557
    %v559 = vpop.f32.mrb[0].mxu0
    %v560 = vadd.f32 %v217, %v559
    %561 = vmatprep.mubr.bf16.mxu0 %v447
    %562 = vmatmul.mubr.bf16.gmra.mrb[0].mxu0 %v147
    %v563 = vpop.f32.mrb[0].mxu0
    %v564 = vadd.f32 %v213, %v563
    %v565 = vpop.f32.mrb[0].mxu0
    %v566 = vadd.f32 %v217, %v565
    %v567 = vpop.f32.mrb[0].mxu0
    %v568 = vadd.f32 %v213, %v567
    %v569 = vpop.f32.mrb[0].mxu0
    %v570 = vadd.f32 %v217, %v569
    %571 = vmatprep.mubr.bf16.mxu0 %v450
    %572 = vmatmul.mubr.bf16.gmra.mrb[0].mxu0 %v149
    %v573 = vpop.f32.mrb[0].mxu0
    %v574 = vadd.f32 %v213, %v573
    %v575 = vpop.f32.mrb[0].mxu0
    %v576 = vadd.f32 %v217, %v575
    %v577 = vpop.f32.mrb[0].mxu0
    %v578 = vadd.f32 %v213, %v577
    %v579 = vpop.f32.mrb[0].mxu0
    %v580 = vadd.f32 %v217, %v579
    %581 = vmatprep.mubr.bf16.mxu0 %v453
    %582 = vmatmul.mubr.bf16.gmra.mrb[0].mxu0 %v151
    %v583 = vpop.f32.mrb[0].mxu0
    %v584 = vadd.f32 %v213, %v583
    %v585 = vpop.f32.mrb[0].mxu0
    %v586 = vadd.f32 %v217, %v585
    %v587 = vpop.f32.mrb[0].mxu0
    %v588 = vadd.f32 %v213, %v587
    %v589 = vpop.f32.mrb[0].mxu0
    %v590 = vadd.f32 %v217, %v589
    %591 = vmatprep.mubr.bf16.mxu0 %v456
    %592 = vmatmul.mubr.bf16.gmra.mrb[0].mxu0 %v153
    %v593 = vpop.f32.mrb[0].mxu0
    %v594 = vadd.f32 %v213, %v593
    %v595 = vpop.f32.mrb[0].mxu0
    %v596 = vadd.f32 %v217, %v595
    %v597 = vpop.f32.mrb[0].mxu0
    %v598 = vadd.f32 %v213, %v597
    %v599 = vpop.f32.mrb[0].mxu0
    %v600 = vadd.f32 %v217, %v599
    %601 = vmatprep.mubr.bf16.mxu0 %v459
    %602 = vmatmul.mubr.bf16.gmra.mrb[0].mxu0 %v155
    %v603 = vpop.f32.mrb[0].mxu0
    %v604 = vadd.f32 %v213, %v603
    %v605 = vpop.f32.mrb[0].mxu0
    %v606 = vadd.f32 %v217, %v605
    %v607 = vpop.f32.mrb[0].mxu0
    %v608 = vadd.f32 %v213, %v607
    %v609 = vpop.f32.mrb[0].mxu0
    %v610 = vadd.f32 %v217, %v609
    %611 = vmatprep.mubr.bf16.mxu0 %v462
    %612 = vmatmul.mubr.bf16.gmra.mrb[0].mxu0 %v157
    %v613 = vpop.f32.mrb[0].mxu0
    %v614 = vadd.f32 %v213, %v613
    %v615 = vpop.f32.mrb[0].mxu0
    %v616 = vadd.f32 %v217, %v615
    %v617 = vpop.f32.mrb[0].mxu0
    %v618 = vadd.f32 %v213, %v617
    %v619 = vpop.f32.mrb[0].mxu0
    %v620 = vadd.f32 %v217, %v619
    %621 = vmatprep.mubr.bf16.mxu0 %v465
    %622 = vmatmul.mubr.bf16.gmra.mrb[0].mxu0 %v159
    %v623 = vpop.f32.mrb[0].mxu0
    %v624 = vadd.f32 %v213, %v623
    %v625 = vpop.f32.mrb[0].mxu0
    %v626 = vadd.f32 %v217, %v625
    %v627 = vpop.f32.mrb[0].mxu0
    %v628 = vadd.f32 %v213, %v627
    %v629 = vpop.f32.mrb[0].mxu0
    %v630 = vadd.f32 %v217, %v629
    %631 = vmatprep.mubr.bf16.mxu0 %v468
    %632 = vmatmul.mubr.bf16.gmra.mrb[0].mxu0 %v161
    %v633 = vpop.f32.mrb[0].mxu0
    %v634 = vadd.f32 %v213, %v633
    %v635 = vpop.f32.mrb[0].mxu0
    %v636 = vadd.f32 %v217, %v635
    %v637 = vpop.f32.mrb[0].mxu0
    %v638 = vadd.f32 %v213, %v637
    %v639 = vpop.f32.mrb[0].mxu0
    %v640 = vadd.f32 %v217, %v639
    %641 = vmatprep.mubr.bf16.mxu0 %v471
    %642 = vmatmul.mubr.bf16.gmra.mrb[0].mxu0 %v163
    %v643 = vpop.f32.mrb[0].mxu0
    %v644 = vadd.f32 %v213, %v643
    %v645 = vpop.f32.mrb[0].mxu0
    %v646 = vadd.f32 %v217, %v645
    %v647 = vpop.f32.mrb[0].mxu0
    %v648 = vadd.f32 %v213, %v647
    %v649 = vpop.f32.mrb[0].mxu0
    %v650 = vadd.f32 %v217, %v649
    %651 = vmatprep.mubr.bf16.mxu0 %v474
    %652 = vmatmul.mubr.bf16.gmra.mrb[0].mxu0 %v165
    %v653 = vpop.f32.mrb[0].mxu0
    %v654 = vadd.f32 %v213, %v653
    %v655 = vpop.f32.mrb[0].mxu0
    %v656 = vadd.f32 %v217, %v655
    %v657 = vpop.f32.mrb[0].mxu0
    %v658 = vadd.f32 %v213, %v657
    %v659 = vpop.f32.mrb[0].mxu0
    %v660 = vadd.f32 %v217, %v659
    %661 = vmatprep.mubr.bf16.mxu0 %v477
    %662 = vmatmul.mubr.bf16.gmra.mrb[0].mxu0 %v167
    %v663 = vpop.f32.mrb[0].mxu0
    %v664 = vadd.f32 %v213, %v663
    %v665 = vpop.f32.mrb[0].mxu0
    %v666 = vadd.f32 %v217, %v665
    %v667 = vpop.f32.mrb[0].mxu0
    %v668 = vadd.f32 %v213, %v667
    %v669 = vpop.f32.mrb[0].mxu0
    %v670 = vadd.f32 %v217, %v669
    %671 = vdwg.mxu0
    %672 = vmatprep.subr.bf16.mxu0 %v353
    %673 = vmatpush1.bf16.msra.mxu0 %v352
    %674 = vmatprep.subr.bf16.mxu0 %v357
    %675 = vmatpush1.bf16.msra.mxu0 %v356
    %676 = vmatprep.subr.bf16.mxu0 %v361
    %677 = vmatpush1.bf16.msra.mxu0 %v360
    %678 = vmatprep.subr.bf16.mxu0 %v365
    %679 = vmatpush1.bf16.msra.mxu0 %v364
    %680 = vmatprep.subr.bf16.mxu0 %v369
    %681 = vmatpush1.bf16.msra.mxu0 %v368
    %682 = vmatprep.subr.bf16.mxu0 %v373
    %683 = vmatpush1.bf16.msra.mxu0 %v372
    %684 = vmatprep.subr.bf16.mxu0 %v377
    %685 = vmatpush1.bf16.msra.mxu0 %v376
    %686 = vmatprep.subr.bf16.mxu0 %v381
    %687 = vmatpush1.bf16.msra.mxu0 %v380
    %688 = vmatprep.subr.bf16.mxu0 %v385
    %689 = vmatpush1.bf16.msra.mxu0 %v384
    %690 = vmatprep.subr.bf16.mxu0 %v389
    %691 = vmatpush1.bf16.msra.mxu0 %v388
    %692 = vmatprep.subr.bf16.mxu0 0
    %693 = vmatpush1.bf16.msra.mxu0 0
    %694 = vmatprep.subr.bf16.mxu0 0
    %695 = vmatpush1.bf16.msra.mxu0 0
    %696 = vmatprep.subr.bf16.mxu0 0
    %697 = vmatpush1.bf16.msra.mxu0 0
    %698 = vmatprep.subr.bf16.mxu0 0
    %699 = vmatpush1.bf16.msra.mxu0 0
    %700 = vmatprep.subr.bf16.mxu0 0
    %701 = vmatpush1.bf16.msra.mxu0 0
    %702 = vmatprep.subr.bf16.mxu0 0
    %703 = vmatpush1.bf16.msra.mxu0 0
    %704 = vmatprep.mubr.bf16.mxu0 %v432
    %705 = vmatmul.mubr.bf16.gmra.mrb[0].mxu0 %v137
    %v706 = vpop.f32.mrb[0].mxu0
    %v707 = vadd.f32 %v221, %v706
    %v708 = vpop.f32.mrb[0].mxu0
    %v709 = vadd.f32 %v225, %v708
    %v710 = vpop.f32.mrb[0].mxu0
    %v711 = vadd.f32 %v221, %v710
    %v712 = vpop.f32.mrb[0].mxu0
    %v713 = vadd.f32 %v225, %v712
    %714 = vmatprep.mubr.bf16.mxu0 %v435
    %715 = vmatmul.mubr.bf16.gmra.mrb[0].mxu0 %v139
    %v716 = vpop.f32.mrb[0].mxu0
    %v717 = vadd.f32 %v221, %v716
    %v718 = vpop.f32.mrb[0].mxu0
    %v719 = vadd.f32 %v225, %v718
    %v720 = vpop.f32.mrb[0].mxu0
    %v721 = vadd.f32 %v221, %v720
    %v722 = vpop.f32.mrb[0].mxu0
    %v723 = vadd.f32 %v225, %v722
    %724 = vmatprep.mubr.bf16.mxu0 %v438
    %725 = vmatmul.mubr.bf16.gmra.mrb[0].mxu0 %v141
    %v726 = vpop.f32.mrb[0].mxu0
    %v727 = vadd.f32 %v221, %v726
    %v728 = vpop.f32.mrb[0].mxu0
    %v729 = vadd.f32 %v225, %v728
    %v730 = vpop.f32.mrb[0].mxu0
    %v731 = vadd.f32 %v221, %v730
    %v732 = vpop.f32.mrb[0].mxu0
    %v733 = vadd.f32 %v225, %v732
    %734 = vmatprep.mubr.bf16.mxu0 %v441
    %735 = vmatmul.mubr.bf16.gmra.mrb[0].mxu0 %v143
    %v736 = vpop.f32.mrb[0].mxu0
    %v737 = vadd.f32 %v221, %v736
    %v738 = vpop.f32.mrb[0].mxu0
    %v739 = vadd.f32 %v225, %v738
    %v740 = vpop.f32.mrb[0].mxu0
    %v741 = vadd.f32 %v221, %v740
    %v742 = vpop.f32.mrb[0].mxu0
    %v743 = vadd.f32 %v225, %v742
    %744 = vmatprep.mubr.bf16.mxu0 %v444
    %745 = vmatmul.mubr.bf16.gmra.mrb[0].mxu0 %v145
    %v746 = vpop.f32.mrb[0].mxu0
    %v747 = vadd.f32 %v221, %v746
    %v748 = vpop.f32.mrb[0].mxu0
    %v749 = vadd.f32 %v225, %v748
    %v750 = vpop.f32.mrb[0].mxu0
    %v751 = vadd.f32 %v221, %v750
    %v752 = vpop.f32.mrb[0].mxu0
    %v753 = vadd.f32 %v225, %v752
    %754 = vmatprep.mubr.bf16.mxu0 %v447
    %755 = vmatmul.mubr.bf16.gmra.mrb[0].mxu0 %v147
    %v756 = vpop.f32.mrb[0].mxu0
    %v757 = vadd.f32 %v221, %v756
    %v758 = vpop.f32.mrb[0].mxu0
    %v759 = vadd.f32 %v225, %v758
    %v760 = vpop.f32.mrb[0].mxu0
    %v761 = vadd.f32 %v221, %v760
    %v762 = vpop.f32.mrb[0].mxu0
    %v763 = vadd.f32 %v225, %v762
    %764 = vmatprep.mubr.bf16.mxu0 %v450
    %765 = vmatmul.mubr.bf16.gmra.mrb[0].mxu0 %v149
    %v766 = vpop.f32.mrb[0].mxu0
    %v767 = vadd.f32 %v221, %v766
    %v768 = vpop.f32.mrb[0].mxu0
    %v769 = vadd.f32 %v225, %v768
    %v770 = vpop.f32.mrb[0].mxu0
    %v771 = vadd.f32 %v221, %v770
    %v772 = vpop.f32.mrb[0].mxu0
    %v773 = vadd.f32 %v225, %v772
    %774 = vmatprep.mubr.bf16.mxu0 %v453
    %775 = vmatmul.mubr.bf16.gmra.mrb[0].mxu0 %v151
    %v776 = vpop.f32.mrb[0].mxu0
    %v777 = vadd.f32 %v221, %v776
    %v778 = vpop.f32.mrb[0].mxu0
    %v779 = vadd.f32 %v225, %v778
    %v780 = vpop.f32.mrb[0].mxu0
    %v781 = vadd.f32 %v221, %v780
    %v782 = vpop.f32.mrb[0].mxu0
    %v783 = vadd.f32 %v225, %v782
    %784 = vmatprep.mubr.bf16.mxu0 %v456
    %785 = vmatmul.mubr.bf16.gmra.mrb[0].mxu0 %v153
    %v786 = vpop.f32.mrb[0].mxu0
    %v787 = vadd.f32 %v221, %v786
    %v788 = vpop.f32.mrb[0].mxu0
    %v789 = vadd.f32 %v225, %v788
    %v790 = vpop.f32.mrb[0].mxu0
    %v791 = vadd.f32 %v221, %v790
    %v792 = vpop.f32.mrb[0].mxu0
    %v793 = vadd.f32 %v225, %v792
    %794 = vmatprep.mubr.bf16.mxu0 %v459
    %795 = vmatmul.mubr.bf16.gmra.mrb[0].mxu0 %v155
    %v796 = vpop.f32.mrb[0].mxu0
    %v797 = vadd.f32 %v221, %v796
    %v798 = vpop.f32.mrb[0].mxu0
    %v799 = vadd.f32 %v225, %v798
    %v800 = vpop.f32.mrb[0].mxu0
    %v801 = vadd.f32 %v221, %v800
    %v802 = vpop.f32.mrb[0].mxu0
    %v803 = vadd.f32 %v225, %v802
    %804 = vmatprep.mubr.bf16.mxu0 %v462
    %805 = vmatmul.mubr.bf16.gmra.mrb[0].mxu0 %v157
    %v806 = vpop.f32.mrb[0].mxu0
    %v807 = vadd.f32 %v221, %v806
    %v808 = vpop.f32.mrb[0].mxu0
    %v809 = vadd.f32 %v225, %v808
    %v810 = vpop.f32.mrb[0].mxu0
    %v811 = vadd.f32 %v221, %v810
    %v812 = vpop.f32.mrb[0].mxu0
    %v813 = vadd.f32 %v225, %v812
    %814 = vmatprep.mubr.bf16.mxu0 %v465
    %815 = vmatmul.mubr.bf16.gmra.mrb[0].mxu0 %v159
    %v816 = vpop.f32.mrb[0].mxu0
    %v817 = vadd.f32 %v221, %v816
    %v818 = vpop.f32.mrb[0].mxu0
    %v819 = vadd.f32 %v225, %v818
    %v820 = vpop.f32.mrb[0].mxu0
    %v821 = vadd.f32 %v221, %v820
    %v822 = vpop.f32.mrb[0].mxu0
    %v823 = vadd.f32 %v225, %v822
    %824 = vmatprep.mubr.bf16.mxu0 %v468
    %825 = vmatmul.mubr.bf16.gmra.mrb[0].mxu0 %v161
    %v826 = vpop.f32.mrb[0].mxu0
    %v827 = vadd.f32 %v221, %v826
    %v828 = vpop.f32.mrb[0].mxu0
    %v829 = vadd.f32 %v225, %v828
    %v830 = vpop.f32.mrb[0].mxu0
    %v831 = vadd.f32 %v221, %v830
    %v832 = vpop.f32.mrb[0].mxu0
    %v833 = vadd.f32 %v225, %v832
    %834 = vmatprep.mubr.bf16.mxu0 %v471
    %835 = vmatmul.mubr.bf16.gmra.mrb[0].mxu0 %v163
    %v836 = vpop.f32.mrb[0].mxu0
    %v837 = vadd.f32 %v221, %v836
    %v838 = vpop.f32.mrb[0].mxu0
    %v839 = vadd.f32 %v225, %v838
    %v840 = vpop.f32.mrb[0].mxu0
    %v841 = vadd.f32 %v221, %v840
    %v842 = vpop.f32.mrb[0].mxu0
    %v843 = vadd.f32 %v225, %v842
    %844 = vmatprep.mubr.bf16.mxu0 %v474
    %845 = vmatmul.mubr.bf16.gmra.mrb[0].mxu0 %v165
    %v846 = vpop.f32.mrb[0].mxu0
    %v847 = vadd.f32 %v221, %v846
    %v848 = vpop.f32.mrb[0].mxu0
    %v849 = vadd.f32 %v225, %v848
    %v850 = vpop.f32.mrb[0].mxu0
    %v851 = vadd.f32 %v221, %v850
    %v852 = vpop.f32.mrb[0].mxu0
    %v853 = vadd.f32 %v225, %v852
    %854 = vmatprep.mubr.bf16.mxu0 %v477
    %855 = vmatmul.mubr.bf16.gmra.mrb[0].mxu0 %v167
    %v856 = vpop.f32.mrb[0].mxu0
    %v857 = vadd.f32 %v221, %v856
    %v858 = vpop.f32.mrb[0].mxu0
    %v859 = vadd.f32 %v225, %v858
    %v860 = vpop.f32.mrb[0].mxu0
    %v861 = vadd.f32 %v221, %v860
    %v862 = vpop.f32.mrb[0].mxu0
    %v863 = vadd.f32 %v225, %v862
    %864 = vdwg.mxu0
    %v865 = vmax.f32 %v514, 0.0
    %v866 = vmax.f32 %v516, 0.0
    %v867 = vmax.f32 %v707, 0.0
    %v868 = vmax.f32 %v709, 0.0
    %v869 = vmax.f32 %v518, 0.0
    %v870 = vmax.f32 %v520, 0.0
    %v871 = vmax.f32 %v711, 0.0
    %v872 = vmax.f32 %v713, 0.0
    %v873 = vmax.f32 %v524, 0.0
    %v874 = vmax.f32 %v526, 0.0
    %v875 = vmax.f32 %v717, 0.0
    %v876 = vmax.f32 %v719, 0.0
    %v877 = vmax.f32 %v528, 0.0
    %v878 = vmax.f32 %v530, 0.0
    %v879 = vmax.f32 %v721, 0.0
    %v880 = vmax.f32 %v723, 0.0
    %v881 = vmax.f32 %v534, 0.0
    %v882 = vmax.f32 %v536, 0.0
    %v883 = vmax.f32 %v727, 0.0
    %v884 = vmax.f32 %v729, 0.0
    %v885 = vmax.f32 %v538, 0.0
    %v886 = vmax.f32 %v540, 0.0
    %v887 = vmax.f32 %v731, 0.0
    %v888 = vmax.f32 %v733, 0.0
    %v889 = vmax.f32 %v544, 0.0
    %v890 = vmax.f32 %v546, 0.0
    %v891 = vmax.f32 %v737, 0.0
    %v892 = vmax.f32 %v739, 0.0
    %v893 = vmax.f32 %v548, 0.0
    %v894 = vmax.f32 %v550, 0.0
    %v895 = vmax.f32 %v741, 0.0
    %v896 = vmax.f32 %v743, 0.0
    %v897 = vmax.f32 %v554, 0.0
    %v898 = vmax.f32 %v556, 0.0
    %v899 = vmax.f32 %v747, 0.0
    %v900 = vmax.f32 %v749, 0.0
    %v901 = vmax.f32 %v558, 0.0
    %v902 = vmax.f32 %v560, 0.0
    %v903 = vmax.f32 %v751, 0.0
    %v904 = vmax.f32 %v753, 0.0
    %v905 = vmax.f32 %v564, 0.0
    %v906 = vmax.f32 %v566, 0.0
    %v907 = vmax.f32 %v757, 0.0
    %v908 = vmax.f32 %v759, 0.0
    %v909 = vmax.f32 %v568, 0.0
    %v910 = vmax.f32 %v570, 0.0
    %v911 = vmax.f32 %v761, 0.0
    %v912 = vmax.f32 %v763, 0.0
    %v913 = vmax.f32 %v574, 0.0
    %v914 = vmax.f32 %v576, 0.0
    %v915 = vmax.f32 %v767, 0.0
    %v916 = vmax.f32 %v769, 0.0
    %v917 = vmax.f32 %v578, 0.0
    %v918 = vmax.f32 %v580, 0.0
    %v919 = vmax.f32 %v771, 0.0
    %v920 = vmax.f32 %v773, 0.0
    %v921 = vmax.f32 %v584, 0.0
    %v922 = vmax.f32 %v586, 0.0
    %v923 = vmax.f32 %v777, 0.0
    %v924 = vmax.f32 %v779, 0.0
    %v925 = vmax.f32 %v588, 0.0
    %v926 = vmax.f32 %v590, 0.0
    %v927 = vmax.f32 %v781, 0.0
    %v928 = vmax.f32 %v783, 0.0
    %v929 = vmax.f32 %v594, 0.0
    %v930 = vmax.f32 %v596, 0.0
    %v931 = vmax.f32 %v787, 0.0
    %v932 = vmax.f32 %v789, 0.0
    %v933 = vmax.f32 %v598, 0.0
    %v934 = vmax.f32 %v600, 0.0
    %v935 = vmax.f32 %v791, 0.0
    %v936 = vmax.f32 %v793, 0.0
    %v937 = vmax.f32 %v604, 0.0
    %v938 = vmax.f32 %v606, 0.0
    %v939 = vmax.f32 %v797, 0.0
    %v940 = vmax.f32 %v799, 0.0
    %v941 = vmax.f32 %v608, 0.0
    %v942 = vmax.f32 %v610, 0.0
    %v943 = vmax.f32 %v801, 0.0
    %v944 = vmax.f32 %v803, 0.0
    %v945 = vmax.f32 %v614, 0.0
    %v946 = vmax.f32 %v616, 0.0
    %v947 = vmax.f32 %v807, 0.0
    %v948 = vmax.f32 %v809, 0.0
    %v949 = vmax.f32 %v618, 0.0
    %v950 = vmax.f32 %v620, 0.0
    %v951 = vmax.f32 %v811, 0.0
    %v952 = vmax.f32 %v813, 0.0
    %v953 = vmax.f32 %v624, 0.0
    %v954 = vmax.f32 %v626, 0.0
    %v955 = vmax.f32 %v817, 0.0
    %v956 = vmax.f32 %v819, 0.0
    %v957 = vmax.f32 %v628, 0.0
    %v958 = vmax.f32 %v630, 0.0
    %v959 = vmax.f32 %v821, 0.0
    %v960 = vmax.f32 %v823, 0.0
    %v961 = vmax.f32 %v634, 0.0
    %v962 = vmax.f32 %v636, 0.0
    %v963 = vmax.f32 %v827, 0.0
    %v964 = vmax.f32 %v829, 0.0
    %v965 = vmax.f32 %v638, 0.0
    %v966 = vmax.f32 %v640, 0.0
    %v967 = vmax.f32 %v831, 0.0
    %v968 = vmax.f32 %v833, 0.0
    %v969 = vmax.f32 %v644, 0.0
    %v970 = vmax.f32 %v646, 0.0
    %v971 = vmax.f32 %v837, 0.0
    %v972 = vmax.f32 %v839, 0.0
    %v973 = vmax.f32 %v648, 0.0
    %v974 = vmax.f32 %v650, 0.0
    %v975 = vmax.f32 %v841, 0.0
    %v976 = vmax.f32 %v843, 0.0
    %v977 = vmax.f32 %v654, 0.0
    %v978 = vmax.f32 %v656, 0.0
    %v979 = vmax.f32 %v847, 0.0
    %v980 = vmax.f32 %v849, 0.0
    %v981 = vmax.f32 %v658, 0.0
    %v982 = vmax.f32 %v660, 0.0
    %v983 = vmax.f32 %v851, 0.0
    %v984 = vmax.f32 %v853, 0.0
    %v985 = vmax.f32 %v664, 0.0
    %v986 = vmax.f32 %v666, 0.0
    %v987 = vmax.f32 %v857, 0.0
    %v988 = vmax.f32 %v859, 0.0
    %v989 = vmax.f32 %v668, 0.0
    %v990 = vmax.f32 %v670, 0.0
    %v991 = vmax.f32 %v861, 0.0
    %v992 = vmax.f32 %v863, 0.0
    %v993 = vpack.c.bf16 %v869, %v865
    %v994 = vpack.c.bf16 %v870, %v866
    %v995 = vpack.c.bf16 %v871, %v867
    %v996 = vpack.c.bf16 %v872, %v868
    %v997 = vpack.c.bf16 %v877, %v873
    %v998 = vpack.c.bf16 %v878, %v874
    %v999 = vpack.c.bf16 %v879, %v875
    %v1000 = vpack.c.bf16 %v880, %v876
    %v1001 = vpack.c.bf16 %v885, %v881
    %v1002 = vpack.c.bf16 %v886, %v882
    %v1003 = vpack.c.bf16 %v887, %v883
    %v1004 = vpack.c.bf16 %v888, %v884
    %v1005 = vpack.c.bf16 %v893, %v889
    %v1006 = vpack.c.bf16 %v894, %v890
    %v1007 = vpack.c.bf16 %v895, %v891
    %v1008 = vpack.c.bf16 %v896, %v892
    %v1009 = vpack.c.bf16 %v901, %v897
    %v1010 = vpack.c.bf16 %v902, %v898
    %v1011 = vpack.c.bf16 %v903, %v899
    %v1012 = vpack.c.bf16 %v904, %v900
    %v1013 = vpack.c.bf16 %v909, %v905
    %v1014 = vpack.c.bf16 %v910, %v906
    %v1015 = vpack.c.bf16 %v911, %v907
    %v1016 = vpack.c.bf16 %v912, %v908
    %v1017 = vpack.c.bf16 %v917, %v913
    %v1018 = vpack.c.bf16 %v918, %v914
    %v1019 = vpack.c.bf16 %v919, %v915
    %v1020 = vpack.c.bf16 %v920, %v916
    %v1021 = vpack.c.bf16 %v925, %v921
    %v1022 = vpack.c.bf16 %v926, %v922
    %v1023 = vpack.c.bf16 %v927, %v923
    %v1024 = vpack.c.bf16 %v928, %v924
    %v1025 = vpack.c.bf16 %v933, %v929
    %v1026 = vpack.c.bf16 %v934, %v930
    %v1027 = vpack.c.bf16 %v935, %v931
    %v1028 = vpack.c.bf16 %v936, %v932
    %v1029 = vpack.c.bf16 %v941, %v937
    %v1030 = vpack.c.bf16 %v942, %v938
    %v1031 = vpack.c.bf16 %v943, %v939
    %v1032 = vpack.c.bf16 %v944, %v940
    %v1033 = vpack.c.bf16 %v949, %v945
    %v1034 = vpack.c.bf16 %v950, %v946
    %v1035 = vpack.c.bf16 %v951, %v947
    %v1036 = vpack.c.bf16 %v952, %v948
    %v1037 = vpack.c.bf16 %v957, %v953
    %v1038 = vpack.c.bf16 %v958, %v954
    %v1039 = vpack.c.bf16 %v959, %v955
    %v1040 = vpack.c.bf16 %v960, %v956
    %v1041 = vpack.c.bf16 %v965, %v961
    %v1042 = vpack.c.bf16 %v966, %v962
    %v1043 = vpack.c.bf16 %v967, %v963
    %v1044 = vpack.c.bf16 %v968, %v964
    %v1045 = vpack.c.bf16 %v973, %v969
    %v1046 = vpack.c.bf16 %v974, %v970
    %v1047 = vpack.c.bf16 %v975, %v971
    %v1048 = vpack.c.bf16 %v976, %v972
    %v1049 = vpack.c.bf16 %v981, %v977
    %v1050 = vpack.c.bf16 %v982, %v978
    %v1051 = vpack.c.bf16 %v983, %v979
    %v1052 = vpack.c.bf16 %v984, %v980
    %v1053 = vpack.c.bf16 %v989, %v985
    %v1054 = vpack.c.bf16 %v990, %v986
    %v1055 = vpack.c.bf16 %v991, %v987
    %v1056 = vpack.c.bf16 %v992, %v988
    %v1057 = vld [vmem:[#allocation2] sm:$0xff]
    %v1058 = vld [vmem:[#allocation2 + $0x8] sm:$0xff]
    %v1059 = vld [vmem:[#allocation2 + $0x10] sm:$0xff]
    %v1060 = vld [vmem:[#allocation2 + $0x18] sm:$0xff]
    %v1061 = vld [vmem:[#allocation2 + $0x20] sm:$0xff]
    %v1062 = vld [vmem:[#allocation2 + $0x28] sm:$0xff]
    %v1063 = vld [vmem:[#allocation2 + $0x30] sm:$0xff]
    %v1064 = vld [vmem:[#allocation2 + $0x38] sm:$0xff]
    %v1065 = vld [vmem:[#allocation2 + $0x40] sm:$0xff]
    %v1066 = vld [vmem:[#allocation2 + $0x48] sm:$0xff]
    %v1067 = vld [vmem:[#allocation2 + $0x50] sm:$0xff]
    %v1068 = vld [vmem:[#allocation2 + $0x58] sm:$0xff]
    %v1069 = vld [vmem:[#allocation2 + $0x60] sm:$0xff]
    %v1070 = vld [vmem:[#allocation2 + $0x68] sm:$0xff]
    %v1071 = vld [vmem:[#allocation2 + $0x70] sm:$0xff]
    %v1072 = vld [vmem:[#allocation2 + $0x78] sm:$0xff]
    %v1073 = vld [vmem:[#allocation2 + $0x80] sm:$0xff]
    %v1074 = vld [vmem:[#allocation2 + $0x88] sm:$0xff]
    %v1075 = vld [vmem:[#allocation2 + $0x90] sm:$0xff]
    %v1076 = vld [vmem:[#allocation2 + $0x98] sm:$0xff]
    %v1077 = vld [vmem:[#allocation2 + $0xa0] sm:$0xff]
    %v1078 = vld [vmem:[#allocation2 + $0xa8] sm:$0xff]
    %v1079 = vld [vmem:[#allocation2 + $0xb0] sm:$0xff]
    %v1080 = vld [vmem:[#allocation2 + $0xb8] sm:$0xff]
    %v1081 = vld [vmem:[#allocation2 + $0xc0] sm:$0xff]
    %v1082 = vld [vmem:[#allocation2 + $0xc8] sm:$0xff]
    %v1083 = vld [vmem:[#allocation2 + $0xd0] sm:$0xff]
    %v1084 = vld [vmem:[#allocation2 + $0xd8] sm:$0xff]
    %v1085 = vld [vmem:[#allocation2 + $0xe0] sm:$0xff]
    %v1086 = vld [vmem:[#allocation2 + $0xe8] sm:$0xff]
    %v1087 = vld [vmem:[#allocation2 + $0xf0] sm:$0xff]
    %v1088 = vld [vmem:[#allocation2 + $0xf8] sm:$0xff]
    %v1089 = vld [vmem:[#allocation2 + $0x100] sm:$0xff]
    %v1090 = vld [vmem:[#allocation2 + $0x108] sm:$0xff]
    %v1091 = vld [vmem:[#allocation2 + $0x110] sm:$0xff]
    %v1092 = vld [vmem:[#allocation2 + $0x118] sm:$0xff]
    %v1093 = vld [vmem:[#allocation2 + $0x120] sm:$0xff]
    %v1094 = vld [vmem:[#allocation2 + $0x128] sm:$0xff]
    %v1095 = vld [vmem:[#allocation2 + $0x130] sm:$0xff]
    %v1096 = vld [vmem:[#allocation2 + $0x138] sm:$0xff]
    %v1097 = vld [vmem:[#allocation2 + $0x140] sm:$0xff]
    %v1098 = vld [vmem:[#allocation2 + $0x148] sm:$0xff]
    %v1099 = vld [vmem:[#allocation2 + $0x150] sm:$0xff]
    %v1100 = vld [vmem:[#allocation2 + $0x158] sm:$0xff]
    %v1101 = vld [vmem:[#allocation2 + $0x160] sm:$0xff]
    %v1102 = vld [vmem:[#allocation2 + $0x168] sm:$0xff]
    %v1103 = vld [vmem:[#allocation2 + $0x170] sm:$0xff]
    %v1104 = vld [vmem:[#allocation2 + $0x178] sm:$0xff]
    %v1105 = vld [vmem:[#allocation2 + $0x180] sm:$0xff]
    %v1106 = vld [vmem:[#allocation2 + $0x188] sm:$0xff]
    %v1107 = vld [vmem:[#allocation2 + $0x190] sm:$0xff]
    %v1108 = vld [vmem:[#allocation2 + $0x198] sm:$0xff]
    %v1109 = vld [vmem:[#allocation2 + $0x1a0] sm:$0xff]
    %v1110 = vld [vmem:[#allocation2 + $0x1a8] sm:$0xff]
    %v1111 = vld [vmem:[#allocation2 + $0x1b0] sm:$0xff]
    %v1112 = vld [vmem:[#allocation2 + $0x1b8] sm:$0xff]
    %v1113 = vld [vmem:[#allocation2 + $0x1c0] sm:$0xff]
    %v1114 = vld [vmem:[#allocation2 + $0x1c8] sm:$0xff]
    %v1115 = vld [vmem:[#allocation2 + $0x1d0] sm:$0xff]
    %v1116 = vld [vmem:[#allocation2 + $0x1d8] sm:$0xff]
    %v1117 = vld [vmem:[#allocation2 + $0x1e0] sm:$0xff]
    %v1118 = vld [vmem:[#allocation2 + $0x1e8] sm:$0xff]
    %v1119 = vld [vmem:[#allocation2 + $0x1f0] sm:$0xff]
    %v1120 = vld [vmem:[#allocation2 + $0x1f8] sm:$0xff]
    %v1121 = vld [vmem:[#allocation2 + $0x200] sm:$0xff]
    %v1122 = vld [vmem:[#allocation2 + $0x208] sm:$0xff]
    %v1123 = vld [vmem:[#allocation2 + $0x210] sm:$0xff]
    %v1124 = vld [vmem:[#allocation2 + $0x218] sm:$0xff]
    %v1125 = vld [vmem:[#allocation2 + $0x220] sm:$0xff]
    %v1126 = vld [vmem:[#allocation2 + $0x228] sm:$0xff]
    %v1127 = vld [vmem:[#allocation2 + $0x230] sm:$0xff]
    %v1128 = vld [vmem:[#allocation2 + $0x238] sm:$0xff]
    %v1129 = vld [vmem:[#allocation2 + $0x240] sm:$0xff]
    %v1130 = vld [vmem:[#allocation2 + $0x248] sm:$0xff]
    %v1131 = vld [vmem:[#allocation2 + $0x250] sm:$0xff]
    %v1132 = vld [vmem:[#allocation2 + $0x258] sm:$0xff]
    %v1133 = vld [vmem:[#allocation2 + $0x260] sm:$0xff]
    %v1134 = vld [vmem:[#allocation2 + $0x268] sm:$0xff]
    %v1135 = vld [vmem:[#allocation2 + $0x270] sm:$0xff]
    %v1136 = vld [vmem:[#allocation2 + $0x278] sm:$0xff]
    %v1137 = vld [vmem:[#allocation2 + $0x280] sm:$0xff]
    %v1138 = vld [vmem:[#allocation2 + $0x288] sm:$0xff]
    %v1139 = vld [vmem:[#allocation2 + $0x290] sm:$0xff]
    %v1140 = vld [vmem:[#allocation2 + $0x298] sm:$0xff]
    %v1141 = vld [vmem:[#allocation2 + $0x2a0] sm:$0xff]
    %v1142 = vld [vmem:[#allocation2 + $0x2a8] sm:$0xff]
    %v1143 = vld [vmem:[#allocation2 + $0x2b0] sm:$0xff]
    %v1144 = vld [vmem:[#allocation2 + $0x2b8] sm:$0xff]
    %v1145 = vld [vmem:[#allocation2 + $0x2c0] sm:$0xff]
    %v1146 = vld [vmem:[#allocation2 + $0x2c8] sm:$0xff]
    %v1147 = vld [vmem:[#allocation2 + $0x2d0] sm:$0xff]
    %v1148 = vld [vmem:[#allocation2 + $0x2d8] sm:$0xff]
    %v1149 = vld [vmem:[#allocation2 + $0x2e0] sm:$0xff]
    %v1150 = vld [vmem:[#allocation2 + $0x2e8] sm:$0xff]
    %v1151 = vld [vmem:[#allocation2 + $0x2f0] sm:$0xff]
    %v1152 = vld [vmem:[#allocation2 + $0x2f8] sm:$0xff]
    %v1153 = vld [vmem:[#allocation2 + $0x300] sm:$0xff]
    %v1154 = vld [vmem:[#allocation2 + $0x308] sm:$0xff]
    %v1155 = vld [vmem:[#allocation2 + $0x310] sm:$0xff]
    %v1156 = vld [vmem:[#allocation2 + $0x318] sm:$0xff]
    %v1157 = vld [vmem:[#allocation2 + $0x320] sm:$0xff]
    %v1158 = vld [vmem:[#allocation2 + $0x328] sm:$0xff]
    %v1159 = vld [vmem:[#allocation2 + $0x330] sm:$0xff]
    %v1160 = vld [vmem:[#allocation2 + $0x338] sm:$0xff]
    %v1161 = vld [vmem:[#allocation2 + $0x340] sm:$0xff]
    %v1162 = vld [vmem:[#allocation2 + $0x348] sm:$0xff]
    %v1163 = vld [vmem:[#allocation2 + $0x350] sm:$0xff]
    %v1164 = vld [vmem:[#allocation2 + $0x358] sm:$0xff]
    %v1165 = vld [vmem:[#allocation2 + $0x360] sm:$0xff]
    %v1166 = vld [vmem:[#allocation2 + $0x368] sm:$0xff]
    %v1167 = vld [vmem:[#allocation2 + $0x370] sm:$0xff]
    %v1168 = vld [vmem:[#allocation2 + $0x378] sm:$0xff]
    %v1169 = vld [vmem:[#allocation2 + $0x380] sm:$0xff]
    %v1170 = vld [vmem:[#allocation2 + $0x388] sm:$0xff]
    %v1171 = vld [vmem:[#allocation2 + $0x390] sm:$0xff]
    %v1172 = vld [vmem:[#allocation2 + $0x398] sm:$0xff]
    %v1173 = vld [vmem:[#allocation2 + $0x3a0] sm:$0xff]
    %v1174 = vld [vmem:[#allocation2 + $0x3a8] sm:$0xff]
    %v1175 = vld [vmem:[#allocation2 + $0x3b0] sm:$0xff]
    %v1176 = vld [vmem:[#allocation2 + $0x3b8] sm:$0xff]
    %v1177 = vld [vmem:[#allocation2 + $0x3c0] sm:$0xff]
    %v1178 = vld [vmem:[#allocation2 + $0x3c8] sm:$0xff]
    %v1179 = vld [vmem:[#allocation2 + $0x3d0] sm:$0xff]
    %v1180 = vld [vmem:[#allocation2 + $0x3d8] sm:$0xff]
    %v1181 = vld [vmem:[#allocation2 + $0x3e0] sm:$0xff]
    %v1182 = vld [vmem:[#allocation2 + $0x3e8] sm:$0xff]
    %v1183 = vld [vmem:[#allocation2 + $0x3f0] sm:$0xff]
    %v1184 = vld [vmem:[#allocation2 + $0x3f8] sm:$0xff]
    %v1185 = vld [vmem:[#allocation2 + $0x400] sm:$0xff]
    %v1186 = vld [vmem:[#allocation2 + $0x408] sm:$0xff]
    %v1187 = vld [vmem:[#allocation2 + $0x410] sm:$0xff]
    %v1188 = vld [vmem:[#allocation2 + $0x418] sm:$0xff]
    %v1189 = vld [vmem:[#allocation2 + $0x420] sm:$0xff]
    %v1190 = vld [vmem:[#allocation2 + $0x428] sm:$0xff]
    %v1191 = vld [vmem:[#allocation2 + $0x430] sm:$0xff]
    %v1192 = vld [vmem:[#allocation2 + $0x438] sm:$0xff]
    %v1193 = vld [vmem:[#allocation2 + $0x440] sm:$0xff]
    %v1194 = vld [vmem:[#allocation2 + $0x448] sm:$0xff]
    %v1195 = vld [vmem:[#allocation2 + $0x450] sm:$0xff]
    %v1196 = vld [vmem:[#allocation2 + $0x458] sm:$0xff]
    %v1197 = vld [vmem:[#allocation2 + $0x460] sm:$0xff]
    %v1198 = vld [vmem:[#allocation2 + $0x468] sm:$0xff]
    %v1199 = vld [vmem:[#allocation2 + $0x470] sm:$0xff]
    %v1200 = vld [vmem:[#allocation2 + $0x478] sm:$0xff]
    %v1201 = vld [vmem:[#allocation2 + $0x480] sm:$0xff]
    %v1202 = vld [vmem:[#allocation2 + $0x488] sm:$0xff]
    %v1203 = vld [vmem:[#allocation2 + $0x490] sm:$0xff]
    %v1204 = vld [vmem:[#allocation2 + $0x498] sm:$0xff]
    %v1205 = vld [vmem:[#allocation2 + $0x4a0] sm:$0xff]
    %v1206 = vld [vmem:[#allocation2 + $0x4a8] sm:$0xff]
    %v1207 = vld [vmem:[#allocation2 + $0x4b0] sm:$0xff]
    %v1208 = vld [vmem:[#allocation2 + $0x4b8] sm:$0xff]
    %v1209 = vld [vmem:[#allocation2 + $0x4c0] sm:$0xff]
    %v1210 = vld [vmem:[#allocation2 + $0x4c8] sm:$0xff]
    %v1211 = vld [vmem:[#allocation2 + $0x4d0] sm:$0xff]
    %v1212 = vld [vmem:[#allocation2 + $0x4d8] sm:$0xff]
    %v1213 = vld [vmem:[#allocation2 + $0x4e0] sm:$0xff]
    %v1214 = vld [vmem:[#allocation2 + $0x4e8] sm:$0xff]
    %v1215 = vld [vmem:[#allocation2 + $0x4f0] sm:$0xff]
    %v1216 = vld [vmem:[#allocation2 + $0x4f8] sm:$0xff]
    %v1217 = vld [vmem:[#allocation2 + $0x500] sm:$0xff]
    %v1218 = vld [vmem:[#allocation2 + $0x508] sm:$0xff]
    %v1219 = vld [vmem:[#allocation2 + $0x510] sm:$0xff]
    %v1220 = vld [vmem:[#allocation2 + $0x518] sm:$0xff]
    %v1221 = vld [vmem:[#allocation2 + $0x520] sm:$0xff]
    %v1222 = vld [vmem:[#allocation2 + $0x528] sm:$0xff]
    %v1223 = vld [vmem:[#allocation2 + $0x530] sm:$0xff]
    %v1224 = vld [vmem:[#allocation2 + $0x538] sm:$0xff]
    %v1225 = vld [vmem:[#allocation2 + $0x540] sm:$0xff]
    %v1226 = vld [vmem:[#allocation2 + $0x548] sm:$0xff]
    %v1227 = vld [vmem:[#allocation2 + $0x550] sm:$0xff]
    %v1228 = vld [vmem:[#allocation2 + $0x558] sm:$0xff]
    %v1229 = vld [vmem:[#allocation2 + $0x560] sm:$0xff]
    %v1230 = vld [vmem:[#allocation2 + $0x568] sm:$0xff]
    %v1231 = vld [vmem:[#allocation2 + $0x570] sm:$0xff]
    %v1232 = vld [vmem:[#allocation2 + $0x578] sm:$0xff]
    %v1233 = vld [vmem:[#allocation2 + $0x580] sm:$0xff]
    %v1234 = vld [vmem:[#allocation2 + $0x588] sm:$0xff]
    %v1235 = vld [vmem:[#allocation2 + $0x590] sm:$0xff]
    %v1236 = vld [vmem:[#allocation2 + $0x598] sm:$0xff]
    %v1237 = vld [vmem:[#allocation2 + $0x5a0] sm:$0xff]
    %v1238 = vld [vmem:[#allocation2 + $0x5a8] sm:$0xff]
    %v1239 = vld [vmem:[#allocation2 + $0x5b0] sm:$0xff]
    %v1240 = vld [vmem:[#allocation2 + $0x5b8] sm:$0xff]
    %v1241 = vld [vmem:[#allocation2 + $0x5c0] sm:$0xff]
    %v1242 = vld [vmem:[#allocation2 + $0x5c8] sm:$0xff]
    %v1243 = vld [vmem:[#allocation2 + $0x5d0] sm:$0xff]
    %v1244 = vld [vmem:[#allocation2 + $0x5d8] sm:$0xff]
    %v1245 = vld [vmem:[#allocation2 + $0x5e0] sm:$0xff]
    %v1246 = vld [vmem:[#allocation2 + $0x5e8] sm:$0xff]
    %v1247 = vld [vmem:[#allocation2 + $0x5f0] sm:$0xff]
    %v1248 = vld [vmem:[#allocation2 + $0x5f8] sm:$0xff]
    %v1250 = vlaneseq
    %v1251 = vshrl.u32 %v1250, 7
    %v1252 = vsub.s32 0, %v1251
    %v1253 = vrot.slane %v69, %v1252
    %v1254 = vlaneseq
    %v1255 = vshrl.u32 %v1254, 7
    %v1256 = vsub.s32 1, %v1255
    %v1257 = vrot.slane %v69, %v1256
    %v1258 = vlaneseq
    %v1259 = vshrl.u32 %v1258, 7
    %v1260 = vsub.s32 2, %v1259
    %v1261 = vrot.slane %v69, %v1260
    %v1262 = vlaneseq
    %v1263 = vshrl.u32 %v1262, 7
    %v1264 = vsub.s32 3, %v1263
    %v1265 = vrot.slane %v69, %v1264
    %v1266 = vlaneseq
    %v1267 = vshrl.u32 %v1266, 7
    %v1268 = vsub.s32 4, %v1267
    %v1269 = vrot.slane %v69, %v1268
    %v1270 = vlaneseq
    %v1271 = vshrl.u32 %v1270, 7
    %v1272 = vsub.s32 5, %v1271
    %v1273 = vrot.slane %v69, %v1272
    %v1472 = vunpack.c.l.b16 %v1057
    %v1473 = vunpack.c.h.b16 %v1057
    %v1474 = vunpack.c.l.b16 %v1058
    %v1475 = vunpack.c.h.b16 %v1058
    %v1476 = vunpack.c.l.b16 %v1059
    %v1477 = vunpack.c.h.b16 %v1059
    %v1478 = vunpack.c.l.b16 %v1060
    %v1479 = vunpack.c.h.b16 %v1060
    %v1480 = vunpack.c.l.b16 %v1061
    %v1481 = vunpack.c.h.b16 %v1061
    %v1482 = vunpack.c.l.b16 %v1062
    %v1483 = vunpack.c.h.b16 %v1062
    %v1484 = vunpack.c.l.b16 %v1063
    %v1485 = vunpack.c.h.b16 %v1063
    %v1486 = vunpack.c.l.b16 %v1064
    %v1487 = vunpack.c.h.b16 %v1064
    %v1488 = vunpack.c.l.b16 %v1065
    %v1489 = vunpack.c.h.b16 %v1065
    %v1490 = vunpack.c.l.b16 %v1066
    %v1491 = vunpack.c.h.b16 %v1066
    %v1492 = vunpack.c.l.b16 %v1067
    %v1493 = vunpack.c.h.b16 %v1067
    %v1494 = vunpack.c.l.b16 %v1068
    %v1495 = vunpack.c.h.b16 %v1068
    %v1496 = vunpack.c.l.b16 %v1069
    %v1497 = vunpack.c.h.b16 %v1069
    %v1498 = vunpack.c.l.b16 %v1070
    %v1499 = vunpack.c.h.b16 %v1070
    %v1500 = vunpack.c.l.b16 %v1071
    %v1501 = vunpack.c.h.b16 %v1071
    %v1502 = vunpack.c.l.b16 %v1072
    %v1503 = vunpack.c.h.b16 %v1072
    %v1504 = vunpack.c.l.b16 %v1073
    %v1505 = vunpack.c.h.b16 %v1073
    %v1506 = vunpack.c.l.b16 %v1074
    %v1507 = vunpack.c.h.b16 %v1074
    %v1508 = vunpack.c.l.b16 %v1075
    %v1509 = vunpack.c.h.b16 %v1075
    %v1510 = vunpack.c.l.b16 %v1076
    %v1511 = vunpack.c.h.b16 %v1076
    %v1512 = vunpack.c.l.b16 %v1077
    %v1513 = vunpack.c.h.b16 %v1077
    %v1514 = vunpack.c.l.b16 %v1078
    %v1515 = vunpack.c.h.b16 %v1078
    %v1516 = vunpack.c.l.b16 %v1079
    %v1517 = vunpack.c.h.b16 %v1079
    %v1518 = vunpack.c.l.b16 %v1080
    %v1519 = vunpack.c.h.b16 %v1080
    %v1520 = vunpack.c.l.b16 %v1081
    %v1521 = vunpack.c.h.b16 %v1081
    %v1522 = vunpack.c.l.b16 %v1082
    %v1523 = vunpack.c.h.b16 %v1082
    %v1524 = vunpack.c.l.b16 %v1083
    %v1525 = vunpack.c.h.b16 %v1083
    %v1526 = vunpack.c.l.b16 %v1084
    %v1527 = vunpack.c.h.b16 %v1084
    %v1528 = vunpack.c.l.b16 %v1085
    %v1529 = vunpack.c.h.b16 %v1085
    %v1530 = vunpack.c.l.b16 %v1086
    %v1531 = vunpack.c.h.b16 %v1086
    %v1532 = vunpack.c.l.b16 %v1087
    %v1533 = vunpack.c.h.b16 %v1087
    %v1534 = vunpack.c.l.b16 %v1088
    %v1535 = vunpack.c.h.b16 %v1088
    %v1536 = vunpack.c.l.b16 %v1089
    %v1537 = vunpack.c.h.b16 %v1089
    %v1538 = vunpack.c.l.b16 %v1090
    %v1539 = vunpack.c.h.b16 %v1090
    %v1540 = vunpack.c.l.b16 %v1091
    %v1541 = vunpack.c.h.b16 %v1091
    %v1542 = vunpack.c.l.b16 %v1092
    %v1543 = vunpack.c.h.b16 %v1092
    %v1544 = vunpack.c.l.b16 %v1093
    %v1545 = vunpack.c.h.b16 %v1093
    %v1546 = vunpack.c.l.b16 %v1094
    %v1547 = vunpack.c.h.b16 %v1094
    %v1548 = vunpack.c.l.b16 %v1095
    %v1549 = vunpack.c.h.b16 %v1095
    %v1550 = vunpack.c.l.b16 %v1096
    %v1551 = vunpack.c.h.b16 %v1096
    %v1552 = vunpack.c.l.b16 %v1097
    %v1553 = vunpack.c.h.b16 %v1097
    %v1554 = vunpack.c.l.b16 %v1098
    %v1555 = vunpack.c.h.b16 %v1098
    %v1556 = vunpack.c.l.b16 %v1099
    %v1557 = vunpack.c.h.b16 %v1099
    %v1558 = vunpack.c.l.b16 %v1100
    %v1559 = vunpack.c.h.b16 %v1100
    %v1560 = vunpack.c.l.b16 %v1101
    %v1561 = vunpack.c.h.b16 %v1101
    %v1562 = vunpack.c.l.b16 %v1102
    %v1563 = vunpack.c.h.b16 %v1102
    %v1564 = vunpack.c.l.b16 %v1103
    %v1565 = vunpack.c.h.b16 %v1103
    %v1566 = vunpack.c.l.b16 %v1104
    %v1567 = vunpack.c.h.b16 %v1104
    %v1568 = vunpack.c.l.b16 %v1105
    %v1569 = vunpack.c.h.b16 %v1105
    %v1570 = vunpack.c.l.b16 %v1106
    %v1571 = vunpack.c.h.b16 %v1106
    %v1572 = vunpack.c.l.b16 %v1107
    %v1573 = vunpack.c.h.b16 %v1107
    %v1574 = vunpack.c.l.b16 %v1108
    %v1575 = vunpack.c.h.b16 %v1108
    %v1576 = vunpack.c.l.b16 %v1109
    %v1577 = vunpack.c.h.b16 %v1109
    %v1578 = vunpack.c.l.b16 %v1110
    %v1579 = vunpack.c.h.b16 %v1110
    %v1580 = vunpack.c.l.b16 %v1111
    %v1581 = vunpack.c.h.b16 %v1111
    %v1582 = vunpack.c.l.b16 %v1112
    %v1583 = vunpack.c.h.b16 %v1112
    %v1584 = vunpack.c.l.b16 %v1113
    %v1585 = vunpack.c.h.b16 %v1113
    %v1586 = vunpack.c.l.b16 %v1114
    %v1587 = vunpack.c.h.b16 %v1114
    %v1588 = vunpack.c.l.b16 %v1115
    %v1589 = vunpack.c.h.b16 %v1115
    %v1590 = vunpack.c.l.b16 %v1116
    %v1591 = vunpack.c.h.b16 %v1116
    %v1592 = vunpack.c.l.b16 %v1117
    %v1593 = vunpack.c.h.b16 %v1117
    %v1594 = vunpack.c.l.b16 %v1118
    %v1595 = vunpack.c.h.b16 %v1118
    %v1596 = vunpack.c.l.b16 %v1119
    %v1597 = vunpack.c.h.b16 %v1119
    %v1598 = vunpack.c.l.b16 %v1120
    %v1599 = vunpack.c.h.b16 %v1120
    %v1600 = vunpack.c.l.b16 %v1121
    %v1601 = vunpack.c.h.b16 %v1121
    %v1602 = vunpack.c.l.b16 %v1122
    %v1603 = vunpack.c.h.b16 %v1122
    %v1604 = vunpack.c.l.b16 %v1123
    %v1605 = vunpack.c.h.b16 %v1123
    %v1606 = vunpack.c.l.b16 %v1124
    %v1607 = vunpack.c.h.b16 %v1124
    %v1608 = vunpack.c.l.b16 %v1125
    %v1609 = vunpack.c.h.b16 %v1125
    %v1610 = vunpack.c.l.b16 %v1126
    %v1611 = vunpack.c.h.b16 %v1126
    %v1612 = vunpack.c.l.b16 %v1127
    %v1613 = vunpack.c.h.b16 %v1127
    %v1614 = vunpack.c.l.b16 %v1128
    %v1615 = vunpack.c.h.b16 %v1128
    %v1616 = vunpack.c.l.b16 %v1129
    %v1617 = vunpack.c.h.b16 %v1129
    %v1618 = vunpack.c.l.b16 %v1130
    %v1619 = vunpack.c.h.b16 %v1130
    %v1620 = vunpack.c.l.b16 %v1131
    %v1621 = vunpack.c.h.b16 %v1131
    %v1622 = vunpack.c.l.b16 %v1132
    %v1623 = vunpack.c.h.b16 %v1132
    %v1624 = vunpack.c.l.b16 %v1133
    %v1625 = vunpack.c.h.b16 %v1133
    %v1626 = vunpack.c.l.b16 %v1134
    %v1627 = vunpack.c.h.b16 %v1134
    %v1628 = vunpack.c.l.b16 %v1135
    %v1629 = vunpack.c.h.b16 %v1135
    %v1630 = vunpack.c.l.b16 %v1136
    %v1631 = vunpack.c.h.b16 %v1136
    %v1632 = vunpack.c.l.b16 %v1137
    %v1633 = vunpack.c.h.b16 %v1137
    %v1634 = vunpack.c.l.b16 %v1138
    %v1635 = vunpack.c.h.b16 %v1138
    %v1636 = vunpack.c.l.b16 %v1139
    %v1637 = vunpack.c.h.b16 %v1139
    %v1638 = vunpack.c.l.b16 %v1140
    %v1639 = vunpack.c.h.b16 %v1140
    %v1640 = vunpack.c.l.b16 %v1141
    %v1641 = vunpack.c.h.b16 %v1141
    %v1642 = vunpack.c.l.b16 %v1142
    %v1643 = vunpack.c.h.b16 %v1142
    %v1644 = vunpack.c.l.b16 %v1143
    %v1645 = vunpack.c.h.b16 %v1143
    %v1646 = vunpack.c.l.b16 %v1144
    %v1647 = vunpack.c.h.b16 %v1144
    %v1648 = vunpack.c.l.b16 %v1145
    %v1649 = vunpack.c.h.b16 %v1145
    %v1650 = vunpack.c.l.b16 %v1146
    %v1651 = vunpack.c.h.b16 %v1146
    %v1652 = vunpack.c.l.b16 %v1147
    %v1653 = vunpack.c.h.b16 %v1147
    %v1654 = vunpack.c.l.b16 %v1148
    %v1655 = vunpack.c.h.b16 %v1148
    %v1656 = vunpack.c.l.b16 %v1149
    %v1657 = vunpack.c.h.b16 %v1149
    %v1658 = vunpack.c.l.b16 %v1150
    %v1659 = vunpack.c.h.b16 %v1150
    %v1660 = vunpack.c.l.b16 %v1151
    %v1661 = vunpack.c.h.b16 %v1151
    %v1662 = vunpack.c.l.b16 %v1152
    %v1663 = vunpack.c.h.b16 %v1152
    %v1664 = vunpack.c.l.b16 %v1153
    %v1665 = vunpack.c.h.b16 %v1153
    %v1666 = vunpack.c.l.b16 %v1154
    %v1667 = vunpack.c.h.b16 %v1154
    %v1668 = vunpack.c.l.b16 %v1155
    %v1669 = vunpack.c.h.b16 %v1155
    %v1670 = vunpack.c.l.b16 %v1156
    %v1671 = vunpack.c.h.b16 %v1156
    %v1672 = vunpack.c.l.b16 %v1157
    %v1673 = vunpack.c.h.b16 %v1157
    %v1674 = vunpack.c.l.b16 %v1158
    %v1675 = vunpack.c.h.b16 %v1158
    %v1676 = vunpack.c.l.b16 %v1159
    %v1677 = vunpack.c.h.b16 %v1159
    %v1678 = vunpack.c.l.b16 %v1160
    %v1679 = vunpack.c.h.b16 %v1160
    %v1680 = vunpack.c.l.b16 %v1161
    %v1681 = vunpack.c.h.b16 %v1161
    %v1682 = vunpack.c.l.b16 %v1162
    %v1683 = vunpack.c.h.b16 %v1162
    %v1684 = vunpack.c.l.b16 %v1163
    %v1685 = vunpack.c.h.b16 %v1163
    %v1686 = vunpack.c.l.b16 %v1164
    %v1687 = vunpack.c.h.b16 %v1164
    %v1688 = vunpack.c.l.b16 %v1165
    %v1689 = vunpack.c.h.b16 %v1165
    %v1690 = vunpack.c.l.b16 %v1166
    %v1691 = vunpack.c.h.b16 %v1166
    %v1692 = vunpack.c.l.b16 %v1167
    %v1693 = vunpack.c.h.b16 %v1167
    %v1694 = vunpack.c.l.b16 %v1168
    %v1695 = vunpack.c.h.b16 %v1168
    %v1696 = vunpack.c.l.b16 %v1169
    %v1697 = vunpack.c.h.b16 %v1169
    %v1698 = vunpack.c.l.b16 %v1170
    %v1699 = vunpack.c.h.b16 %v1170
    %v1700 = vunpack.c.l.b16 %v1171
    %v1701 = vunpack.c.h.b16 %v1171
    %v1702 = vunpack.c.l.b16 %v1172
    %v1703 = vunpack.c.h.b16 %v1172
    %v1704 = vunpack.c.l.b16 %v1173
    %v1705 = vunpack.c.h.b16 %v1173
    %v1706 = vunpack.c.l.b16 %v1174
    %v1707 = vunpack.c.h.b16 %v1174
    %v1708 = vunpack.c.l.b16 %v1175
    %v1709 = vunpack.c.h.b16 %v1175
    %v1710 = vunpack.c.l.b16 %v1176
    %v1711 = vunpack.c.h.b16 %v1176
    %v1712 = vunpack.c.l.b16 %v1177
    %v1713 = vunpack.c.h.b16 %v1177
    %v1714 = vunpack.c.l.b16 %v1178
    %v1715 = vunpack.c.h.b16 %v1178
    %v1716 = vunpack.c.l.b16 %v1179
    %v1717 = vunpack.c.h.b16 %v1179
    %v1718 = vunpack.c.l.b16 %v1180
    %v1719 = vunpack.c.h.b16 %v1180
    %v1720 = vunpack.c.l.b16 %v1181
    %v1721 = vunpack.c.h.b16 %v1181
    %v1722 = vunpack.c.l.b16 %v1182
    %v1723 = vunpack.c.h.b16 %v1182
    %v1724 = vunpack.c.l.b16 %v1183
    %v1725 = vunpack.c.h.b16 %v1183
    %v1726 = vunpack.c.l.b16 %v1184
    %v1727 = vunpack.c.h.b16 %v1184
    %v1728 = vunpack.c.l.b16 %v1185
    %v1729 = vunpack.c.h.b16 %v1185
    %v1730 = vunpack.c.l.b16 %v1186
    %v1731 = vunpack.c.h.b16 %v1186
    %v1732 = vunpack.c.l.b16 %v1187
    %v1733 = vunpack.c.h.b16 %v1187
    %v1734 = vunpack.c.l.b16 %v1188
    %v1735 = vunpack.c.h.b16 %v1188
    %v1736 = vunpack.c.l.b16 %v1189
    %v1737 = vunpack.c.h.b16 %v1189
    %v1738 = vunpack.c.l.b16 %v1190
    %v1739 = vunpack.c.h.b16 %v1190
    %v1740 = vunpack.c.l.b16 %v1191
    %v1741 = vunpack.c.h.b16 %v1191
    %v1742 = vunpack.c.l.b16 %v1192
    %v1743 = vunpack.c.h.b16 %v1192
    %v1744 = vunpack.c.l.b16 %v1193
    %v1745 = vunpack.c.h.b16 %v1193
    %v1746 = vunpack.c.l.b16 %v1194
    %v1747 = vunpack.c.h.b16 %v1194
    %v1748 = vunpack.c.l.b16 %v1195
    %v1749 = vunpack.c.h.b16 %v1195
    %v1750 = vunpack.c.l.b16 %v1196
    %v1751 = vunpack.c.h.b16 %v1196
    %v1752 = vunpack.c.l.b16 %v1197
    %v1753 = vunpack.c.h.b16 %v1197
    %v1754 = vunpack.c.l.b16 %v1198
    %v1755 = vunpack.c.h.b16 %v1198
    %v1756 = vunpack.c.l.b16 %v1199
    %v1757 = vunpack.c.h.b16 %v1199
    %v1758 = vunpack.c.l.b16 %v1200
    %v1759 = vunpack.c.h.b16 %v1200
    %v1760 = vunpack.c.l.b16 %v1201
    %v1761 = vunpack.c.h.b16 %v1201
    %v1762 = vunpack.c.l.b16 %v1202
    %v1763 = vunpack.c.h.b16 %v1202
    %v1764 = vunpack.c.l.b16 %v1203
    %v1765 = vunpack.c.h.b16 %v1203
    %v1766 = vunpack.c.l.b16 %v1204
    %v1767 = vunpack.c.h.b16 %v1204
    %v1768 = vunpack.c.l.b16 %v1205
    %v1769 = vunpack.c.h.b16 %v1205
    %v1770 = vunpack.c.l.b16 %v1206
    %v1771 = vunpack.c.h.b16 %v1206
    %v1772 = vunpack.c.l.b16 %v1207
    %v1773 = vunpack.c.h.b16 %v1207
    %v1774 = vunpack.c.l.b16 %v1208
    %v1775 = vunpack.c.h.b16 %v1208
    %v1776 = vunpack.c.l.b16 %v1209
    %v1777 = vunpack.c.h.b16 %v1209
    %v1778 = vunpack.c.l.b16 %v1210
    %v1779 = vunpack.c.h.b16 %v1210
    %v1780 = vunpack.c.l.b16 %v1211
    %v1781 = vunpack.c.h.b16 %v1211
    %v1782 = vunpack.c.l.b16 %v1212
    %v1783 = vunpack.c.h.b16 %v1212
    %v1784 = vunpack.c.l.b16 %v1213
    %v1785 = vunpack.c.h.b16 %v1213
    %v1786 = vunpack.c.l.b16 %v1214
    %v1787 = vunpack.c.h.b16 %v1214
    %v1788 = vunpack.c.l.b16 %v1215
    %v1789 = vunpack.c.h.b16 %v1215
    %v1790 = vunpack.c.l.b16 %v1216
    %v1791 = vunpack.c.h.b16 %v1216
    %v1792 = vunpack.c.l.b16 %v1217
    %v1793 = vunpack.c.h.b16 %v1217
    %v1794 = vunpack.c.l.b16 %v1218
    %v1795 = vunpack.c.h.b16 %v1218
    %v1796 = vunpack.c.l.b16 %v1219
    %v1797 = vunpack.c.h.b16 %v1219
    %v1798 = vunpack.c.l.b16 %v1220
    %v1799 = vunpack.c.h.b16 %v1220
    %v1800 = vunpack.c.l.b16 %v1221
    %v1801 = vunpack.c.h.b16 %v1221
    %v1802 = vunpack.c.l.b16 %v1222
    %v1803 = vunpack.c.h.b16 %v1222
    %v1804 = vunpack.c.l.b16 %v1223
    %v1805 = vunpack.c.h.b16 %v1223
    %v1806 = vunpack.c.l.b16 %v1224
    %v1807 = vunpack.c.h.b16 %v1224
    %v1808 = vunpack.c.l.b16 %v1225
    %v1809 = vunpack.c.h.b16 %v1225
    %v1810 = vunpack.c.l.b16 %v1226
    %v1811 = vunpack.c.h.b16 %v1226
    %v1812 = vunpack.c.l.b16 %v1227
    %v1813 = vunpack.c.h.b16 %v1227
    %v1814 = vunpack.c.l.b16 %v1228
    %v1815 = vunpack.c.h.b16 %v1228
    %v1816 = vunpack.c.l.b16 %v1229
    %v1817 = vunpack.c.h.b16 %v1229
    %v1818 = vunpack.c.l.b16 %v1230
    %v1819 = vunpack.c.h.b16 %v1230
    %v1820 = vunpack.c.l.b16 %v1231
    %v1821 = vunpack.c.h.b16 %v1231
    %v1822 = vunpack.c.l.b16 %v1232
    %v1823 = vunpack.c.h.b16 %v1232
    %v1824 = vunpack.c.l.b16 %v1233
    %v1825 = vunpack.c.h.b16 %v1233
    %v1826 = vunpack.c.l.b16 %v1234
    %v1827 = vunpack.c.h.b16 %v1234
    %v1828 = vunpack.c.l.b16 %v1235
    %v1829 = vunpack.c.h.b16 %v1235
    %v1830 = vunpack.c.l.b16 %v1236
    %v1831 = vunpack.c.h.b16 %v1236
    %v1832 = vunpack.c.l.b16 %v1237
    %v1833 = vunpack.c.h.b16 %v1237
    %v1834 = vunpack.c.l.b16 %v1238
    %v1835 = vunpack.c.h.b16 %v1238
    %v1836 = vunpack.c.l.b16 %v1239
    %v1837 = vunpack.c.h.b16 %v1239
    %v1838 = vunpack.c.l.b16 %v1240
    %v1839 = vunpack.c.h.b16 %v1240
    %v1840 = vunpack.c.l.b16 %v1241
    %v1841 = vunpack.c.h.b16 %v1241
    %v1842 = vunpack.c.l.b16 %v1242
    %v1843 = vunpack.c.h.b16 %v1242
    %v1844 = vunpack.c.l.b16 %v1243
    %v1845 = vunpack.c.h.b16 %v1243
    %v1846 = vunpack.c.l.b16 %v1244
    %v1847 = vunpack.c.h.b16 %v1244
    %v1848 = vunpack.c.l.b16 %v1245
    %v1849 = vunpack.c.h.b16 %v1245
    %v1850 = vunpack.c.l.b16 %v1246
    %v1851 = vunpack.c.h.b16 %v1246
    %v1852 = vunpack.c.l.b16 %v1247
    %v1853 = vunpack.c.h.b16 %v1247
    %v1854 = vunpack.c.l.b16 %v1248
    %v1855 = vunpack.c.h.b16 %v1248
    %v1856 = vpack.c.b16 %v1478, %v1472
    %v1857 = vpack.c.b16 %v1479, %v1473
    %v1858 = vpack.c.b16 %v1480, %v1474
    %v1859 = vpack.c.b16 %v1481, %v1475
    %v1860 = vpack.c.b16 %v1482, %v1476
    %v1861 = vpack.c.b16 %v1483, %v1477
    %v1862 = vpack.c.b16 %v1490, %v1484
    %v1863 = vpack.c.b16 %v1491, %v1485
    %v1864 = vpack.c.b16 %v1492, %v1486
    %v1865 = vpack.c.b16 %v1493, %v1487
    %v1866 = vpack.c.b16 %v1494, %v1488
    %v1867 = vpack.c.b16 %v1495, %v1489
    %v1868 = vpack.c.b16 %v1502, %v1496
    %v1869 = vpack.c.b16 %v1503, %v1497
    %v1870 = vpack.c.b16 %v1504, %v1498
    %v1871 = vpack.c.b16 %v1505, %v1499
    %v1872 = vpack.c.b16 %v1506, %v1500
    %v1873 = vpack.c.b16 %v1507, %v1501
    %v1874 = vpack.c.b16 %v1514, %v1508
    %v1875 = vpack.c.b16 %v1515, %v1509
    %v1876 = vpack.c.b16 %v1516, %v1510
    %v1877 = vpack.c.b16 %v1517, %v1511
    %v1878 = vpack.c.b16 %v1518, %v1512
    %v1879 = vpack.c.b16 %v1519, %v1513
    %v1880 = vpack.c.b16 %v1526, %v1520
    %v1881 = vpack.c.b16 %v1527, %v1521
    %v1882 = vpack.c.b16 %v1528, %v1522
    %v1883 = vpack.c.b16 %v1529, %v1523
    %v1884 = vpack.c.b16 %v1530, %v1524
    %v1885 = vpack.c.b16 %v1531, %v1525
    %v1886 = vpack.c.b16 %v1538, %v1532
    %v1887 = vpack.c.b16 %v1539, %v1533
    %v1888 = vpack.c.b16 %v1540, %v1534
    %v1889 = vpack.c.b16 %v1541, %v1535
    %v1890 = vpack.c.b16 %v1542, %v1536
    %v1891 = vpack.c.b16 %v1543, %v1537
    %v1892 = vpack.c.b16 %v1550, %v1544
    %v1893 = vpack.c.b16 %v1551, %v1545
    %v1894 = vpack.c.b16 %v1552, %v1546
    %v1895 = vpack.c.b16 %v1553, %v1547
    %v1896 = vpack.c.b16 %v1554, %v1548
    %v1897 = vpack.c.b16 %v1555, %v1549
    %v1898 = vpack.c.b16 %v1562, %v1556
    %v1899 = vpack.c.b16 %v1563, %v1557
    %v1900 = vpack.c.b16 %v1564, %v1558
    %v1901 = vpack.c.b16 %v1565, %v1559
    %v1902 = vpack.c.b16 %v1566, %v1560
    %v1903 = vpack.c.b16 %v1567, %v1561
    %v1904 = vpack.c.b16 %v1574, %v1568
    %v1905 = vpack.c.b16 %v1575, %v1569
    %v1906 = vpack.c.b16 %v1576, %v1570
    %v1907 = vpack.c.b16 %v1577, %v1571
    %v1908 = vpack.c.b16 %v1578, %v1572
    %v1909 = vpack.c.b16 %v1579, %v1573
    %v1910 = vpack.c.b16 %v1586, %v1580
    %v1911 = vpack.c.b16 %v1587, %v1581
    %v1912 = vpack.c.b16 %v1588, %v1582
    %v1913 = vpack.c.b16 %v1589, %v1583
    %v1914 = vpack.c.b16 %v1590, %v1584
    %v1915 = vpack.c.b16 %v1591, %v1585
    %v1916 = vpack.c.b16 %v1598, %v1592
    %v1917 = vpack.c.b16 %v1599, %v1593
    %v1918 = vpack.c.b16 %v1600, %v1594
    %v1919 = vpack.c.b16 %v1601, %v1595
    %v1920 = vpack.c.b16 %v1602, %v1596
    %v1921 = vpack.c.b16 %v1603, %v1597
    %v1922 = vpack.c.b16 %v1610, %v1604
    %v1923 = vpack.c.b16 %v1611, %v1605
    %v1924 = vpack.c.b16 %v1612, %v1606
    %v1925 = vpack.c.b16 %v1613, %v1607
    %v1926 = vpack.c.b16 %v1614, %v1608
    %v1927 = vpack.c.b16 %v1615, %v1609
    %v1928 = vpack.c.b16 %v1622, %v1616
    %v1929 = vpack.c.b16 %v1623, %v1617
    %v1930 = vpack.c.b16 %v1624, %v1618
    %v1931 = vpack.c.b16 %v1625, %v1619
    %v1932 = vpack.c.b16 %v1626, %v1620
    %v1933 = vpack.c.b16 %v1627, %v1621
    %v1934 = vpack.c.b16 %v1634, %v1628
    %v1935 = vpack.c.b16 %v1635, %v1629
    %v1936 = vpack.c.b16 %v1636, %v1630
    %v1937 = vpack.c.b16 %v1637, %v1631
    %v1938 = vpack.c.b16 %v1638, %v1632
    %v1939 = vpack.c.b16 %v1639, %v1633
    %v1940 = vpack.c.b16 %v1646, %v1640
    %v1941 = vpack.c.b16 %v1647, %v1641
    %v1942 = vpack.c.b16 %v1648, %v1642
    %v1943 = vpack.c.b16 %v1649, %v1643
    %v1944 = vpack.c.b16 %v1650, %v1644
    %v1945 = vpack.c.b16 %v1651, %v1645
    %v1946 = vpack.c.b16 %v1658, %v1652
    %v1947 = vpack.c.b16 %v1659, %v1653
    %v1948 = vpack.c.b16 %v1660, %v1654
    %v1949 = vpack.c.b16 %v1661, %v1655
    %v1950 = vpack.c.b16 %v1662, %v1656
    %v1951 = vpack.c.b16 %v1663, %v1657
    %v1952 = vpack.c.b16 %v1670, %v1664
    %v1953 = vpack.c.b16 %v1671, %v1665
    %v1954 = vpack.c.b16 %v1672, %v1666
    %v1955 = vpack.c.b16 %v1673, %v1667
    %v1956 = vpack.c.b16 %v1674, %v1668
    %v1957 = vpack.c.b16 %v1675, %v1669
    %v1958 = vpack.c.b16 %v1682, %v1676
    %v1959 = vpack.c.b16 %v1683, %v1677
    %v1960 = vpack.c.b16 %v1684, %v1678
    %v1961 = vpack.c.b16 %v1685, %v1679
    %v1962 = vpack.c.b16 %v1686, %v1680
    %v1963 = vpack.c.b16 %v1687, %v1681
    %v1964 = vpack.c.b16 %v1694, %v1688
    %v1965 = vpack.c.b16 %v1695, %v1689
    %v1966 = vpack.c.b16 %v1696, %v1690
    %v1967 = vpack.c.b16 %v1697, %v1691
    %v1968 = vpack.c.b16 %v1698, %v1692
    %v1969 = vpack.c.b16 %v1699, %v1693
    %v1970 = vpack.c.b16 %v1706, %v1700
    %v1971 = vpack.c.b16 %v1707, %v1701
    %v1972 = vpack.c.b16 %v1708, %v1702
    %v1973 = vpack.c.b16 %v1709, %v1703
    %v1974 = vpack.c.b16 %v1710, %v1704
    %v1975 = vpack.c.b16 %v1711, %v1705
    %v1976 = vpack.c.b16 %v1718, %v1712
    %v1977 = vpack.c.b16 %v1719, %v1713
    %v1978 = vpack.c.b16 %v1720, %v1714
    %v1979 = vpack.c.b16 %v1721, %v1715
    %v1980 = vpack.c.b16 %v1722, %v1716
    %v1981 = vpack.c.b16 %v1723, %v1717
    %v1982 = vpack.c.b16 %v1730, %v1724
    %v1983 = vpack.c.b16 %v1731, %v1725
    %v1984 = vpack.c.b16 %v1732, %v1726
    %v1985 = vpack.c.b16 %v1733, %v1727
    %v1986 = vpack.c.b16 %v1734, %v1728
    %v1987 = vpack.c.b16 %v1735, %v1729
    %v1988 = vpack.c.b16 %v1742, %v1736
    %v1989 = vpack.c.b16 %v1743, %v1737
    %v1990 = vpack.c.b16 %v1744, %v1738
    %v1991 = vpack.c.b16 %v1745, %v1739
    %v1992 = vpack.c.b16 %v1746, %v1740
    %v1993 = vpack.c.b16 %v1747, %v1741
    %v1994 = vpack.c.b16 %v1754, %v1748
    %v1995 = vpack.c.b16 %v1755, %v1749
    %v1996 = vpack.c.b16 %v1756, %v1750
    %v1997 = vpack.c.b16 %v1757, %v1751
    %v1998 = vpack.c.b16 %v1758, %v1752
    %v1999 = vpack.c.b16 %v1759, %v1753
    %v2000 = vpack.c.b16 %v1766, %v1760
    %v2001 = vpack.c.b16 %v1767, %v1761
    %v2002 = vpack.c.b16 %v1768, %v1762
    %v2003 = vpack.c.b16 %v1769, %v1763
    %v2004 = vpack.c.b16 %v1770, %v1764
    %v2005 = vpack.c.b16 %v1771, %v1765
    %v2006 = vpack.c.b16 %v1778, %v1772
    %v2007 = vpack.c.b16 %v1779, %v1773
    %v2008 = vpack.c.b16 %v1780, %v1774
    %v2009 = vpack.c.b16 %v1781, %v1775
    %v2010 = vpack.c.b16 %v1782, %v1776
    %v2011 = vpack.c.b16 %v1783, %v1777
    %v2012 = vpack.c.b16 %v1790, %v1784
    %v2013 = vpack.c.b16 %v1791, %v1785
    %v2014 = vpack.c.b16 %v1792, %v1786
    %v2015 = vpack.c.b16 %v1793, %v1787
    %v2016 = vpack.c.b16 %v1794, %v1788
    %v2017 = vpack.c.b16 %v1795, %v1789
    %v2018 = vpack.c.b16 %v1802, %v1796
    %v2019 = vpack.c.b16 %v1803, %v1797
    %v2020 = vpack.c.b16 %v1804, %v1798
    %v2021 = vpack.c.b16 %v1805, %v1799
    %v2022 = vpack.c.b16 %v1806, %v1800
    %v2023 = vpack.c.b16 %v1807, %v1801
    %v2024 = vpack.c.b16 %v1814, %v1808
    %v2025 = vpack.c.b16 %v1815, %v1809
    %v2026 = vpack.c.b16 %v1816, %v1810
    %v2027 = vpack.c.b16 %v1817, %v1811
    %v2028 = vpack.c.b16 %v1818, %v1812
    %v2029 = vpack.c.b16 %v1819, %v1813
    %v2030 = vpack.c.b16 %v1826, %v1820
    %v2031 = vpack.c.b16 %v1827, %v1821
    %v2032 = vpack.c.b16 %v1828, %v1822
    %v2033 = vpack.c.b16 %v1829, %v1823
    %v2034 = vpack.c.b16 %v1830, %v1824
    %v2035 = vpack.c.b16 %v1831, %v1825
    %v2036 = vpack.c.b16 %v1838, %v1832
    %v2037 = vpack.c.b16 %v1839, %v1833
    %v2038 = vpack.c.b16 %v1840, %v1834
    %v2039 = vpack.c.b16 %v1841, %v1835
    %v2040 = vpack.c.b16 %v1842, %v1836
    %v2041 = vpack.c.b16 %v1843, %v1837
    %v2042 = vpack.c.b16 %v1850, %v1844
    %v2043 = vpack.c.b16 %v1851, %v1845
    %v2044 = vpack.c.b16 %v1852, %v1846
    %v2045 = vpack.c.b16 %v1853, %v1847
    %v2046 = vpack.c.b16 %v1854, %v1848
    %v2047 = vpack.c.b16 %v1855, %v1849
    %2240 = vmatprep.subr.bf16.mxu0 %v1857
    %2241 = vmatpush1.bf16.msra.mxu0 %v1856
    %2242 = vmatprep.subr.bf16.mxu0 %v1863
    %2243 = vmatpush1.bf16.msra.mxu0 %v1862
    %2244 = vmatprep.subr.bf16.mxu0 %v1869
    %2245 = vmatpush1.bf16.msra.mxu0 %v1868
    %2246 = vmatprep.subr.bf16.mxu0 %v1875
    %2247 = vmatpush1.bf16.msra.mxu0 %v1874
    %2248 = vmatprep.subr.bf16.mxu0 %v1881
    %2249 = vmatpush1.bf16.msra.mxu0 %v1880
    %2250 = vmatprep.subr.bf16.mxu0 %v1887
    %2251 = vmatpush1.bf16.msra.mxu0 %v1886
    %2252 = vmatprep.subr.bf16.mxu0 %v1893
    %2253 = vmatpush1.bf16.msra.mxu0 %v1892
    %2254 = vmatprep.subr.bf16.mxu0 %v1899
    %2255 = vmatpush1.bf16.msra.mxu0 %v1898
    %2256 = vmatprep.subr.bf16.mxu0 %v1905
    %2257 = vmatpush1.bf16.msra.mxu0 %v1904
    %2258 = vmatprep.subr.bf16.mxu0 %v1911
    %2259 = vmatpush1.bf16.msra.mxu0 %v1910
    %2260 = vmatprep.subr.bf16.mxu0 %v1917
    %2261 = vmatpush1.bf16.msra.mxu0 %v1916
    %2262 = vmatprep.subr.bf16.mxu0 %v1923
    %2263 = vmatpush1.bf16.msra.mxu0 %v1922
    %2264 = vmatprep.subr.bf16.mxu0 %v1929
    %2265 = vmatpush1.bf16.msra.mxu0 %v1928
    %2266 = vmatprep.subr.bf16.mxu0 %v1935
    %2267 = vmatpush1.bf16.msra.mxu0 %v1934
    %2268 = vmatprep.subr.bf16.mxu0 %v1941
    %2269 = vmatpush1.bf16.msra.mxu0 %v1940
    %2270 = vmatprep.subr.bf16.mxu0 %v1947
    %2271 = vmatpush1.bf16.msra.mxu0 %v1946
    %2272 = vmatprep.mubr.bf16.mxu0 %v994
    %2273 = vmatmul.mubr.bf16.gmra.mrb[0].mxu0 %v993
    %v2274 = vpop.f32.mrb[0].mxu0
    %v2275 = vadd.f32 %v1253, %v2274
    %v2276 = vpop.f32.mrb[0].mxu0
    %v2277 = vadd.f32 %v1257, %v2276
    %v2278 = vpop.f32.mrb[0].mxu0
    %v2279 = vadd.f32 %v1253, %v2278
    %v2280 = vpop.f32.mrb[0].mxu0
    %v2281 = vadd.f32 %v1257, %v2280
    %2282 = vmatprep.mubr.bf16.mxu0 %v998
    %2283 = vmatmul.mubr.bf16.gmra.mrb[0].mxu0 %v997
    %v2284 = vpop.f32.mrb[0].mxu0
    %v2285 = vadd.f32 %v1253, %v2284
    %v2286 = vpop.f32.mrb[0].mxu0
    %v2287 = vadd.f32 %v1257, %v2286
    %v2288 = vpop.f32.mrb[0].mxu0
    %v2289 = vadd.f32 %v1253, %v2288
    %v2290 = vpop.f32.mrb[0].mxu0
    %v2291 = vadd.f32 %v1257, %v2290
    %2292 = vmatprep.mubr.bf16.mxu0 %v1002
    %2293 = vmatmul.mubr.bf16.gmra.mrb[0].mxu0 %v1001
    %v2294 = vpop.f32.mrb[0].mxu0
    %v2295 = vadd.f32 %v1253, %v2294
    %v2296 = vpop.f32.mrb[0].mxu0
    %v2297 = vadd.f32 %v1257, %v2296
    %v2298 = vpop.f32.mrb[0].mxu0
    %v2299 = vadd.f32 %v1253, %v2298
    %v2300 = vpop.f32.mrb[0].mxu0
    %v2301 = vadd.f32 %v1257, %v2300
    %2302 = vmatprep.mubr.bf16.mxu0 %v1006
    %2303 = vmatmul.mubr.bf16.gmra.mrb[0].mxu0 %v1005
    %v2304 = vpop.f32.mrb[0].mxu0
    %v2305 = vadd.f32 %v1253, %v2304
    %v2306 = vpop.f32.mrb[0].mxu0
    %v2307 = vadd.f32 %v1257, %v2306
    %v2308 = vpop.f32.mrb[0].mxu0
    %v2309 = vadd.f32 %v1253, %v2308
    %v2310 = vpop.f32.mrb[0].mxu0
    %v2311 = vadd.f32 %v1257, %v2310
    %2312 = vmatprep.mubr.bf16.mxu0 %v1010
    %2313 = vmatmul.mubr.bf16.gmra.mrb[0].mxu0 %v1009
    %v2314 = vpop.f32.mrb[0].mxu0
    %v2315 = vadd.f32 %v1253, %v2314
    %v2316 = vpop.f32.mrb[0].mxu0
    %v2317 = vadd.f32 %v1257, %v2316
    %v2318 = vpop.f32.mrb[0].mxu0
    %v2319 = vadd.f32 %v1253, %v2318
    %v2320 = vpop.f32.mrb[0].mxu0
    %v2321 = vadd.f32 %v1257, %v2320
    %2322 = vmatprep.mubr.bf16.mxu0 %v1014
    %2323 = vmatmul.mubr.bf16.gmra.mrb[0].mxu0 %v1013
    %v2324 = vpop.f32.mrb[0].mxu0
    %v2325 = vadd.f32 %v1253, %v2324
    %v2326 = vpop.f32.mrb[0].mxu0
    %v2327 = vadd.f32 %v1257, %v2326
    %v2328 = vpop.f32.mrb[0].mxu0
    %v2329 = vadd.f32 %v1253, %v2328
    %v2330 = vpop.f32.mrb[0].mxu0
    %v2331 = vadd.f32 %v1257, %v2330
    %2332 = vmatprep.mubr.bf16.mxu0 %v1018
    %2333 = vmatmul.mubr.bf16.gmra.mrb[0].mxu0 %v1017
    %v2334 = vpop.f32.mrb[0].mxu0
    %v2335 = vadd.f32 %v1253, %v2334
    %v2336 = vpop.f32.mrb[0].mxu0
    %v2337 = vadd.f32 %v1257, %v2336
    %v2338 = vpop.f32.mrb[0].mxu0
    %v2339 = vadd.f32 %v1253, %v2338
    %v2340 = vpop.f32.mrb[0].mxu0
    %v2341 = vadd.f32 %v1257, %v2340
    %2342 = vmatprep.mubr.bf16.mxu0 %v1022
    %2343 = vmatmul.mubr.bf16.gmra.mrb[0].mxu0 %v1021
    %v2344 = vpop.f32.mrb[0].mxu0
    %v2345 = vadd.f32 %v1253, %v2344
    %v2346 = vpop.f32.mrb[0].mxu0
    %v2347 = vadd.f32 %v1257, %v2346
    %v2348 = vpop.f32.mrb[0].mxu0
    %v2349 = vadd.f32 %v1253, %v2348
    %v2350 = vpop.f32.mrb[0].mxu0
    %v2351 = vadd.f32 %v1257, %v2350
    %2352 = vmatprep.mubr.bf16.mxu0 %v1026
    %2353 = vmatmul.mubr.bf16.gmra.mrb[0].mxu0 %v1025
    %v2354 = vpop.f32.mrb[0].mxu0
    %v2355 = vadd.f32 %v1253, %v2354
    %v2356 = vpop.f32.mrb[0].mxu0
    %v2357 = vadd.f32 %v1257, %v2356
    %v2358 = vpop.f32.mrb[0].mxu0
    %v2359 = vadd.f32 %v1253, %v2358
    %v2360 = vpop.f32.mrb[0].mxu0
    %v2361 = vadd.f32 %v1257, %v2360
    %2362 = vmatprep.mubr.bf16.mxu0 %v1030
    %2363 = vmatmul.mubr.bf16.gmra.mrb[0].mxu0 %v1029
    %v2364 = vpop.f32.mrb[0].mxu0
    %v2365 = vadd.f32 %v1253, %v2364
    %v2366 = vpop.f32.mrb[0].mxu0
    %v2367 = vadd.f32 %v1257, %v2366
    %v2368 = vpop.f32.mrb[0].mxu0
    %v2369 = vadd.f32 %v1253, %v2368
    %v2370 = vpop.f32.mrb[0].mxu0
    %v2371 = vadd.f32 %v1257, %v2370
    %2372 = vmatprep.mubr.bf16.mxu0 %v1034
    %2373 = vmatmul.mubr.bf16.gmra.mrb[0].mxu0 %v1033
    %v2374 = vpop.f32.mrb[0].mxu0
    %v2375 = vadd.f32 %v1253, %v2374
    %v2376 = vpop.f32.mrb[0].mxu0
    %v2377 = vadd.f32 %v1257, %v2376
    %v2378 = vpop.f32.mrb[0].mxu0
    %v2379 = vadd.f32 %v1253, %v2378
    %v2380 = vpop.f32.mrb[0].mxu0
    %v2381 = vadd.f32 %v1257, %v2380
    %2382 = vmatprep.mubr.bf16.mxu0 %v1038
    %2383 = vmatmul.mubr.bf16.gmra.mrb[0].mxu0 %v1037
    %v2384 = vpop.f32.mrb[0].mxu0
    %v2385 = vadd.f32 %v1253, %v2384
    %v2386 = vpop.f32.mrb[0].mxu0
    %v2387 = vadd.f32 %v1257, %v2386
    %v2388 = vpop.f32.mrb[0].mxu0
    %v2389 = vadd.f32 %v1253, %v2388
    %v2390 = vpop.f32.mrb[0].mxu0
    %v2391 = vadd.f32 %v1257, %v2390
    %2392 = vmatprep.mubr.bf16.mxu0 %v1042
    %2393 = vmatmul.mubr.bf16.gmra.mrb[0].mxu0 %v1041
    %v2394 = vpop.f32.mrb[0].mxu0
    %v2395 = vadd.f32 %v1253, %v2394
    %v2396 = vpop.f32.mrb[0].mxu0
    %v2397 = vadd.f32 %v1257, %v2396
    %v2398 = vpop.f32.mrb[0].mxu0
    %v2399 = vadd.f32 %v1253, %v2398
    %v2400 = vpop.f32.mrb[0].mxu0
    %v2401 = vadd.f32 %v1257, %v2400
    %2402 = vmatprep.mubr.bf16.mxu0 %v1046
    %2403 = vmatmul.mubr.bf16.gmra.mrb[0].mxu0 %v1045
    %v2404 = vpop.f32.mrb[0].mxu0
    %v2405 = vadd.f32 %v1253, %v2404
    %v2406 = vpop.f32.mrb[0].mxu0
    %v2407 = vadd.f32 %v1257, %v2406
    %v2408 = vpop.f32.mrb[0].mxu0
    %v2409 = vadd.f32 %v1253, %v2408
    %v2410 = vpop.f32.mrb[0].mxu0
    %v2411 = vadd.f32 %v1257, %v2410
    %2412 = vmatprep.mubr.bf16.mxu0 %v1050
    %2413 = vmatmul.mubr.bf16.gmra.mrb[0].mxu0 %v1049
    %v2414 = vpop.f32.mrb[0].mxu0
    %v2415 = vadd.f32 %v1253, %v2414
    %v2416 = vpop.f32.mrb[0].mxu0
    %v2417 = vadd.f32 %v1257, %v2416
    %v2418 = vpop.f32.mrb[0].mxu0
    %v2419 = vadd.f32 %v1253, %v2418
    %v2420 = vpop.f32.mrb[0].mxu0
    %v2421 = vadd.f32 %v1257, %v2420
    %2422 = vmatprep.mubr.bf16.mxu0 %v1054
    %2423 = vmatmul.mubr.bf16.gmra.mrb[0].mxu0 %v1053
    %v2424 = vpop.f32.mrb[0].mxu0
    %v2425 = vadd.f32 %v1253, %v2424
    %v2426 = vpop.f32.mrb[0].mxu0
    %v2427 = vadd.f32 %v1257, %v2426
    %v2428 = vpop.f32.mrb[0].mxu0
    %v2429 = vadd.f32 %v1253, %v2428
    %v2430 = vpop.f32.mrb[0].mxu0
    %v2431 = vadd.f32 %v1257, %v2430
    %2432 = vdwg.mxu0
    %2433 = vmatprep.subr.bf16.mxu0 %v1953
    %2434 = vmatpush1.bf16.msra.mxu0 %v1952
    %2435 = vmatprep.subr.bf16.mxu0 %v1959
    %2436 = vmatpush1.bf16.msra.mxu0 %v1958
    %2437 = vmatprep.subr.bf16.mxu0 %v1965
    %2438 = vmatpush1.bf16.msra.mxu0 %v1964
    %2439 = vmatprep.subr.bf16.mxu0 %v1971
    %2440 = vmatpush1.bf16.msra.mxu0 %v1970
    %2441 = vmatprep.subr.bf16.mxu0 %v1977
    %2442 = vmatpush1.bf16.msra.mxu0 %v1976
    %2443 = vmatprep.subr.bf16.mxu0 %v1983
    %2444 = vmatpush1.bf16.msra.mxu0 %v1982
    %2445 = vmatprep.subr.bf16.mxu0 %v1989
    %2446 = vmatpush1.bf16.msra.mxu0 %v1988
    %2447 = vmatprep.subr.bf16.mxu0 %v1995
    %2448 = vmatpush1.bf16.msra.mxu0 %v1994
    %2449 = vmatprep.subr.bf16.mxu0 %v2001
    %2450 = vmatpush1.bf16.msra.mxu0 %v2000
    %2451 = vmatprep.subr.bf16.mxu0 %v2007
    %2452 = vmatpush1.bf16.msra.mxu0 %v2006
    %2453 = vmatprep.subr.bf16.mxu0 %v2013
    %2454 = vmatpush1.bf16.msra.mxu0 %v2012
    %2455 = vmatprep.subr.bf16.mxu0 %v2019
    %2456 = vmatpush1.bf16.msra.mxu0 %v2018
    %2457 = vmatprep.subr.bf16.mxu0 %v2025
    %2458 = vmatpush1.bf16.msra.mxu0 %v2024
    %2459 = vmatprep.subr.bf16.mxu0 %v2031
    %2460 = vmatpush1.bf16.msra.mxu0 %v2030
    %2461 = vmatprep.subr.bf16.mxu0 %v2037
    %2462 = vmatpush1.bf16.msra.mxu0 %v2036
    %2463 = vmatprep.subr.bf16.mxu0 %v2043
    %2464 = vmatpush1.bf16.msra.mxu0 %v2042
    %2465 = vmatprep.mubr.bf16.mxu0 %v996
    %2466 = vmatmul.mubr.bf16.gmra.mrb[0].mxu0 %v995
    %v2467 = vpop.f32.mrb[0].mxu0
    %v2468 = vadd.f32 %v2275, %v2467
    %v2469 = vpop.f32.mrb[0].mxu0
    %v2470 = vadd.f32 %v2277, %v2469
    %v2471 = vpop.f32.mrb[0].mxu0
    %v2472 = vadd.f32 %v2279, %v2471
    %v2473 = vpop.f32.mrb[0].mxu0
    %v2474 = vadd.f32 %v2281, %v2473
    %2475 = vmatprep.mubr.bf16.mxu0 %v1000
    %2476 = vmatmul.mubr.bf16.gmra.mrb[0].mxu0 %v999
    %v2477 = vpop.f32.mrb[0].mxu0
    %v2478 = vadd.f32 %v2285, %v2477
    %v2479 = vpop.f32.mrb[0].mxu0
    %v2480 = vadd.f32 %v2287, %v2479
    %v2481 = vpop.f32.mrb[0].mxu0
    %v2482 = vadd.f32 %v2289, %v2481
    %v2483 = vpop.f32.mrb[0].mxu0
    %v2484 = vadd.f32 %v2291, %v2483
    %2485 = vmatprep.mubr.bf16.mxu0 %v1004
    %2486 = vmatmul.mubr.bf16.gmra.mrb[0].mxu0 %v1003
    %v2487 = vpop.f32.mrb[0].mxu0
    %v2488 = vadd.f32 %v2295, %v2487
    %v2489 = vpop.f32.mrb[0].mxu0
    %v2490 = vadd.f32 %v2297, %v2489
    %v2491 = vpop.f32.mrb[0].mxu0
    %v2492 = vadd.f32 %v2299, %v2491
    %v2493 = vpop.f32.mrb[0].mxu0
    %v2494 = vadd.f32 %v2301, %v2493
    %2495 = vmatprep.mubr.bf16.mxu0 %v1008
    %2496 = vmatmul.mubr.bf16.gmra.mrb[0].mxu0 %v1007
    %v2497 = vpop.f32.mrb[0].mxu0
    %v2498 = vadd.f32 %v2305, %v2497
    %v2499 = vpop.f32.mrb[0].mxu0
    %v2500 = vadd.f32 %v2307, %v2499
    %v2501 = vpop.f32.mrb[0].mxu0
    %v2502 = vadd.f32 %v2309, %v2501
    %v2503 = vpop.f32.mrb[0].mxu0
    %v2504 = vadd.f32 %v2311, %v2503
    %2505 = vmatprep.mubr.bf16.mxu0 %v1012
    %2506 = vmatmul.mubr.bf16.gmra.mrb[0].mxu0 %v1011
    %v2507 = vpop.f32.mrb[0].mxu0
    %v2508 = vadd.f32 %v2315, %v2507
    %v2509 = vpop.f32.mrb[0].mxu0
    %v2510 = vadd.f32 %v2317, %v2509
    %v2511 = vpop.f32.mrb[0].mxu0
    %v2512 = vadd.f32 %v2319, %v2511
    %v2513 = vpop.f32.mrb[0].mxu0
    %v2514 = vadd.f32 %v2321, %v2513
    %2515 = vmatprep.mubr.bf16.mxu0 %v1016
    %2516 = vmatmul.mubr.bf16.gmra.mrb[0].mxu0 %v1015
    %v2517 = vpop.f32.mrb[0].mxu0
    %v2518 = vadd.f32 %v2325, %v2517
    %v2519 = vpop.f32.mrb[0].mxu0
    %v2520 = vadd.f32 %v2327, %v2519
    %v2521 = vpop.f32.mrb[0].mxu0
    %v2522 = vadd.f32 %v2329, %v2521
    %v2523 = vpop.f32.mrb[0].mxu0
    %v2524 = vadd.f32 %v2331, %v2523
    %2525 = vmatprep.mubr.bf16.mxu0 %v1020
    %2526 = vmatmul.mubr.bf16.gmra.mrb[0].mxu0 %v1019
    %v2527 = vpop.f32.mrb[0].mxu0
    %v2528 = vadd.f32 %v2335, %v2527
    %v2529 = vpop.f32.mrb[0].mxu0
    %v2530 = vadd.f32 %v2337, %v2529
    %v2531 = vpop.f32.mrb[0].mxu0
    %v2532 = vadd.f32 %v2339, %v2531
    %v2533 = vpop.f32.mrb[0].mxu0
    %v2534 = vadd.f32 %v2341, %v2533
    %2535 = vmatprep.mubr.bf16.mxu0 %v1024
    %2536 = vmatmul.mubr.bf16.gmra.mrb[0].mxu0 %v1023
    %v2537 = vpop.f32.mrb[0].mxu0
    %v2538 = vadd.f32 %v2345, %v2537
    %v2539 = vpop.f32.mrb[0].mxu0
    %v2540 = vadd.f32 %v2347, %v2539
    %v2541 = vpop.f32.mrb[0].mxu0
    %v2542 = vadd.f32 %v2349, %v2541
    %v2543 = vpop.f32.mrb[0].mxu0
    %v2544 = vadd.f32 %v2351, %v2543
    %2545 = vmatprep.mubr.bf16.mxu0 %v1028
    %2546 = vmatmul.mubr.bf16.gmra.mrb[0].mxu0 %v1027
    %v2547 = vpop.f32.mrb[0].mxu0
    %v2548 = vadd.f32 %v2355, %v2547
    %v2549 = vpop.f32.mrb[0].mxu0
    %v2550 = vadd.f32 %v2357, %v2549
    %v2551 = vpop.f32.mrb[0].mxu0
    %v2552 = vadd.f32 %v2359, %v2551
    %v2553 = vpop.f32.mrb[0].mxu0
    %v2554 = vadd.f32 %v2361, %v2553
    %2555 = vmatprep.mubr.bf16.mxu0 %v1032
    %2556 = vmatmul.mubr.bf16.gmra.mrb[0].mxu0 %v1031
    %v2557 = vpop.f32.mrb[0].mxu0
    %v2558 = vadd.f32 %v2365, %v2557
    %v2559 = vpop.f32.mrb[0].mxu0
    %v2560 = vadd.f32 %v2367, %v2559
    %v2561 = vpop.f32.mrb[0].mxu0
    %v2562 = vadd.f32 %v2369, %v2561
    %v2563 = vpop.f32.mrb[0].mxu0
    %v2564 = vadd.f32 %v2371, %v2563
    %2565 = vmatprep.mubr.bf16.mxu0 %v1036
    %2566 = vmatmul.mubr.bf16.gmra.mrb[0].mxu0 %v1035
    %v2567 = vpop.f32.mrb[0].mxu0
    %v2568 = vadd.f32 %v2375, %v2567
    %v2569 = vpop.f32.mrb[0].mxu0
    %v2570 = vadd.f32 %v2377, %v2569
    %v2571 = vpop.f32.mrb[0].mxu0
    %v2572 = vadd.f32 %v2379, %v2571
    %v2573 = vpop.f32.mrb[0].mxu0
    %v2574 = vadd.f32 %v2381, %v2573
    %2575 = vmatprep.mubr.bf16.mxu0 %v1040
    %2576 = vmatmul.mubr.bf16.gmra.mrb[0].mxu0 %v1039
    %v2577 = vpop.f32.mrb[0].mxu0
    %v2578 = vadd.f32 %v2385, %v2577
    %v2579 = vpop.f32.mrb[0].mxu0
    %v2580 = vadd.f32 %v2387, %v2579
    %v2581 = vpop.f32.mrb[0].mxu0
    %v2582 = vadd.f32 %v2389, %v2581
    %v2583 = vpop.f32.mrb[0].mxu0
    %v2584 = vadd.f32 %v2391, %v2583
    %2585 = vmatprep.mubr.bf16.mxu0 %v1044
    %2586 = vmatmul.mubr.bf16.gmra.mrb[0].mxu0 %v1043
    %v2587 = vpop.f32.mrb[0].mxu0
    %v2588 = vadd.f32 %v2395, %v2587
    %v2589 = vpop.f32.mrb[0].mxu0
    %v2590 = vadd.f32 %v2397, %v2589
    %v2591 = vpop.f32.mrb[0].mxu0
    %v2592 = vadd.f32 %v2399, %v2591
    %v2593 = vpop.f32.mrb[0].mxu0
    %v2594 = vadd.f32 %v2401, %v2593
    %2595 = vmatprep.mubr.bf16.mxu0 %v1048
    %2596 = vmatmul.mubr.bf16.gmra.mrb[0].mxu0 %v1047
    %v2597 = vpop.f32.mrb[0].mxu0
    %v2598 = vadd.f32 %v2405, %v2597
    %v2599 = vpop.f32.mrb[0].mxu0
    %v2600 = vadd.f32 %v2407, %v2599
    %v2601 = vpop.f32.mrb[0].mxu0
    %v2602 = vadd.f32 %v2409, %v2601
    %v2603 = vpop.f32.mrb[0].mxu0
    %v2604 = vadd.f32 %v2411, %v2603
    %2605 = vmatprep.mubr.bf16.mxu0 %v1052
    %2606 = vmatmul.mubr.bf16.gmra.mrb[0].mxu0 %v1051
    %v2607 = vpop.f32.mrb[0].mxu0
    %v2608 = vadd.f32 %v2415, %v2607
    %v2609 = vpop.f32.mrb[0].mxu0
    %v2610 = vadd.f32 %v2417, %v2609
    %v2611 = vpop.f32.mrb[0].mxu0
    %v2612 = vadd.f32 %v2419, %v2611
    %v2613 = vpop.f32.mrb[0].mxu0
    %v2614 = vadd.f32 %v2421, %v2613
    %2615 = vmatprep.mubr.bf16.mxu0 %v1056
    %2616 = vmatmul.mubr.bf16.gmra.mrb[0].mxu0 %v1055
    %v2617 = vpop.f32.mrb[0].mxu0
    %v2618 = vadd.f32 %v2425, %v2617
    %v2619 = vpop.f32.mrb[0].mxu0
    %v2620 = vadd.f32 %v2427, %v2619
    %v2621 = vpop.f32.mrb[0].mxu0
    %v2622 = vadd.f32 %v2429, %v2621
    %v2623 = vpop.f32.mrb[0].mxu0
    %v2624 = vadd.f32 %v2431, %v2623
    %2625 = vdwg.mxu0
    %2626 = vmatprep.subr.bf16.mxu0 %v1859
    %2627 = vmatpush1.bf16.msra.mxu0 %v1858
    %2628 = vmatprep.subr.bf16.mxu0 %v1865
    %2629 = vmatpush1.bf16.msra.mxu0 %v1864
    %2630 = vmatprep.subr.bf16.mxu0 %v1871
    %2631 = vmatpush1.bf16.msra.mxu0 %v1870
    %2632 = vmatprep.subr.bf16.mxu0 %v1877
    %2633 = vmatpush1.bf16.msra.mxu0 %v1876
    %2634 = vmatprep.subr.bf16.mxu0 %v1883
    %2635 = vmatpush1.bf16.msra.mxu0 %v1882
    %2636 = vmatprep.subr.bf16.mxu0 %v1889
    %2637 = vmatpush1.bf16.msra.mxu0 %v1888
    %2638 = vmatprep.subr.bf16.mxu0 %v1895
    %2639 = vmatpush1.bf16.msra.mxu0 %v1894
    %2640 = vmatprep.subr.bf16.mxu0 %v1901
    %2641 = vmatpush1.bf16.msra.mxu0 %v1900
    %2642 = vmatprep.subr.bf16.mxu0 %v1907
    %2643 = vmatpush1.bf16.msra.mxu0 %v1906
    %2644 = vmatprep.subr.bf16.mxu0 %v1913
    %2645 = vmatpush1.bf16.msra.mxu0 %v1912
    %2646 = vmatprep.subr.bf16.mxu0 %v1919
    %2647 = vmatpush1.bf16.msra.mxu0 %v1918
    %2648 = vmatprep.subr.bf16.mxu0 %v1925
    %2649 = vmatpush1.bf16.msra.mxu0 %v1924
    %2650 = vmatprep.subr.bf16.mxu0 %v1931
    %2651 = vmatpush1.bf16.msra.mxu0 %v1930
    %2652 = vmatprep.subr.bf16.mxu0 %v1937
    %2653 = vmatpush1.bf16.msra.mxu0 %v1936
    %2654 = vmatprep.subr.bf16.mxu0 %v1943
    %2655 = vmatpush1.bf16.msra.mxu0 %v1942
    %2656 = vmatprep.subr.bf16.mxu0 %v1949
    %2657 = vmatpush1.bf16.msra.mxu0 %v1948
    %2658 = vmatprep.mubr.bf16.mxu0 %v994
    %2659 = vmatmul.mubr.bf16.gmra.mrb[0].mxu0 %v993
    %v2660 = vpop.f32.mrb[0].mxu0
    %v2661 = vadd.f32 %v1261, %v2660
    %v2662 = vpop.f32.mrb[0].mxu0
    %v2663 = vadd.f32 %v1265, %v2662
    %v2664 = vpop.f32.mrb[0].mxu0
    %v2665 = vadd.f32 %v1261, %v2664
    %v2666 = vpop.f32.mrb[0].mxu0
    %v2667 = vadd.f32 %v1265, %v2666
    %2668 = vmatprep.mubr.bf16.mxu0 %v998
    %2669 = vmatmul.mubr.bf16.gmra.mrb[0].mxu0 %v997
    %v2670 = vpop.f32.mrb[0].mxu0
    %v2671 = vadd.f32 %v1261, %v2670
    %v2672 = vpop.f32.mrb[0].mxu0
    %v2673 = vadd.f32 %v1265, %v2672
    %v2674 = vpop.f32.mrb[0].mxu0
    %v2675 = vadd.f32 %v1261, %v2674
    %v2676 = vpop.f32.mrb[0].mxu0
    %v2677 = vadd.f32 %v1265, %v2676
    %2678 = vmatprep.mubr.bf16.mxu0 %v1002
    %2679 = vmatmul.mubr.bf16.gmra.mrb[0].mxu0 %v1001
    %v2680 = vpop.f32.mrb[0].mxu0
    %v2681 = vadd.f32 %v1261, %v2680
    %v2682 = vpop.f32.mrb[0].mxu0
    %v2683 = vadd.f32 %v1265, %v2682
    %v2684 = vpop.f32.mrb[0].mxu0
    %v2685 = vadd.f32 %v1261, %v2684
    %v2686 = vpop.f32.mrb[0].mxu0
    %v2687 = vadd.f32 %v1265, %v2686
    %2688 = vmatprep.mubr.bf16.mxu0 %v1006
    %2689 = vmatmul.mubr.bf16.gmra.mrb[0].mxu0 %v1005
    %v2690 = vpop.f32.mrb[0].mxu0
    %v2691 = vadd.f32 %v1261, %v2690
    %v2692 = vpop.f32.mrb[0].mxu0
    %v2693 = vadd.f32 %v1265, %v2692
    %v2694 = vpop.f32.mrb[0].mxu0
    %v2695 = vadd.f32 %v1261, %v2694
    %v2696 = vpop.f32.mrb[0].mxu0
    %v2697 = vadd.f32 %v1265, %v2696
    %2698 = vmatprep.mubr.bf16.mxu0 %v1010
    %2699 = vmatmul.mubr.bf16.gmra.mrb[0].mxu0 %v1009
    %v2700 = vpop.f32.mrb[0].mxu0
    %v2701 = vadd.f32 %v1261, %v2700
    %v2702 = vpop.f32.mrb[0].mxu0
    %v2703 = vadd.f32 %v1265, %v2702
    %v2704 = vpop.f32.mrb[0].mxu0
    %v2705 = vadd.f32 %v1261, %v2704
    %v2706 = vpop.f32.mrb[0].mxu0
    %v2707 = vadd.f32 %v1265, %v2706
    %2708 = vmatprep.mubr.bf16.mxu0 %v1014
    %2709 = vmatmul.mubr.bf16.gmra.mrb[0].mxu0 %v1013
    %v2710 = vpop.f32.mrb[0].mxu0
    %v2711 = vadd.f32 %v1261, %v2710
    %v2712 = vpop.f32.mrb[0].mxu0
    %v2713 = vadd.f32 %v1265, %v2712
    %v2714 = vpop.f32.mrb[0].mxu0
    %v2715 = vadd.f32 %v1261, %v2714
    %v2716 = vpop.f32.mrb[0].mxu0
    %v2717 = vadd.f32 %v1265, %v2716
    %2718 = vmatprep.mubr.bf16.mxu0 %v1018
    %2719 = vmatmul.mubr.bf16.gmra.mrb[0].mxu0 %v1017
    %v2720 = vpop.f32.mrb[0].mxu0
    %v2721 = vadd.f32 %v1261, %v2720
    %v2722 = vpop.f32.mrb[0].mxu0
    %v2723 = vadd.f32 %v1265, %v2722
    %v2724 = vpop.f32.mrb[0].mxu0
    %v2725 = vadd.f32 %v1261, %v2724
    %v2726 = vpop.f32.mrb[0].mxu0
    %v2727 = vadd.f32 %v1265, %v2726
    %2728 = vmatprep.mubr.bf16.mxu0 %v1022
    %2729 = vmatmul.mubr.bf16.gmra.mrb[0].mxu0 %v1021
    %v2730 = vpop.f32.mrb[0].mxu0
    %v2731 = vadd.f32 %v1261, %v2730
    %v2732 = vpop.f32.mrb[0].mxu0
    %v2733 = vadd.f32 %v1265, %v2732
    %v2734 = vpop.f32.mrb[0].mxu0
    %v2735 = vadd.f32 %v1261, %v2734
    %v2736 = vpop.f32.mrb[0].mxu0
    %v2737 = vadd.f32 %v1265, %v2736
    %2738 = vmatprep.mubr.bf16.mxu0 %v1026
    %2739 = vmatmul.mubr.bf16.gmra.mrb[0].mxu0 %v1025
    %v2740 = vpop.f32.mrb[0].mxu0
    %v2741 = vadd.f32 %v1261, %v2740
    %v2742 = vpop.f32.mrb[0].mxu0
    %v2743 = vadd.f32 %v1265, %v2742
    %v2744 = vpop.f32.mrb[0].mxu0
    %v2745 = vadd.f32 %v1261, %v2744
    %v2746 = vpop.f32.mrb[0].mxu0
    %v2747 = vadd.f32 %v1265, %v2746
    %2748 = vmatprep.mubr.bf16.mxu0 %v1030
    %2749 = vmatmul.mubr.bf16.gmra.mrb[0].mxu0 %v1029
    %v2750 = vpop.f32.mrb[0].mxu0
    %v2751 = vadd.f32 %v1261, %v2750
    %v2752 = vpop.f32.mrb[0].mxu0
    %v2753 = vadd.f32 %v1265, %v2752
    %v2754 = vpop.f32.mrb[0].mxu0
    %v2755 = vadd.f32 %v1261, %v2754
    %v2756 = vpop.f32.mrb[0].mxu0
    %v2757 = vadd.f32 %v1265, %v2756
    %2758 = vmatprep.mubr.bf16.mxu0 %v1034
    %2759 = vmatmul.mubr.bf16.gmra.mrb[0].mxu0 %v1033
    %v2760 = vpop.f32.mrb[0].mxu0
    %v2761 = vadd.f32 %v1261, %v2760
    %v2762 = vpop.f32.mrb[0].mxu0
    %v2763 = vadd.f32 %v1265, %v2762
    %v2764 = vpop.f32.mrb[0].mxu0
    %v2765 = vadd.f32 %v1261, %v2764
    %v2766 = vpop.f32.mrb[0].mxu0
    %v2767 = vadd.f32 %v1265, %v2766
    %2768 = vmatprep.mubr.bf16.mxu0 %v1038
    %2769 = vmatmul.mubr.bf16.gmra.mrb[0].mxu0 %v1037
    %v2770 = vpop.f32.mrb[0].mxu0
    %v2771 = vadd.f32 %v1261, %v2770
    %v2772 = vpop.f32.mrb[0].mxu0
    %v2773 = vadd.f32 %v1265, %v2772
    %v2774 = vpop.f32.mrb[0].mxu0
    %v2775 = vadd.f32 %v1261, %v2774
    %v2776 = vpop.f32.mrb[0].mxu0
    %v2777 = vadd.f32 %v1265, %v2776
    %2778 = vmatprep.mubr.bf16.mxu0 %v1042
    %2779 = vmatmul.mubr.bf16.gmra.mrb[0].mxu0 %v1041
    %v2780 = vpop.f32.mrb[0].mxu0
    %v2781 = vadd.f32 %v1261, %v2780
    %v2782 = vpop.f32.mrb[0].mxu0
    %v2783 = vadd.f32 %v1265, %v2782
    %v2784 = vpop.f32.mrb[0].mxu0
    %v2785 = vadd.f32 %v1261, %v2784
    %v2786 = vpop.f32.mrb[0].mxu0
    %v2787 = vadd.f32 %v1265, %v2786
    %2788 = vmatprep.mubr.bf16.mxu0 %v1046
    %2789 = vmatmul.mubr.bf16.gmra.mrb[0].mxu0 %v1045
    %v2790 = vpop.f32.mrb[0].mxu0
    %v2791 = vadd.f32 %v1261, %v2790
    %v2792 = vpop.f32.mrb[0].mxu0
    %v2793 = vadd.f32 %v1265, %v2792
    %v2794 = vpop.f32.mrb[0].mxu0
    %v2795 = vadd.f32 %v1261, %v2794
    %v2796 = vpop.f32.mrb[0].mxu0
    %v2797 = vadd.f32 %v1265, %v2796
    %2798 = vmatprep.mubr.bf16.mxu0 %v1050
    %2799 = vmatmul.mubr.bf16.gmra.mrb[0].mxu0 %v1049
    %v2800 = vpop.f32.mrb[0].mxu0
    %v2801 = vadd.f32 %v1261, %v2800
    %v2802 = vpop.f32.mrb[0].mxu0
    %v2803 = vadd.f32 %v1265, %v2802
    %v2804 = vpop.f32.mrb[0].mxu0
    %v2805 = vadd.f32 %v1261, %v2804
    %v2806 = vpop.f32.mrb[0].mxu0
    %v2807 = vadd.f32 %v1265, %v2806
    %2808 = vmatprep.mubr.bf16.mxu0 %v1054
    %2809 = vmatmul.mubr.bf16.gmra.mrb[0].mxu0 %v1053
    %v2810 = vpop.f32.mrb[0].mxu0
    %v2811 = vadd.f32 %v1261, %v2810
    %v2812 = vpop.f32.mrb[0].mxu0
    %v2813 = vadd.f32 %v1265, %v2812
    %v2814 = vpop.f32.mrb[0].mxu0
    %v2815 = vadd.f32 %v1261, %v2814
    %v2816 = vpop.f32.mrb[0].mxu0
    %v2817 = vadd.f32 %v1265, %v2816
    %2818 = vdwg.mxu0
    %2819 = vmatprep.subr.bf16.mxu0 %v1955
    %2820 = vmatpush1.bf16.msra.mxu0 %v1954
    %2821 = vmatprep.subr.bf16.mxu0 %v1961
    %2822 = vmatpush1.bf16.msra.mxu0 %v1960
    %2823 = vmatprep.subr.bf16.mxu0 %v1967
    %2824 = vmatpush1.bf16.msra.mxu0 %v1966
    %2825 = vmatprep.subr.bf16.mxu0 %v1973
    %2826 = vmatpush1.bf16.msra.mxu0 %v1972
    %2827 = vmatprep.subr.bf16.mxu0 %v1979
    %2828 = vmatpush1.bf16.msra.mxu0 %v1978
    %2829 = vmatprep.subr.bf16.mxu0 %v1985
    %2830 = vmatpush1.bf16.msra.mxu0 %v1984
    %2831 = vmatprep.subr.bf16.mxu0 %v1991
    %2832 = vmatpush1.bf16.msra.mxu0 %v1990
    %2833 = vmatprep.subr.bf16.mxu0 %v1997
    %2834 = vmatpush1.bf16.msra.mxu0 %v1996
    %2835 = vmatprep.subr.bf16.mxu0 %v2003
    %2836 = vmatpush1.bf16.msra.mxu0 %v2002
    %2837 = vmatprep.subr.bf16.mxu0 %v2009
    %2838 = vmatpush1.bf16.msra.mxu0 %v2008
    %2839 = vmatprep.subr.bf16.mxu0 %v2015
    %2840 = vmatpush1.bf16.msra.mxu0 %v2014
    %2841 = vmatprep.subr.bf16.mxu0 %v2021
    %2842 = vmatpush1.bf16.msra.mxu0 %v2020
    %2843 = vmatprep.subr.bf16.mxu0 %v2027
    %2844 = vmatpush1.bf16.msra.mxu0 %v2026
    %2845 = vmatprep.subr.bf16.mxu0 %v2033
    %2846 = vmatpush1.bf16.msra.mxu0 %v2032
    %2847 = vmatprep.subr.bf16.mxu0 %v2039
    %2848 = vmatpush1.bf16.msra.mxu0 %v2038
    %2849 = vmatprep.subr.bf16.mxu0 %v2045
    %2850 = vmatpush1.bf16.msra.mxu0 %v2044
    %2851 = vmatprep.mubr.bf16.mxu0 %v996
    %2852 = vmatmul.mubr.bf16.gmra.mrb[0].mxu0 %v995
    %v2853 = vpop.f32.mrb[0].mxu0
    %v2854 = vadd.f32 %v2661, %v2853
    %v2855 = vpop.f32.mrb[0].mxu0
    %v2856 = vadd.f32 %v2663, %v2855
    %v2857 = vpop.f32.mrb[0].mxu0
    %v2858 = vadd.f32 %v2665, %v2857
    %v2859 = vpop.f32.mrb[0].mxu0
    %v2860 = vadd.f32 %v2667, %v2859
    %2861 = vmatprep.mubr.bf16.mxu0 %v1000
    %2862 = vmatmul.mubr.bf16.gmra.mrb[0].mxu0 %v999
    %v2863 = vpop.f32.mrb[0].mxu0
    %v2864 = vadd.f32 %v2671, %v2863
    %v2865 = vpop.f32.mrb[0].mxu0
    %v2866 = vadd.f32 %v2673, %v2865
    %v2867 = vpop.f32.mrb[0].mxu0
    %v2868 = vadd.f32 %v2675, %v2867
    %v2869 = vpop.f32.mrb[0].mxu0
    %v2870 = vadd.f32 %v2677, %v2869
    %2871 = vmatprep.mubr.bf16.mxu0 %v1004
    %2872 = vmatmul.mubr.bf16.gmra.mrb[0].mxu0 %v1003
    %v2873 = vpop.f32.mrb[0].mxu0
    %v2874 = vadd.f32 %v2681, %v2873
    %v2875 = vpop.f32.mrb[0].mxu0
    %v2876 = vadd.f32 %v2683, %v2875
    %v2877 = vpop.f32.mrb[0].mxu0
    %v2878 = vadd.f32 %v2685, %v2877
    %v2879 = vpop.f32.mrb[0].mxu0
    %v2880 = vadd.f32 %v2687, %v2879
    %2881 = vmatprep.mubr.bf16.mxu0 %v1008
    %2882 = vmatmul.mubr.bf16.gmra.mrb[0].mxu0 %v1007
    %v2883 = vpop.f32.mrb[0].mxu0
    %v2884 = vadd.f32 %v2691, %v2883
    %v2885 = vpop.f32.mrb[0].mxu0
    %v2886 = vadd.f32 %v2693, %v2885
    %v2887 = vpop.f32.mrb[0].mxu0
    %v2888 = vadd.f32 %v2695, %v2887
    %v2889 = vpop.f32.mrb[0].mxu0
    %v2890 = vadd.f32 %v2697, %v2889
    %2891 = vmatprep.mubr.bf16.mxu0 %v1012
    %2892 = vmatmul.mubr.bf16.gmra.mrb[0].mxu0 %v1011
    %v2893 = vpop.f32.mrb[0].mxu0
    %v2894 = vadd.f32 %v2701, %v2893
    %v2895 = vpop.f32.mrb[0].mxu0
    %v2896 = vadd.f32 %v2703, %v2895
    %v2897 = vpop.f32.mrb[0].mxu0
    %v2898 = vadd.f32 %v2705, %v2897
    %v2899 = vpop.f32.mrb[0].mxu0
    %v2900 = vadd.f32 %v2707, %v2899
    %2901 = vmatprep.mubr.bf16.mxu0 %v1016
    %2902 = vmatmul.mubr.bf16.gmra.mrb[0].mxu0 %v1015
    %v2903 = vpop.f32.mrb[0].mxu0
    %v2904 = vadd.f32 %v2711, %v2903
    %v2905 = vpop.f32.mrb[0].mxu0
    %v2906 = vadd.f32 %v2713, %v2905
    %v2907 = vpop.f32.mrb[0].mxu0
    %v2908 = vadd.f32 %v2715, %v2907
    %v2909 = vpop.f32.mrb[0].mxu0
    %v2910 = vadd.f32 %v2717, %v2909
    %2911 = vmatprep.mubr.bf16.mxu0 %v1020
    %2912 = vmatmul.mubr.bf16.gmra.mrb[0].mxu0 %v1019
    %v2913 = vpop.f32.mrb[0].mxu0
    %v2914 = vadd.f32 %v2721, %v2913
    %v2915 = vpop.f32.mrb[0].mxu0
    %v2916 = vadd.f32 %v2723, %v2915
    %v2917 = vpop.f32.mrb[0].mxu0
    %v2918 = vadd.f32 %v2725, %v2917
    %v2919 = vpop.f32.mrb[0].mxu0
    %v2920 = vadd.f32 %v2727, %v2919
    %2921 = vmatprep.mubr.bf16.mxu0 %v1024
    %2922 = vmatmul.mubr.bf16.gmra.mrb[0].mxu0 %v1023
    %v2923 = vpop.f32.mrb[0].mxu0
    %v2924 = vadd.f32 %v2731, %v2923
    %v2925 = vpop.f32.mrb[0].mxu0
    %v2926 = vadd.f32 %v2733, %v2925
    %v2927 = vpop.f32.mrb[0].mxu0
    %v2928 = vadd.f32 %v2735, %v2927
    %v2929 = vpop.f32.mrb[0].mxu0
    %v2930 = vadd.f32 %v2737, %v2929
    %2931 = vmatprep.mubr.bf16.mxu0 %v1028
    %2932 = vmatmul.mubr.bf16.gmra.mrb[0].mxu0 %v1027
    %v2933 = vpop.f32.mrb[0].mxu0
    %v2934 = vadd.f32 %v2741, %v2933
    %v2935 = vpop.f32.mrb[0].mxu0
    %v2936 = vadd.f32 %v2743, %v2935
    %v2937 = vpop.f32.mrb[0].mxu0
    %v2938 = vadd.f32 %v2745, %v2937
    %v2939 = vpop.f32.mrb[0].mxu0
    %v2940 = vadd.f32 %v2747, %v2939
    %2941 = vmatprep.mubr.bf16.mxu0 %v1032
    %2942 = vmatmul.mubr.bf16.gmra.mrb[0].mxu0 %v1031
    %v2943 = vpop.f32.mrb[0].mxu0
    %v2944 = vadd.f32 %v2751, %v2943
    %v2945 = vpop.f32.mrb[0].mxu0
    %v2946 = vadd.f32 %v2753, %v2945
    %v2947 = vpop.f32.mrb[0].mxu0
    %v2948 = vadd.f32 %v2755, %v2947
    %v2949 = vpop.f32.mrb[0].mxu0
    %v2950 = vadd.f32 %v2757, %v2949
    %2951 = vmatprep.mubr.bf16.mxu0 %v1036
    %2952 = vmatmul.mubr.bf16.gmra.mrb[0].mxu0 %v1035
    %v2953 = vpop.f32.mrb[0].mxu0
    %v2954 = vadd.f32 %v2761, %v2953
    %v2955 = vpop.f32.mrb[0].mxu0
    %v2956 = vadd.f32 %v2763, %v2955
    %v2957 = vpop.f32.mrb[0].mxu0
    %v2958 = vadd.f32 %v2765, %v2957
    %v2959 = vpop.f32.mrb[0].mxu0
    %v2960 = vadd.f32 %v2767, %v2959
    %2961 = vmatprep.mubr.bf16.mxu0 %v1040
    %2962 = vmatmul.mubr.bf16.gmra.mrb[0].mxu0 %v1039
    %v2963 = vpop.f32.mrb[0].mxu0
    %v2964 = vadd.f32 %v2771, %v2963
    %v2965 = vpop.f32.mrb[0].mxu0
    %v2966 = vadd.f32 %v2773, %v2965
    %v2967 = vpop.f32.mrb[0].mxu0
    %v2968 = vadd.f32 %v2775, %v2967
    %v2969 = vpop.f32.mrb[0].mxu0
    %v2970 = vadd.f32 %v2777, %v2969
    %2971 = vmatprep.mubr.bf16.mxu0 %v1044
    %2972 = vmatmul.mubr.bf16.gmra.mrb[0].mxu0 %v1043
    %v2973 = vpop.f32.mrb[0].mxu0
    %v2974 = vadd.f32 %v2781, %v2973
    %v2975 = vpop.f32.mrb[0].mxu0
    %v2976 = vadd.f32 %v2783, %v2975
    %v2977 = vpop.f32.mrb[0].mxu0
    %v2978 = vadd.f32 %v2785, %v2977
    %v2979 = vpop.f32.mrb[0].mxu0
    %v2980 = vadd.f32 %v2787, %v2979
    %2981 = vmatprep.mubr.bf16.mxu0 %v1048
    %2982 = vmatmul.mubr.bf16.gmra.mrb[0].mxu0 %v1047
    %v2983 = vpop.f32.mrb[0].mxu0
    %v2984 = vadd.f32 %v2791, %v2983
    %v2985 = vpop.f32.mrb[0].mxu0
    %v2986 = vadd.f32 %v2793, %v2985
    %v2987 = vpop.f32.mrb[0].mxu0
    %v2988 = vadd.f32 %v2795, %v2987
    %v2989 = vpop.f32.mrb[0].mxu0
    %v2990 = vadd.f32 %v2797, %v2989
    %2991 = vmatprep.mubr.bf16.mxu0 %v1052
    %2992 = vmatmul.mubr.bf16.gmra.mrb[0].mxu0 %v1051
    %v2993 = vpop.f32.mrb[0].mxu0
    %v2994 = vadd.f32 %v2801, %v2993
    %v2995 = vpop.f32.mrb[0].mxu0
    %v2996 = vadd.f32 %v2803, %v2995
    %v2997 = vpop.f32.mrb[0].mxu0
    %v2998 = vadd.f32 %v2805, %v2997
    %v2999 = vpop.f32.mrb[0].mxu0
    %v3000 = vadd.f32 %v2807, %v2999
    %3001 = vmatprep.mubr.bf16.mxu0 %v1056
    %3002 = vmatmul.mubr.bf16.gmra.mrb[0].mxu0 %v1055
    %v3003 = vpop.f32.mrb[0].mxu0
    %v3004 = vadd.f32 %v2811, %v3003
    %v3005 = vpop.f32.mrb[0].mxu0
    %v3006 = vadd.f32 %v2813, %v3005
    %v3007 = vpop.f32.mrb[0].mxu0
    %v3008 = vadd.f32 %v2815, %v3007
    %v3009 = vpop.f32.mrb[0].mxu0
    %v3010 = vadd.f32 %v2817, %v3009
    %3011 = vdwg.mxu0
    %3012 = vmatprep.subr.bf16.mxu0 %v1861
    %3013 = vmatpush1.bf16.msra.mxu0 %v1860
    %3014 = vmatprep.subr.bf16.mxu0 %v1867
    %3015 = vmatpush1.bf16.msra.mxu0 %v1866
    %3016 = vmatprep.subr.bf16.mxu0 %v1873
    %3017 = vmatpush1.bf16.msra.mxu0 %v1872
    %3018 = vmatprep.subr.bf16.mxu0 %v1879
    %3019 = vmatpush1.bf16.msra.mxu0 %v1878
    %3020 = vmatprep.subr.bf16.mxu0 %v1885
    %3021 = vmatpush1.bf16.msra.mxu0 %v1884
    %3022 = vmatprep.subr.bf16.mxu0 %v1891
    %3023 = vmatpush1.bf16.msra.mxu0 %v1890
    %3024 = vmatprep.subr.bf16.mxu0 %v1897
    %3025 = vmatpush1.bf16.msra.mxu0 %v1896
    %3026 = vmatprep.subr.bf16.mxu0 %v1903
    %3027 = vmatpush1.bf16.msra.mxu0 %v1902
    %3028 = vmatprep.subr.bf16.mxu0 %v1909
    %3029 = vmatpush1.bf16.msra.mxu0 %v1908
    %3030 = vmatprep.subr.bf16.mxu0 %v1915
    %3031 = vmatpush1.bf16.msra.mxu0 %v1914
    %3032 = vmatprep.subr.bf16.mxu0 %v1921
    %3033 = vmatpush1.bf16.msra.mxu0 %v1920
    %3034 = vmatprep.subr.bf16.mxu0 %v1927
    %3035 = vmatpush1.bf16.msra.mxu0 %v1926
    %3036 = vmatprep.subr.bf16.mxu0 %v1933
    %3037 = vmatpush1.bf16.msra.mxu0 %v1932
    %3038 = vmatprep.subr.bf16.mxu0 %v1939
    %3039 = vmatpush1.bf16.msra.mxu0 %v1938
    %3040 = vmatprep.subr.bf16.mxu0 %v1945
    %3041 = vmatpush1.bf16.msra.mxu0 %v1944
    %3042 = vmatprep.subr.bf16.mxu0 %v1951
    %3043 = vmatpush1.bf16.msra.mxu0 %v1950
    %3044 = vmatprep.mubr.bf16.mxu0 %v994
    %3045 = vmatmul.mubr.bf16.gmra.mrb[0].mxu0 %v993
    %v3046 = vpop.f32.mrb[0].mxu0
    %v3047 = vadd.f32 %v1269, %v3046
    %v3048 = vpop.f32.mrb[0].mxu0
    %v3049 = vadd.f32 %v1273, %v3048
    %v3050 = vpop.f32.mrb[0].mxu0
    %v3051 = vadd.f32 %v1269, %v3050
    %v3052 = vpop.f32.mrb[0].mxu0
    %v3053 = vadd.f32 %v1273, %v3052
    %3054 = vmatprep.mubr.bf16.mxu0 %v998
    %3055 = vmatmul.mubr.bf16.gmra.mrb[0].mxu0 %v997
    %v3056 = vpop.f32.mrb[0].mxu0
    %v3057 = vadd.f32 %v1269, %v3056
    %v3058 = vpop.f32.mrb[0].mxu0
    %v3059 = vadd.f32 %v1273, %v3058
    %v3060 = vpop.f32.mrb[0].mxu0
    %v3061 = vadd.f32 %v1269, %v3060
    %v3062 = vpop.f32.mrb[0].mxu0
    %v3063 = vadd.f32 %v1273, %v3062
    %3064 = vmatprep.mubr.bf16.mxu0 %v1002
    %3065 = vmatmul.mubr.bf16.gmra.mrb[0].mxu0 %v1001
    %v3066 = vpop.f32.mrb[0].mxu0
    %v3067 = vadd.f32 %v1269, %v3066
    %v3068 = vpop.f32.mrb[0].mxu0
    %v3069 = vadd.f32 %v1273, %v3068
    %v3070 = vpop.f32.mrb[0].mxu0
    %v3071 = vadd.f32 %v1269, %v3070
    %v3072 = vpop.f32.mrb[0].mxu0
    %v3073 = vadd.f32 %v1273, %v3072
    %3074 = vmatprep.mubr.bf16.mxu0 %v1006
    %3075 = vmatmul.mubr.bf16.gmra.mrb[0].mxu0 %v1005
    %v3076 = vpop.f32.mrb[0].mxu0
    %v3077 = vadd.f32 %v1269, %v3076
    %v3078 = vpop.f32.mrb[0].mxu0
    %v3079 = vadd.f32 %v1273, %v3078
    %v3080 = vpop.f32.mrb[0].mxu0
    %v3081 = vadd.f32 %v1269, %v3080
    %v3082 = vpop.f32.mrb[0].mxu0
    %v3083 = vadd.f32 %v1273, %v3082
    %3084 = vmatprep.mubr.bf16.mxu0 %v1010
    %3085 = vmatmul.mubr.bf16.gmra.mrb[0].mxu0 %v1009
    %v3086 = vpop.f32.mrb[0].mxu0
    %v3087 = vadd.f32 %v1269, %v3086
    %v3088 = vpop.f32.mrb[0].mxu0
    %v3089 = vadd.f32 %v1273, %v3088
    %v3090 = vpop.f32.mrb[0].mxu0
    %v3091 = vadd.f32 %v1269, %v3090
    %v3092 = vpop.f32.mrb[0].mxu0
    %v3093 = vadd.f32 %v1273, %v3092
    %3094 = vmatprep.mubr.bf16.mxu0 %v1014
    %3095 = vmatmul.mubr.bf16.gmra.mrb[0].mxu0 %v1013
    %v3096 = vpop.f32.mrb[0].mxu0
    %v3097 = vadd.f32 %v1269, %v3096
    %v3098 = vpop.f32.mrb[0].mxu0
    %v3099 = vadd.f32 %v1273, %v3098
    %v3100 = vpop.f32.mrb[0].mxu0
    %v3101 = vadd.f32 %v1269, %v3100
    %v3102 = vpop.f32.mrb[0].mxu0
    %v3103 = vadd.f32 %v1273, %v3102
    %3104 = vmatprep.mubr.bf16.mxu0 %v1018
    %3105 = vmatmul.mubr.bf16.gmra.mrb[0].mxu0 %v1017
    %v3106 = vpop.f32.mrb[0].mxu0
    %v3107 = vadd.f32 %v1269, %v3106
    %v3108 = vpop.f32.mrb[0].mxu0
    %v3109 = vadd.f32 %v1273, %v3108
    %v3110 = vpop.f32.mrb[0].mxu0
    %v3111 = vadd.f32 %v1269, %v3110
    %v3112 = vpop.f32.mrb[0].mxu0
    %v3113 = vadd.f32 %v1273, %v3112
    %3114 = vmatprep.mubr.bf16.mxu0 %v1022
    %3115 = vmatmul.mubr.bf16.gmra.mrb[0].mxu0 %v1021
    %v3116 = vpop.f32.mrb[0].mxu0
    %v3117 = vadd.f32 %v1269, %v3116
    %v3118 = vpop.f32.mrb[0].mxu0
    %v3119 = vadd.f32 %v1273, %v3118
    %v3120 = vpop.f32.mrb[0].mxu0
    %v3121 = vadd.f32 %v1269, %v3120
    %v3122 = vpop.f32.mrb[0].mxu0
    %v3123 = vadd.f32 %v1273, %v3122
    %3124 = vmatprep.mubr.bf16.mxu0 %v1026
    %3125 = vmatmul.mubr.bf16.gmra.mrb[0].mxu0 %v1025
    %v3126 = vpop.f32.mrb[0].mxu0
    %v3127 = vadd.f32 %v1269, %v3126
    %v3128 = vpop.f32.mrb[0].mxu0
    %v3129 = vadd.f32 %v1273, %v3128
    %v3130 = vpop.f32.mrb[0].mxu0
    %v3131 = vadd.f32 %v1269, %v3130
    %v3132 = vpop.f32.mrb[0].mxu0
    %v3133 = vadd.f32 %v1273, %v3132
    %3134 = vmatprep.mubr.bf16.mxu0 %v1030
    %3135 = vmatmul.mubr.bf16.gmra.mrb[0].mxu0 %v1029
    %v3136 = vpop.f32.mrb[0].mxu0
    %v3137 = vadd.f32 %v1269, %v3136
    %v3138 = vpop.f32.mrb[0].mxu0
    %v3139 = vadd.f32 %v1273, %v3138
    %v3140 = vpop.f32.mrb[0].mxu0
    %v3141 = vadd.f32 %v1269, %v3140
    %v3142 = vpop.f32.mrb[0].mxu0
    %v3143 = vadd.f32 %v1273, %v3142
    %3144 = vmatprep.mubr.bf16.mxu0 %v1034
    %3145 = vmatmul.mubr.bf16.gmra.mrb[0].mxu0 %v1033
    %v3146 = vpop.f32.mrb[0].mxu0
    %v3147 = vadd.f32 %v1269, %v3146
    %v3148 = vpop.f32.mrb[0].mxu0
    %v3149 = vadd.f32 %v1273, %v3148
    %v3150 = vpop.f32.mrb[0].mxu0
    %v3151 = vadd.f32 %v1269, %v3150
    %v3152 = vpop.f32.mrb[0].mxu0
    %v3153 = vadd.f32 %v1273, %v3152
    %3154 = vmatprep.mubr.bf16.mxu0 %v1038
    %3155 = vmatmul.mubr.bf16.gmra.mrb[0].mxu0 %v1037
    %v3156 = vpop.f32.mrb[0].mxu0
    %v3157 = vadd.f32 %v1269, %v3156
    %v3158 = vpop.f32.mrb[0].mxu0
    %v3159 = vadd.f32 %v1273, %v3158
    %v3160 = vpop.f32.mrb[0].mxu0
    %v3161 = vadd.f32 %v1269, %v3160
    %v3162 = vpop.f32.mrb[0].mxu0
    %v3163 = vadd.f32 %v1273, %v3162
    %3164 = vmatprep.mubr.bf16.mxu0 %v1042
    %3165 = vmatmul.mubr.bf16.gmra.mrb[0].mxu0 %v1041
    %v3166 = vpop.f32.mrb[0].mxu0
    %v3167 = vadd.f32 %v1269, %v3166
    %v3168 = vpop.f32.mrb[0].mxu0
    %v3169 = vadd.f32 %v1273, %v3168
    %v3170 = vpop.f32.mrb[0].mxu0
    %v3171 = vadd.f32 %v1269, %v3170
    %v3172 = vpop.f32.mrb[0].mxu0
    %v3173 = vadd.f32 %v1273, %v3172
    %3174 = vmatprep.mubr.bf16.mxu0 %v1046
    %3175 = vmatmul.mubr.bf16.gmra.mrb[0].mxu0 %v1045
    %v3176 = vpop.f32.mrb[0].mxu0
    %v3177 = vadd.f32 %v1269, %v3176
    %v3178 = vpop.f32.mrb[0].mxu0
    %v3179 = vadd.f32 %v1273, %v3178
    %v3180 = vpop.f32.mrb[0].mxu0
    %v3181 = vadd.f32 %v1269, %v3180
    %v3182 = vpop.f32.mrb[0].mxu0
    %v3183 = vadd.f32 %v1273, %v3182
    %3184 = vmatprep.mubr.bf16.mxu0 %v1050
    %3185 = vmatmul.mubr.bf16.gmra.mrb[0].mxu0 %v1049
    %v3186 = vpop.f32.mrb[0].mxu0
    %v3187 = vadd.f32 %v1269, %v3186
    %v3188 = vpop.f32.mrb[0].mxu0
    %v3189 = vadd.f32 %v1273, %v3188
    %v3190 = vpop.f32.mrb[0].mxu0
    %v3191 = vadd.f32 %v1269, %v3190
    %v3192 = vpop.f32.mrb[0].mxu0
    %v3193 = vadd.f32 %v1273, %v3192
    %3194 = vmatprep.mubr.bf16.mxu0 %v1054
    %3195 = vmatmul.mubr.bf16.gmra.mrb[0].mxu0 %v1053
    %v3196 = vpop.f32.mrb[0].mxu0
    %v3197 = vadd.f32 %v1269, %v3196
    %v3198 = vpop.f32.mrb[0].mxu0
    %v3199 = vadd.f32 %v1273, %v3198
    %v3200 = vpop.f32.mrb[0].mxu0
    %v3201 = vadd.f32 %v1269, %v3200
    %v3202 = vpop.f32.mrb[0].mxu0
    %v3203 = vadd.f32 %v1273, %v3202
    %3204 = vdwg.mxu0
    %3205 = vmatprep.subr.bf16.mxu0 %v1957
    %3206 = vmatpush1.bf16.msra.mxu0 %v1956
    %3207 = vmatprep.subr.bf16.mxu0 %v1963
    %3208 = vmatpush1.bf16.msra.mxu0 %v1962
    %3209 = vmatprep.subr.bf16.mxu0 %v1969
    %3210 = vmatpush1.bf16.msra.mxu0 %v1968
    %3211 = vmatprep.subr.bf16.mxu0 %v1975
    %3212 = vmatpush1.bf16.msra.mxu0 %v1974
    %3213 = vmatprep.subr.bf16.mxu0 %v1981
    %3214 = vmatpush1.bf16.msra.mxu0 %v1980
    %3215 = vmatprep.subr.bf16.mxu0 %v1987
    %3216 = vmatpush1.bf16.msra.mxu0 %v1986
    %3217 = vmatprep.subr.bf16.mxu0 %v1993
    %3218 = vmatpush1.bf16.msra.mxu0 %v1992
    %3219 = vmatprep.subr.bf16.mxu0 %v1999
    %3220 = vmatpush1.bf16.msra.mxu0 %v1998
    %3221 = vmatprep.subr.bf16.mxu0 %v2005
    %3222 = vmatpush1.bf16.msra.mxu0 %v2004
    %3223 = vmatprep.subr.bf16.mxu0 %v2011
    %3224 = vmatpush1.bf16.msra.mxu0 %v2010
    %3225 = vmatprep.subr.bf16.mxu0 %v2017
    %3226 = vmatpush1.bf16.msra.mxu0 %v2016
    %3227 = vmatprep.subr.bf16.mxu0 %v2023
    %3228 = vmatpush1.bf16.msra.mxu0 %v2022
    %3229 = vmatprep.subr.bf16.mxu0 %v2029
    %3230 = vmatpush1.bf16.msra.mxu0 %v2028
    %3231 = vmatprep.subr.bf16.mxu0 %v2035
    %3232 = vmatpush1.bf16.msra.mxu0 %v2034
    %3233 = vmatprep.subr.bf16.mxu0 %v2041
    %3234 = vmatpush1.bf16.msra.mxu0 %v2040
    %3235 = vmatprep.subr.bf16.mxu0 %v2047
    %3236 = vmatpush1.bf16.msra.mxu0 %v2046
    %3237 = vmatprep.mubr.bf16.mxu0 %v996
    %3238 = vmatmul.mubr.bf16.gmra.mrb[0].mxu0 %v995
    %v3239 = vpop.f32.mrb[0].mxu0
    %v3240 = vadd.f32 %v3047, %v3239
    %v3241 = vpop.f32.mrb[0].mxu0
    %v3242 = vadd.f32 %v3049, %v3241
    %v3243 = vpop.f32.mrb[0].mxu0
    %v3244 = vadd.f32 %v3051, %v3243
    %v3245 = vpop.f32.mrb[0].mxu0
    %v3246 = vadd.f32 %v3053, %v3245
    %3247 = vmatprep.mubr.bf16.mxu0 %v1000
    %3248 = vmatmul.mubr.bf16.gmra.mrb[0].mxu0 %v999
    %v3249 = vpop.f32.mrb[0].mxu0
    %v3250 = vadd.f32 %v3057, %v3249
    %v3251 = vpop.f32.mrb[0].mxu0
    %v3252 = vadd.f32 %v3059, %v3251
    %v3253 = vpop.f32.mrb[0].mxu0
    %v3254 = vadd.f32 %v3061, %v3253
    %v3255 = vpop.f32.mrb[0].mxu0
    %v3256 = vadd.f32 %v3063, %v3255
    %3257 = vmatprep.mubr.bf16.mxu0 %v1004
    %3258 = vmatmul.mubr.bf16.gmra.mrb[0].mxu0 %v1003
    %v3259 = vpop.f32.mrb[0].mxu0
    %v3260 = vadd.f32 %v3067, %v3259
    %v3261 = vpop.f32.mrb[0].mxu0
    %v3262 = vadd.f32 %v3069, %v3261
    %v3263 = vpop.f32.mrb[0].mxu0
    %v3264 = vadd.f32 %v3071, %v3263
    %v3265 = vpop.f32.mrb[0].mxu0
    %v3266 = vadd.f32 %v3073, %v3265
    %3267 = vmatprep.mubr.bf16.mxu0 %v1008
    %3268 = vmatmul.mubr.bf16.gmra.mrb[0].mxu0 %v1007
    %v3269 = vpop.f32.mrb[0].mxu0
    %v3270 = vadd.f32 %v3077, %v3269
    %v3271 = vpop.f32.mrb[0].mxu0
    %v3272 = vadd.f32 %v3079, %v3271
    %v3273 = vpop.f32.mrb[0].mxu0
    %v3274 = vadd.f32 %v3081, %v3273
    %v3275 = vpop.f32.mrb[0].mxu0
    %v3276 = vadd.f32 %v3083, %v3275
    %3277 = vmatprep.mubr.bf16.mxu0 %v1012
    %3278 = vmatmul.mubr.bf16.gmra.mrb[0].mxu0 %v1011
    %v3279 = vpop.f32.mrb[0].mxu0
    %v3280 = vadd.f32 %v3087, %v3279
    %v3281 = vpop.f32.mrb[0].mxu0
    %v3282 = vadd.f32 %v3089, %v3281
    %v3283 = vpop.f32.mrb[0].mxu0
    %v3284 = vadd.f32 %v3091, %v3283
    %v3285 = vpop.f32.mrb[0].mxu0
    %v3286 = vadd.f32 %v3093, %v3285
    %3287 = vmatprep.mubr.bf16.mxu0 %v1016
    %3288 = vmatmul.mubr.bf16.gmra.mrb[0].mxu0 %v1015
    %v3289 = vpop.f32.mrb[0].mxu0
    %v3290 = vadd.f32 %v3097, %v3289
    %v3291 = vpop.f32.mrb[0].mxu0
    %v3292 = vadd.f32 %v3099, %v3291
    %v3293 = vpop.f32.mrb[0].mxu0
    %v3294 = vadd.f32 %v3101, %v3293
    %v3295 = vpop.f32.mrb[0].mxu0
    %v3296 = vadd.f32 %v3103, %v3295
    %3297 = vmatprep.mubr.bf16.mxu0 %v1020
    %3298 = vmatmul.mubr.bf16.gmra.mrb[0].mxu0 %v1019
    %v3299 = vpop.f32.mrb[0].mxu0
    %v3300 = vadd.f32 %v3107, %v3299
    %v3301 = vpop.f32.mrb[0].mxu0
    %v3302 = vadd.f32 %v3109, %v3301
    %v3303 = vpop.f32.mrb[0].mxu0
    %v3304 = vadd.f32 %v3111, %v3303
    %v3305 = vpop.f32.mrb[0].mxu0
    %v3306 = vadd.f32 %v3113, %v3305
    %3307 = vmatprep.mubr.bf16.mxu0 %v1024
    %3308 = vmatmul.mubr.bf16.gmra.mrb[0].mxu0 %v1023
    %v3309 = vpop.f32.mrb[0].mxu0
    %v3310 = vadd.f32 %v3117, %v3309
    %v3311 = vpop.f32.mrb[0].mxu0
    %v3312 = vadd.f32 %v3119, %v3311
    %v3313 = vpop.f32.mrb[0].mxu0
    %v3314 = vadd.f32 %v3121, %v3313
    %v3315 = vpop.f32.mrb[0].mxu0
    %v3316 = vadd.f32 %v3123, %v3315
    %3317 = vmatprep.mubr.bf16.mxu0 %v1028
    %3318 = vmatmul.mubr.bf16.gmra.mrb[0].mxu0 %v1027
    %v3319 = vpop.f32.mrb[0].mxu0
    %v3320 = vadd.f32 %v3127, %v3319
    %v3321 = vpop.f32.mrb[0].mxu0
    %v3322 = vadd.f32 %v3129, %v3321
    %v3323 = vpop.f32.mrb[0].mxu0
    %v3324 = vadd.f32 %v3131, %v3323
    %v3325 = vpop.f32.mrb[0].mxu0
    %v3326 = vadd.f32 %v3133, %v3325
    %3327 = vmatprep.mubr.bf16.mxu0 %v1032
    %3328 = vmatmul.mubr.bf16.gmra.mrb[0].mxu0 %v1031
    %v3329 = vpop.f32.mrb[0].mxu0
    %v3330 = vadd.f32 %v3137, %v3329
    %v3331 = vpop.f32.mrb[0].mxu0
    %v3332 = vadd.f32 %v3139, %v3331
    %v3333 = vpop.f32.mrb[0].mxu0
    %v3334 = vadd.f32 %v3141, %v3333
    %v3335 = vpop.f32.mrb[0].mxu0
    %v3336 = vadd.f32 %v3143, %v3335
    %3337 = vmatprep.mubr.bf16.mxu0 %v1036
    %3338 = vmatmul.mubr.bf16.gmra.mrb[0].mxu0 %v1035
    %v3339 = vpop.f32.mrb[0].mxu0
    %v3340 = vadd.f32 %v3147, %v3339
    %v3341 = vpop.f32.mrb[0].mxu0
    %v3342 = vadd.f32 %v3149, %v3341
    %v3343 = vpop.f32.mrb[0].mxu0
    %v3344 = vadd.f32 %v3151, %v3343
    %v3345 = vpop.f32.mrb[0].mxu0
    %v3346 = vadd.f32 %v3153, %v3345
    %3347 = vmatprep.mubr.bf16.mxu0 %v1040
    %3348 = vmatmul.mubr.bf16.gmra.mrb[0].mxu0 %v1039
    %v3349 = vpop.f32.mrb[0].mxu0
    %v3350 = vadd.f32 %v3157, %v3349
    %v3351 = vpop.f32.mrb[0].mxu0
    %v3352 = vadd.f32 %v3159, %v3351
    %v3353 = vpop.f32.mrb[0].mxu0
    %v3354 = vadd.f32 %v3161, %v3353
    %v3355 = vpop.f32.mrb[0].mxu0
    %v3356 = vadd.f32 %v3163, %v3355
    %3357 = vmatprep.mubr.bf16.mxu0 %v1044
    %3358 = vmatmul.mubr.bf16.gmra.mrb[0].mxu0 %v1043
    %v3359 = vpop.f32.mrb[0].mxu0
    %v3360 = vadd.f32 %v3167, %v3359
    %v3361 = vpop.f32.mrb[0].mxu0
    %v3362 = vadd.f32 %v3169, %v3361
    %v3363 = vpop.f32.mrb[0].mxu0
    %v3364 = vadd.f32 %v3171, %v3363
    %v3365 = vpop.f32.mrb[0].mxu0
    %v3366 = vadd.f32 %v3173, %v3365
    %3367 = vmatprep.mubr.bf16.mxu0 %v1048
    %3368 = vmatmul.mubr.bf16.gmra.mrb[0].mxu0 %v1047
    %v3369 = vpop.f32.mrb[0].mxu0
    %v3370 = vadd.f32 %v3177, %v3369
    %v3371 = vpop.f32.mrb[0].mxu0
    %v3372 = vadd.f32 %v3179, %v3371
    %v3373 = vpop.f32.mrb[0].mxu0
    %v3374 = vadd.f32 %v3181, %v3373
    %v3375 = vpop.f32.mrb[0].mxu0
    %v3376 = vadd.f32 %v3183, %v3375
    %3377 = vmatprep.mubr.bf16.mxu0 %v1052
    %3378 = vmatmul.mubr.bf16.gmra.mrb[0].mxu0 %v1051
    %v3379 = vpop.f32.mrb[0].mxu0
    %v3380 = vadd.f32 %v3187, %v3379
    %v3381 = vpop.f32.mrb[0].mxu0
    %v3382 = vadd.f32 %v3189, %v3381
    %v3383 = vpop.f32.mrb[0].mxu0
    %v3384 = vadd.f32 %v3191, %v3383
    %v3385 = vpop.f32.mrb[0].mxu0
    %v3386 = vadd.f32 %v3193, %v3385
    %3387 = vmatprep.mubr.bf16.mxu0 %v1056
    %3388 = vmatmul.mubr.bf16.gmra.mrb[0].mxu0 %v1055
    %v3389 = vpop.f32.mrb[0].mxu0
    %v3390 = vadd.f32 %v3197, %v3389
    %v3391 = vpop.f32.mrb[0].mxu0
    %v3392 = vadd.f32 %v3199, %v3391
    %v3393 = vpop.f32.mrb[0].mxu0
    %v3394 = vadd.f32 %v3201, %v3393
    %v3395 = vpop.f32.mrb[0].mxu0
    %v3396 = vadd.f32 %v3203, %v3395
    %3397 = vdwg.mxu0
    %v3398 = vmax.f32 %v2468, 0.0
    %v3399 = vmax.f32 %v2470, 0.0
    %v3400 = vmax.f32 %v2854, 0.0
    %v3401 = vmax.f32 %v2856, 0.0
    %v3402 = vmax.f32 %v3240, 0.0
    %v3403 = vmax.f32 %v3242, 0.0
    %v3404 = vmax.f32 %v2472, 0.0
    %v3405 = vmax.f32 %v2474, 0.0
    %v3406 = vmax.f32 %v2858, 0.0
    %v3407 = vmax.f32 %v2860, 0.0
    %v3408 = vmax.f32 %v3244, 0.0
    %v3409 = vmax.f32 %v3246, 0.0
    %v3410 = vmax.f32 %v2478, 0.0
    %v3411 = vmax.f32 %v2480, 0.0
    %v3412 = vmax.f32 %v2864, 0.0
    %v3413 = vmax.f32 %v2866, 0.0
    %v3414 = vmax.f32 %v3250, 0.0
    %v3415 = vmax.f32 %v3252, 0.0
    %v3416 = vmax.f32 %v2482, 0.0
    %v3417 = vmax.f32 %v2484, 0.0
    %v3418 = vmax.f32 %v2868, 0.0
    %v3419 = vmax.f32 %v2870, 0.0
    %v3420 = vmax.f32 %v3254, 0.0
    %v3421 = vmax.f32 %v3256, 0.0
    %v3422 = vmax.f32 %v2488, 0.0
    %v3423 = vmax.f32 %v2490, 0.0
    %v3424 = vmax.f32 %v2874, 0.0
    %v3425 = vmax.f32 %v2876, 0.0
    %v3426 = vmax.f32 %v3260, 0.0
    %v3427 = vmax.f32 %v3262, 0.0
    %v3428 = vmax.f32 %v2492, 0.0
    %v3429 = vmax.f32 %v2494, 0.0
    %v3430 = vmax.f32 %v2878, 0.0
    %v3431 = vmax.f32 %v2880, 0.0
    %v3432 = vmax.f32 %v3264, 0.0
    %v3433 = vmax.f32 %v3266, 0.0
    %v3434 = vmax.f32 %v2498, 0.0
    %v3435 = vmax.f32 %v2500, 0.0
    %v3436 = vmax.f32 %v2884, 0.0
    %v3437 = vmax.f32 %v2886, 0.0
    %v3438 = vmax.f32 %v3270, 0.0
    %v3439 = vmax.f32 %v3272, 0.0
    %v3440 = vmax.f32 %v2502, 0.0
    %v3441 = vmax.f32 %v2504, 0.0
    %v3442 = vmax.f32 %v2888, 0.0
    %v3443 = vmax.f32 %v2890, 0.0
    %v3444 = vmax.f32 %v3274, 0.0
    %v3445 = vmax.f32 %v3276, 0.0
    %v3446 = vmax.f32 %v2508, 0.0
    %v3447 = vmax.f32 %v2510, 0.0
    %v3448 = vmax.f32 %v2894, 0.0
    %v3449 = vmax.f32 %v2896, 0.0
    %v3450 = vmax.f32 %v3280, 0.0
    %v3451 = vmax.f32 %v3282, 0.0
    %v3452 = vmax.f32 %v2512, 0.0
    %v3453 = vmax.f32 %v2514, 0.0
    %v3454 = vmax.f32 %v2898, 0.0
    %v3455 = vmax.f32 %v2900, 0.0
    %v3456 = vmax.f32 %v3284, 0.0
    %v3457 = vmax.f32 %v3286, 0.0
    %v3458 = vmax.f32 %v2518, 0.0
    %v3459 = vmax.f32 %v2520, 0.0
    %v3460 = vmax.f32 %v2904, 0.0
    %v3461 = vmax.f32 %v2906, 0.0
    %v3462 = vmax.f32 %v3290, 0.0
    %v3463 = vmax.f32 %v3292, 0.0
    %v3464 = vmax.f32 %v2522, 0.0
    %v3465 = vmax.f32 %v2524, 0.0
    %v3466 = vmax.f32 %v2908, 0.0
    %v3467 = vmax.f32 %v2910, 0.0
    %v3468 = vmax.f32 %v3294, 0.0
    %v3469 = vmax.f32 %v3296, 0.0
    %v3470 = vmax.f32 %v2528, 0.0
    %v3471 = vmax.f32 %v2530, 0.0
    %v3472 = vmax.f32 %v2914, 0.0
    %v3473 = vmax.f32 %v2916, 0.0
    %v3474 = vmax.f32 %v3300, 0.0
    %v3475 = vmax.f32 %v3302, 0.0
    %v3476 = vmax.f32 %v2532, 0.0
    %v3477 = vmax.f32 %v2534, 0.0
    %v3478 = vmax.f32 %v2918, 0.0
    %v3479 = vmax.f32 %v2920, 0.0
    %v3480 = vmax.f32 %v3304, 0.0
    %v3481 = vmax.f32 %v3306, 0.0
    %v3482 = vmax.f32 %v2538, 0.0
    %v3483 = vmax.f32 %v2540, 0.0
    %v3484 = vmax.f32 %v2924, 0.0
    %v3485 = vmax.f32 %v2926, 0.0
    %v3486 = vmax.f32 %v3310, 0.0
    %v3487 = vmax.f32 %v3312, 0.0
    %v3488 = vmax.f32 %v2542, 0.0
    %v3489 = vmax.f32 %v2544, 0.0
    %v3490 = vmax.f32 %v2928, 0.0
    %v3491 = vmax.f32 %v2930, 0.0
    %v3492 = vmax.f32 %v3314, 0.0
    %v3493 = vmax.f32 %v3316, 0.0
    %v3494 = vmax.f32 %v2548, 0.0
    %v3495 = vmax.f32 %v2550, 0.0
    %v3496 = vmax.f32 %v2934, 0.0
    %v3497 = vmax.f32 %v2936, 0.0
    %v3498 = vmax.f32 %v3320, 0.0
    %v3499 = vmax.f32 %v3322, 0.0
    %v3500 = vmax.f32 %v2552, 0.0
    %v3501 = vmax.f32 %v2554, 0.0
    %v3502 = vmax.f32 %v2938, 0.0
    %v3503 = vmax.f32 %v2940, 0.0
    %v3504 = vmax.f32 %v3324, 0.0
    %v3505 = vmax.f32 %v3326, 0.0
    %v3506 = vmax.f32 %v2558, 0.0
    %v3507 = vmax.f32 %v2560, 0.0
    %v3508 = vmax.f32 %v2944, 0.0
    %v3509 = vmax.f32 %v2946, 0.0
    %v3510 = vmax.f32 %v3330, 0.0
    %v3511 = vmax.f32 %v3332, 0.0
    %v3512 = vmax.f32 %v2562, 0.0
    %v3513 = vmax.f32 %v2564, 0.0
    %v3514 = vmax.f32 %v2948, 0.0
    %v3515 = vmax.f32 %v2950, 0.0
    %v3516 = vmax.f32 %v3334, 0.0
    %v3517 = vmax.f32 %v3336, 0.0
    %v3518 = vmax.f32 %v2568, 0.0
    %v3519 = vmax.f32 %v2570, 0.0
    %v3520 = vmax.f32 %v2954, 0.0
    %v3521 = vmax.f32 %v2956, 0.0
    %v3522 = vmax.f32 %v3340, 0.0
    %v3523 = vmax.f32 %v3342, 0.0
    %v3524 = vmax.f32 %v2572, 0.0
    %v3525 = vmax.f32 %v2574, 0.0
    %v3526 = vmax.f32 %v2958, 0.0
    %v3527 = vmax.f32 %v2960, 0.0
    %v3528 = vmax.f32 %v3344, 0.0
    %v3529 = vmax.f32 %v3346, 0.0
    %v3530 = vmax.f32 %v2578, 0.0
    %v3531 = vmax.f32 %v2580, 0.0
    %v3532 = vmax.f32 %v2964, 0.0
    %v3533 = vmax.f32 %v2966, 0.0
    %v3534 = vmax.f32 %v3350, 0.0
    %v3535 = vmax.f32 %v3352, 0.0
    %v3536 = vmax.f32 %v2582, 0.0
    %v3537 = vmax.f32 %v2584, 0.0
    %v3538 = vmax.f32 %v2968, 0.0
    %v3539 = vmax.f32 %v2970, 0.0
    %v3540 = vmax.f32 %v3354, 0.0
    %v3541 = vmax.f32 %v3356, 0.0
    %v3542 = vmax.f32 %v2588, 0.0
    %v3543 = vmax.f32 %v2590, 0.0
    %v3544 = vmax.f32 %v2974, 0.0
    %v3545 = vmax.f32 %v2976, 0.0
    %v3546 = vmax.f32 %v3360, 0.0
    %v3547 = vmax.f32 %v3362, 0.0
    %v3548 = vmax.f32 %v2592, 0.0
    %v3549 = vmax.f32 %v2594, 0.0
    %v3550 = vmax.f32 %v2978, 0.0
    %v3551 = vmax.f32 %v2980, 0.0
    %v3552 = vmax.f32 %v3364, 0.0
    %v3553 = vmax.f32 %v3366, 0.0
    %v3554 = vmax.f32 %v2598, 0.0
    %v3555 = vmax.f32 %v2600, 0.0
    %v3556 = vmax.f32 %v2984, 0.0
    %v3557 = vmax.f32 %v2986, 0.0
    %v3558 = vmax.f32 %v3370, 0.0
    %v3559 = vmax.f32 %v3372, 0.0
    %v3560 = vmax.f32 %v2602, 0.0
    %v3561 = vmax.f32 %v2604, 0.0
    %v3562 = vmax.f32 %v2988, 0.0
    %v3563 = vmax.f32 %v2990, 0.0
    %v3564 = vmax.f32 %v3374, 0.0
    %v3565 = vmax.f32 %v3376, 0.0
    %v3566 = vmax.f32 %v2608, 0.0
    %v3567 = vmax.f32 %v2610, 0.0
    %v3568 = vmax.f32 %v2994, 0.0
    %v3569 = vmax.f32 %v2996, 0.0
    %v3570 = vmax.f32 %v3380, 0.0
    %v3571 = vmax.f32 %v3382, 0.0
    %v3572 = vmax.f32 %v2612, 0.0
    %v3573 = vmax.f32 %v2614, 0.0
    %v3574 = vmax.f32 %v2998, 0.0
    %v3575 = vmax.f32 %v3000, 0.0
    %v3576 = vmax.f32 %v3384, 0.0
    %v3577 = vmax.f32 %v3386, 0.0
    %v3578 = vmax.f32 %v2618, 0.0
    %v3579 = vmax.f32 %v2620, 0.0
    %v3580 = vmax.f32 %v3004, 0.0
    %v3581 = vmax.f32 %v3006, 0.0
    %v3582 = vmax.f32 %v3390, 0.0
    %v3583 = vmax.f32 %v3392, 0.0
    %v3584 = vmax.f32 %v2622, 0.0
    %v3585 = vmax.f32 %v2624, 0.0
    %v3586 = vmax.f32 %v3008, 0.0
    %v3587 = vmax.f32 %v3010, 0.0
    %v3588 = vmax.f32 %v3394, 0.0
    %v3589 = vmax.f32 %v3396, 0.0
    %v3590 = vpack.c.bf16 %v3404, %v3398
    %v3591 = vpack.c.bf16 %v3405, %v3399
    %v3592 = vpack.c.bf16 %v3406, %v3400
    %v3593 = vpack.c.bf16 %v3407, %v3401
    %v3594 = vpack.c.bf16 %v3408, %v3402
    %v3595 = vpack.c.bf16 %v3409, %v3403
    %v3596 = vpack.c.bf16 %v3416, %v3410
    %v3597 = vpack.c.bf16 %v3417, %v3411
    %v3598 = vpack.c.bf16 %v3418, %v3412
    %v3599 = vpack.c.bf16 %v3419, %v3413
    %v3600 = vpack.c.bf16 %v3420, %v3414
    %v3601 = vpack.c.bf16 %v3421, %v3415
    %v3602 = vpack.c.bf16 %v3428, %v3422
    %v3603 = vpack.c.bf16 %v3429, %v3423
    %v3604 = vpack.c.bf16 %v3430, %v3424
    %v3605 = vpack.c.bf16 %v3431, %v3425
    %v3606 = vpack.c.bf16 %v3432, %v3426
    %v3607 = vpack.c.bf16 %v3433, %v3427
    %v3608 = vpack.c.bf16 %v3440, %v3434
    %v3609 = vpack.c.bf16 %v3441, %v3435
    %v3610 = vpack.c.bf16 %v3442, %v3436
    %v3611 = vpack.c.bf16 %v3443, %v3437
    %v3612 = vpack.c.bf16 %v3444, %v3438
    %v3613 = vpack.c.bf16 %v3445, %v3439
    %v3614 = vpack.c.bf16 %v3452, %v3446
    %v3615 = vpack.c.bf16 %v3453, %v3447
    %v3616 = vpack.c.bf16 %v3454, %v3448
    %v3617 = vpack.c.bf16 %v3455, %v3449
    %v3618 = vpack.c.bf16 %v3456, %v3450
    %v3619 = vpack.c.bf16 %v3457, %v3451
    %v3620 = vpack.c.bf16 %v3464, %v3458
    %v3621 = vpack.c.bf16 %v3465, %v3459
    %v3622 = vpack.c.bf16 %v3466, %v3460
    %v3623 = vpack.c.bf16 %v3467, %v3461
    %v3624 = vpack.c.bf16 %v3468, %v3462
    %v3625 = vpack.c.bf16 %v3469, %v3463
    %v3626 = vpack.c.bf16 %v3476, %v3470
    %v3627 = vpack.c.bf16 %v3477, %v3471
    %v3628 = vpack.c.bf16 %v3478, %v3472
    %v3629 = vpack.c.bf16 %v3479, %v3473
    %v3630 = vpack.c.bf16 %v3480, %v3474
    %v3631 = vpack.c.bf16 %v3481, %v3475
    %v3632 = vpack.c.bf16 %v3488, %v3482
    %v3633 = vpack.c.bf16 %v3489, %v3483
    %v3634 = vpack.c.bf16 %v3490, %v3484
    %v3635 = vpack.c.bf16 %v3491, %v3485
    %v3636 = vpack.c.bf16 %v3492, %v3486
    %v3637 = vpack.c.bf16 %v3493, %v3487
    %v3638 = vpack.c.bf16 %v3500, %v3494
    %v3639 = vpack.c.bf16 %v3501, %v3495
    %v3640 = vpack.c.bf16 %v3502, %v3496
    %v3641 = vpack.c.bf16 %v3503, %v3497
    %v3642 = vpack.c.bf16 %v3504, %v3498
    %v3643 = vpack.c.bf16 %v3505, %v3499
    %v3644 = vpack.c.bf16 %v3512, %v3506
    %v3645 = vpack.c.bf16 %v3513, %v3507
    %v3646 = vpack.c.bf16 %v3514, %v3508
    %v3647 = vpack.c.bf16 %v3515, %v3509
    %v3648 = vpack.c.bf16 %v3516, %v3510
    %v3649 = vpack.c.bf16 %v3517, %v3511
    %v3650 = vpack.c.bf16 %v3524, %v3518
    %v3651 = vpack.c.bf16 %v3525, %v3519
    %v3652 = vpack.c.bf16 %v3526, %v3520
    %v3653 = vpack.c.bf16 %v3527, %v3521
    %v3654 = vpack.c.bf16 %v3528, %v3522
    %v3655 = vpack.c.bf16 %v3529, %v3523
    %v3656 = vpack.c.bf16 %v3536, %v3530
    %v3657 = vpack.c.bf16 %v3537, %v3531
    %v3658 = vpack.c.bf16 %v3538, %v3532
    %v3659 = vpack.c.bf16 %v3539, %v3533
    %v3660 = vpack.c.bf16 %v3540, %v3534
    %v3661 = vpack.c.bf16 %v3541, %v3535
    %v3662 = vpack.c.bf16 %v3548, %v3542
    %v3663 = vpack.c.bf16 %v3549, %v3543
    %v3664 = vpack.c.bf16 %v3550, %v3544
    %v3665 = vpack.c.bf16 %v3551, %v3545
    %v3666 = vpack.c.bf16 %v3552, %v3546
    %v3667 = vpack.c.bf16 %v3553, %v3547
    %v3668 = vpack.c.bf16 %v3560, %v3554
    %v3669 = vpack.c.bf16 %v3561, %v3555
    %v3670 = vpack.c.bf16 %v3562, %v3556
    %v3671 = vpack.c.bf16 %v3563, %v3557
    %v3672 = vpack.c.bf16 %v3564, %v3558
    %v3673 = vpack.c.bf16 %v3565, %v3559
    %v3674 = vpack.c.bf16 %v3572, %v3566
    %v3675 = vpack.c.bf16 %v3573, %v3567
    %v3676 = vpack.c.bf16 %v3574, %v3568
    %v3677 = vpack.c.bf16 %v3575, %v3569
    %v3678 = vpack.c.bf16 %v3576, %v3570
    %v3679 = vpack.c.bf16 %v3577, %v3571
    %v3680 = vpack.c.bf16 %v3584, %v3578
    %v3681 = vpack.c.bf16 %v3585, %v3579
    %v3682 = vpack.c.bf16 %v3586, %v3580
    %v3683 = vpack.c.bf16 %v3587, %v3581
    %v3684 = vpack.c.bf16 %v3588, %v3582
    %v3685 = vpack.c.bf16 %v3589, %v3583
    %v3686 = vld [vmem:[#allocation4] sm:$0xff]
    %v3687 = vld [vmem:[#allocation4 + $0x8] sm:$0xff]
    %v3688 = vld [vmem:[#allocation4 + $0x10] sm:$0xff]
    %v3689 = vld [vmem:[#allocation4 + $0x18] sm:$0xff]
    %v3690 = vld [vmem:[#allocation4 + $0x20] sm:$0xff]
    %v3691 = vld [vmem:[#allocation4 + $0x28] sm:$0xff]
    %v3692 = vld [vmem:[#allocation4 + $0x30] sm:$0xff]
    %v3693 = vld [vmem:[#allocation4 + $0x38] sm:$0xff]
    %v3694 = vld [vmem:[#allocation4 + $0x40] sm:$0xff]
    %v3695 = vld [vmem:[#allocation4 + $0x48] sm:$0xff]
    %v3696 = vld [vmem:[#allocation4 + $0x50] sm:$0xff]
    %v3697 = vld [vmem:[#allocation4 + $0x58] sm:$0xff]
    %v3698 = vld [vmem:[#allocation4 + $0x60] sm:$0xff]
    %v3699 = vld [vmem:[#allocation4 + $0x68] sm:$0xff]
    %v3700 = vld [vmem:[#allocation4 + $0x70] sm:$0xff]
    %v3701 = vld [vmem:[#allocation4 + $0x78] sm:$0xff]
    %v3702 = vld [vmem:[#allocation4 + $0x80] sm:$0xff]
    %v3703 = vld [vmem:[#allocation4 + $0x88] sm:$0xff]
    %v3704 = vld [vmem:[#allocation4 + $0x90] sm:$0xff]
    %v3705 = vld [vmem:[#allocation4 + $0x98] sm:$0xff]
    %v3706 = vld [vmem:[#allocation4 + $0xa0] sm:$0xff]
    %v3707 = vld [vmem:[#allocation4 + $0xa8] sm:$0xff]
    %v3708 = vld [vmem:[#allocation4 + $0xb0] sm:$0xff]
    %v3709 = vld [vmem:[#allocation4 + $0xb8] sm:$0xff]
    %v3710 = vld [vmem:[#allocation4 + $0xc0] sm:$0xff]
    %v3711 = vld [vmem:[#allocation4 + $0xc8] sm:$0xff]
    %v3712 = vld [vmem:[#allocation4 + $0xd0] sm:$0xff]
    %v3713 = vld [vmem:[#allocation4 + $0xd8] sm:$0xff]
    %v3714 = vld [vmem:[#allocation4 + $0xe0] sm:$0xff]
    %v3715 = vld [vmem:[#allocation4 + $0xe8] sm:$0xff]
    %v3716 = vld [vmem:[#allocation4 + $0xf0] sm:$0xff]
    %v3717 = vld [vmem:[#allocation4 + $0xf8] sm:$0xff]
    %v3718 = vld [vmem:[#allocation4 + $0x100] sm:$0xff]
    %v3719 = vld [vmem:[#allocation4 + $0x108] sm:$0xff]
    %v3720 = vld [vmem:[#allocation4 + $0x110] sm:$0xff]
    %v3721 = vld [vmem:[#allocation4 + $0x118] sm:$0xff]
    %v3722 = vld [vmem:[#allocation4 + $0x120] sm:$0xff]
    %v3723 = vld [vmem:[#allocation4 + $0x128] sm:$0xff]
    %v3724 = vld [vmem:[#allocation4 + $0x130] sm:$0xff]
    %v3725 = vld [vmem:[#allocation4 + $0x138] sm:$0xff]
    %v3726 = vld [vmem:[#allocation4 + $0x140] sm:$0xff]
    %v3727 = vld [vmem:[#allocation4 + $0x148] sm:$0xff]
    %v3728 = vld [vmem:[#allocation4 + $0x150] sm:$0xff]
    %v3729 = vld [vmem:[#allocation4 + $0x158] sm:$0xff]
    %v3730 = vld [vmem:[#allocation4 + $0x160] sm:$0xff]
    %v3731 = vld [vmem:[#allocation4 + $0x168] sm:$0xff]
    %v3732 = vld [vmem:[#allocation4 + $0x170] sm:$0xff]
    %v3733 = vld [vmem:[#allocation4 + $0x178] sm:$0xff]
    %v3734 = vld [vmem:[#allocation4 + $0x180] sm:$0xff]
    %v3735 = vld [vmem:[#allocation4 + $0x188] sm:$0xff]
    %v3736 = vld [vmem:[#allocation4 + $0x190] sm:$0xff]
    %v3737 = vld [vmem:[#allocation4 + $0x198] sm:$0xff]
    %v3738 = vld [vmem:[#allocation4 + $0x1a0] sm:$0xff]
    %v3739 = vld [vmem:[#allocation4 + $0x1a8] sm:$0xff]
    %v3740 = vld [vmem:[#allocation4 + $0x1b0] sm:$0xff]
    %v3741 = vld [vmem:[#allocation4 + $0x1b8] sm:$0xff]
    %v3742 = vld [vmem:[#allocation4 + $0x1c0] sm:$0xff]
    %v3743 = vld [vmem:[#allocation4 + $0x1c8] sm:$0xff]
    %v3744 = vld [vmem:[#allocation4 + $0x1d0] sm:$0xff]
    %v3745 = vld [vmem:[#allocation4 + $0x1d8] sm:$0xff]
    %v3746 = vld [vmem:[#allocation4 + $0x1e0] sm:$0xff]
    %v3747 = vld [vmem:[#allocation4 + $0x1e8] sm:$0xff]
    %v3748 = vld [vmem:[#allocation4 + $0x1f0] sm:$0xff]
    %v3749 = vld [vmem:[#allocation4 + $0x1f8] sm:$0xff]
    %v3750 = vld [vmem:[#allocation4 + $0x200] sm:$0xff]
    %v3751 = vld [vmem:[#allocation4 + $0x208] sm:$0xff]
    %v3752 = vld [vmem:[#allocation4 + $0x210] sm:$0xff]
    %v3753 = vld [vmem:[#allocation4 + $0x218] sm:$0xff]
    %v3754 = vld [vmem:[#allocation4 + $0x220] sm:$0xff]
    %v3755 = vld [vmem:[#allocation4 + $0x228] sm:$0xff]
    %v3756 = vld [vmem:[#allocation4 + $0x230] sm:$0xff]
    %v3757 = vld [vmem:[#allocation4 + $0x238] sm:$0xff]
    %v3758 = vld [vmem:[#allocation4 + $0x240] sm:$0xff]
    %v3759 = vld [vmem:[#allocation4 + $0x248] sm:$0xff]
    %v3760 = vld [vmem:[#allocation4 + $0x250] sm:$0xff]
    %v3761 = vld [vmem:[#allocation4 + $0x258] sm:$0xff]
    %v3762 = vld [vmem:[#allocation4 + $0x260] sm:$0xff]
    %v3763 = vld [vmem:[#allocation4 + $0x268] sm:$0xff]
    %v3764 = vld [vmem:[#allocation4 + $0x270] sm:$0xff]
    %v3765 = vld [vmem:[#allocation4 + $0x278] sm:$0xff]
    %v3766 = vld [vmem:[#allocation4 + $0x280] sm:$0xff]
    %v3767 = vld [vmem:[#allocation4 + $0x288] sm:$0xff]
    %v3768 = vld [vmem:[#allocation4 + $0x290] sm:$0xff]
    %v3769 = vld [vmem:[#allocation4 + $0x298] sm:$0xff]
    %v3770 = vld [vmem:[#allocation4 + $0x2a0] sm:$0xff]
    %v3771 = vld [vmem:[#allocation4 + $0x2a8] sm:$0xff]
    %v3772 = vld [vmem:[#allocation4 + $0x2b0] sm:$0xff]
    %v3773 = vld [vmem:[#allocation4 + $0x2b8] sm:$0xff]
    %v3774 = vld [vmem:[#allocation4 + $0x2c0] sm:$0xff]
    %v3775 = vld [vmem:[#allocation4 + $0x2c8] sm:$0xff]
    %v3776 = vld [vmem:[#allocation4 + $0x2d0] sm:$0xff]
    %v3777 = vld [vmem:[#allocation4 + $0x2d8] sm:$0xff]
    %v3778 = vld [vmem:[#allocation4 + $0x2e0] sm:$0xff]
    %v3779 = vld [vmem:[#allocation4 + $0x2e8] sm:$0xff]
    %v3780 = vld [vmem:[#allocation4 + $0x2f0] sm:$0xff]
    %v3781 = vld [vmem:[#allocation4 + $0x2f8] sm:$0xff]
    %v3783 = vlaneseq
    %v3784 = vshrl.u32 %v3783, 7
    %v3785 = vsub.s32 0, %v3784
    %v3786 = vrot.slane %v70, %v3785
    %v3787 = vlaneseq
    %v3788 = vshrl.u32 %v3787, 7
    %v3789 = vsub.s32 1, %v3788
    %v3790 = vrot.slane %v70, %v3789
    %v3889 = vunpack.c.l.b16 %v3686
    %v3890 = vunpack.c.h.b16 %v3686
    %v3891 = vunpack.c.l.b16 %v3687
    %v3892 = vunpack.c.h.b16 %v3687
    %v3893 = vunpack.c.l.b16 %v3688
    %v3894 = vunpack.c.h.b16 %v3688
    %v3895 = vunpack.c.l.b16 %v3689
    %v3896 = vunpack.c.h.b16 %v3689
    %v3897 = vunpack.c.l.b16 %v3690
    %v3898 = vunpack.c.h.b16 %v3690
    %v3899 = vunpack.c.l.b16 %v3691
    %v3900 = vunpack.c.h.b16 %v3691
    %v3901 = vunpack.c.l.b16 %v3692
    %v3902 = vunpack.c.h.b16 %v3692
    %v3903 = vunpack.c.l.b16 %v3693
    %v3904 = vunpack.c.h.b16 %v3693
    %v3905 = vunpack.c.l.b16 %v3694
    %v3906 = vunpack.c.h.b16 %v3694
    %v3907 = vunpack.c.l.b16 %v3695
    %v3908 = vunpack.c.h.b16 %v3695
    %v3909 = vunpack.c.l.b16 %v3696
    %v3910 = vunpack.c.h.b16 %v3696
    %v3911 = vunpack.c.l.b16 %v3697
    %v3912 = vunpack.c.h.b16 %v3697
    %v3913 = vunpack.c.l.b16 %v3698
    %v3914 = vunpack.c.h.b16 %v3698
    %v3915 = vunpack.c.l.b16 %v3699
    %v3916 = vunpack.c.h.b16 %v3699
    %v3917 = vunpack.c.l.b16 %v3700
    %v3918 = vunpack.c.h.b16 %v3700
    %v3919 = vunpack.c.l.b16 %v3701
    %v3920 = vunpack.c.h.b16 %v3701
    %v3921 = vunpack.c.l.b16 %v3702
    %v3922 = vunpack.c.h.b16 %v3702
    %v3923 = vunpack.c.l.b16 %v3703
    %v3924 = vunpack.c.h.b16 %v3703
    %v3925 = vunpack.c.l.b16 %v3704
    %v3926 = vunpack.c.h.b16 %v3704
    %v3927 = vunpack.c.l.b16 %v3705
    %v3928 = vunpack.c.h.b16 %v3705
    %v3929 = vunpack.c.l.b16 %v3706
    %v3930 = vunpack.c.h.b16 %v3706
    %v3931 = vunpack.c.l.b16 %v3707
    %v3932 = vunpack.c.h.b16 %v3707
    %v3933 = vunpack.c.l.b16 %v3708
    %v3934 = vunpack.c.h.b16 %v3708
    %v3935 = vunpack.c.l.b16 %v3709
    %v3936 = vunpack.c.h.b16 %v3709
    %v3937 = vunpack.c.l.b16 %v3710
    %v3938 = vunpack.c.h.b16 %v3710
    %v3939 = vunpack.c.l.b16 %v3711
    %v3940 = vunpack.c.h.b16 %v3711
    %v3941 = vunpack.c.l.b16 %v3712
    %v3942 = vunpack.c.h.b16 %v3712
    %v3943 = vunpack.c.l.b16 %v3713
    %v3944 = vunpack.c.h.b16 %v3713
    %v3945 = vunpack.c.l.b16 %v3714
    %v3946 = vunpack.c.h.b16 %v3714
    %v3947 = vunpack.c.l.b16 %v3715
    %v3948 = vunpack.c.h.b16 %v3715
    %v3949 = vunpack.c.l.b16 %v3716
    %v3950 = vunpack.c.h.b16 %v3716
    %v3951 = vunpack.c.l.b16 %v3717
    %v3952 = vunpack.c.h.b16 %v3717
    %v3953 = vunpack.c.l.b16 %v3718
    %v3954 = vunpack.c.h.b16 %v3718
    %v3955 = vunpack.c.l.b16 %v3719
    %v3956 = vunpack.c.h.b16 %v3719
    %v3957 = vunpack.c.l.b16 %v3720
    %v3958 = vunpack.c.h.b16 %v3720
    %v3959 = vunpack.c.l.b16 %v3721
    %v3960 = vunpack.c.h.b16 %v3721
    %v3961 = vunpack.c.l.b16 %v3722
    %v3962 = vunpack.c.h.b16 %v3722
    %v3963 = vunpack.c.l.b16 %v3723
    %v3964 = vunpack.c.h.b16 %v3723
    %v3965 = vunpack.c.l.b16 %v3724
    %v3966 = vunpack.c.h.b16 %v3724
    %v3967 = vunpack.c.l.b16 %v3725
    %v3968 = vunpack.c.h.b16 %v3725
    %v3969 = vunpack.c.l.b16 %v3726
    %v3970 = vunpack.c.h.b16 %v3726
    %v3971 = vunpack.c.l.b16 %v3727
    %v3972 = vunpack.c.h.b16 %v3727
    %v3973 = vunpack.c.l.b16 %v3728
    %v3974 = vunpack.c.h.b16 %v3728
    %v3975 = vunpack.c.l.b16 %v3729
    %v3976 = vunpack.c.h.b16 %v3729
    %v3977 = vunpack.c.l.b16 %v3730
    %v3978 = vunpack.c.h.b16 %v3730
    %v3979 = vunpack.c.l.b16 %v3731
    %v3980 = vunpack.c.h.b16 %v3731
    %v3981 = vunpack.c.l.b16 %v3732
    %v3982 = vunpack.c.h.b16 %v3732
    %v3983 = vunpack.c.l.b16 %v3733
    %v3984 = vunpack.c.h.b16 %v3733
    %v3985 = vunpack.c.l.b16 %v3734
    %v3986 = vunpack.c.h.b16 %v3734
    %v3987 = vunpack.c.l.b16 %v3735
    %v3988 = vunpack.c.h.b16 %v3735
    %v3989 = vunpack.c.l.b16 %v3736
    %v3990 = vunpack.c.h.b16 %v3736
    %v3991 = vunpack.c.l.b16 %v3737
    %v3992 = vunpack.c.h.b16 %v3737
    %v3993 = vunpack.c.l.b16 %v3738
    %v3994 = vunpack.c.h.b16 %v3738
    %v3995 = vunpack.c.l.b16 %v3739
    %v3996 = vunpack.c.h.b16 %v3739
    %v3997 = vunpack.c.l.b16 %v3740
    %v3998 = vunpack.c.h.b16 %v3740
    %v3999 = vunpack.c.l.b16 %v3741
    %v4000 = vunpack.c.h.b16 %v3741
    %v4001 = vunpack.c.l.b16 %v3742
    %v4002 = vunpack.c.h.b16 %v3742
    %v4003 = vunpack.c.l.b16 %v3743
    %v4004 = vunpack.c.h.b16 %v3743
    %v4005 = vunpack.c.l.b16 %v3744
    %v4006 = vunpack.c.h.b16 %v3744
    %v4007 = vunpack.c.l.b16 %v3745
    %v4008 = vunpack.c.h.b16 %v3745
    %v4009 = vunpack.c.l.b16 %v3746
    %v4010 = vunpack.c.h.b16 %v3746
    %v4011 = vunpack.c.l.b16 %v3747
    %v4012 = vunpack.c.h.b16 %v3747
    %v4013 = vunpack.c.l.b16 %v3748
    %v4014 = vunpack.c.h.b16 %v3748
    %v4015 = vunpack.c.l.b16 %v3749
    %v4016 = vunpack.c.h.b16 %v3749
    %v4017 = vunpack.c.l.b16 %v3750
    %v4018 = vunpack.c.h.b16 %v3750
    %v4019 = vunpack.c.l.b16 %v3751
    %v4020 = vunpack.c.h.b16 %v3751
    %v4021 = vunpack.c.l.b16 %v3752
    %v4022 = vunpack.c.h.b16 %v3752
    %v4023 = vunpack.c.l.b16 %v3753
    %v4024 = vunpack.c.h.b16 %v3753
    %v4025 = vunpack.c.l.b16 %v3754
    %v4026 = vunpack.c.h.b16 %v3754
    %v4027 = vunpack.c.l.b16 %v3755
    %v4028 = vunpack.c.h.b16 %v3755
    %v4029 = vunpack.c.l.b16 %v3756
    %v4030 = vunpack.c.h.b16 %v3756
    %v4031 = vunpack.c.l.b16 %v3757
    %v4032 = vunpack.c.h.b16 %v3757
    %v4033 = vunpack.c.l.b16 %v3758
    %v4034 = vunpack.c.h.b16 %v3758
    %v4035 = vunpack.c.l.b16 %v3759
    %v4036 = vunpack.c.h.b16 %v3759
    %v4037 = vunpack.c.l.b16 %v3760
    %v4038 = vunpack.c.h.b16 %v3760
    %v4039 = vunpack.c.l.b16 %v3761
    %v4040 = vunpack.c.h.b16 %v3761
    %v4041 = vunpack.c.l.b16 %v3762
    %v4042 = vunpack.c.h.b16 %v3762
    %v4043 = vunpack.c.l.b16 %v3763
    %v4044 = vunpack.c.h.b16 %v3763
    %v4045 = vunpack.c.l.b16 %v3764
    %v4046 = vunpack.c.h.b16 %v3764
    %v4047 = vunpack.c.l.b16 %v3765
    %v4048 = vunpack.c.h.b16 %v3765
    %v4049 = vunpack.c.l.b16 %v3766
    %v4050 = vunpack.c.h.b16 %v3766
    %v4051 = vunpack.c.l.b16 %v3767
    %v4052 = vunpack.c.h.b16 %v3767
    %v4053 = vunpack.c.l.b16 %v3768
    %v4054 = vunpack.c.h.b16 %v3768
    %v4055 = vunpack.c.l.b16 %v3769
    %v4056 = vunpack.c.h.b16 %v3769
    %v4057 = vunpack.c.l.b16 %v3770
    %v4058 = vunpack.c.h.b16 %v3770
    %v4059 = vunpack.c.l.b16 %v3771
    %v4060 = vunpack.c.h.b16 %v3771
    %v4061 = vunpack.c.l.b16 %v3772
    %v4062 = vunpack.c.h.b16 %v3772
    %v4063 = vunpack.c.l.b16 %v3773
    %v4064 = vunpack.c.h.b16 %v3773
    %v4065 = vunpack.c.l.b16 %v3774
    %v4066 = vunpack.c.h.b16 %v3774
    %v4067 = vunpack.c.l.b16 %v3775
    %v4068 = vunpack.c.h.b16 %v3775
    %v4069 = vunpack.c.l.b16 %v3776
    %v4070 = vunpack.c.h.b16 %v3776
    %v4071 = vunpack.c.l.b16 %v3777
    %v4072 = vunpack.c.h.b16 %v3777
    %v4073 = vunpack.c.l.b16 %v3778
    %v4074 = vunpack.c.h.b16 %v3778
    %v4075 = vunpack.c.l.b16 %v3779
    %v4076 = vunpack.c.h.b16 %v3779
    %v4077 = vunpack.c.l.b16 %v3780
    %v4078 = vunpack.c.h.b16 %v3780
    %v4079 = vunpack.c.l.b16 %v3781
    %v4080 = vunpack.c.h.b16 %v3781
    %v4081 = vpack.c.b16 %v3891, %v3889
    %v4082 = vpack.c.b16 %v3892, %v3890
    %v4083 = vpack.c.b16 %v3895, %v3893
    %v4084 = vpack.c.b16 %v3896, %v3894
    %v4085 = vpack.c.b16 %v3899, %v3897
    %v4086 = vpack.c.b16 %v3900, %v3898
    %v4087 = vpack.c.b16 %v3903, %v3901
    %v4088 = vpack.c.b16 %v3904, %v3902
    %v4089 = vpack.c.b16 %v3907, %v3905
    %v4090 = vpack.c.b16 %v3908, %v3906
    %v4091 = vpack.c.b16 %v3911, %v3909
    %v4092 = vpack.c.b16 %v3912, %v3910
    %v4093 = vpack.c.b16 %v3915, %v3913
    %v4094 = vpack.c.b16 %v3916, %v3914
    %v4095 = vpack.c.b16 %v3919, %v3917
    %v4096 = vpack.c.b16 %v3920, %v3918
    %v4097 = vpack.c.b16 %v3923, %v3921
    %v4098 = vpack.c.b16 %v3924, %v3922
    %v4099 = vpack.c.b16 %v3927, %v3925
    %v4100 = vpack.c.b16 %v3928, %v3926
    %v4101 = vpack.c.b16 %v3931, %v3929
    %v4102 = vpack.c.b16 %v3932, %v3930
    %v4103 = vpack.c.b16 %v3935, %v3933
    %v4104 = vpack.c.b16 %v3936, %v3934
    %v4105 = vpack.c.b16 %v3939, %v3937
    %v4106 = vpack.c.b16 %v3940, %v3938
    %v4107 = vpack.c.b16 %v3943, %v3941
    %v4108 = vpack.c.b16 %v3944, %v3942
    %v4109 = vpack.c.b16 %v3947, %v3945
    %v4110 = vpack.c.b16 %v3948, %v3946
    %v4111 = vpack.c.b16 %v3951, %v3949
    %v4112 = vpack.c.b16 %v3952, %v3950
    %v4113 = vpack.c.b16 %v3955, %v3953
    %v4114 = vpack.c.b16 %v3956, %v3954
    %v4115 = vpack.c.b16 %v3959, %v3957
    %v4116 = vpack.c.b16 %v3960, %v3958
    %v4117 = vpack.c.b16 %v3963, %v3961
    %v4118 = vpack.c.b16 %v3964, %v3962
    %v4119 = vpack.c.b16 %v3967, %v3965
    %v4120 = vpack.c.b16 %v3968, %v3966
    %v4121 = vpack.c.b16 %v3971, %v3969
    %v4122 = vpack.c.b16 %v3972, %v3970
    %v4123 = vpack.c.b16 %v3975, %v3973
    %v4124 = vpack.c.b16 %v3976, %v3974
    %v4125 = vpack.c.b16 %v3979, %v3977
    %v4126 = vpack.c.b16 %v3980, %v3978
    %v4127 = vpack.c.b16 %v3983, %v3981
    %v4128 = vpack.c.b16 %v3984, %v3982
    %v4129 = vpack.c.b16 %v3987, %v3985
    %v4130 = vpack.c.b16 %v3988, %v3986
    %v4131 = vpack.c.b16 %v3991, %v3989
    %v4132 = vpack.c.b16 %v3992, %v3990
    %v4133 = vpack.c.b16 %v3995, %v3993
    %v4134 = vpack.c.b16 %v3996, %v3994
    %v4135 = vpack.c.b16 %v3999, %v3997
    %v4136 = vpack.c.b16 %v4000, %v3998
    %v4137 = vpack.c.b16 %v4003, %v4001
    %v4138 = vpack.c.b16 %v4004, %v4002
    %v4139 = vpack.c.b16 %v4007, %v4005
    %v4140 = vpack.c.b16 %v4008, %v4006
    %v4141 = vpack.c.b16 %v4011, %v4009
    %v4142 = vpack.c.b16 %v4012, %v4010
    %v4143 = vpack.c.b16 %v4015, %v4013
    %v4144 = vpack.c.b16 %v4016, %v4014
    %v4145 = vpack.c.b16 %v4019, %v4017
    %v4146 = vpack.c.b16 %v4020, %v4018
    %v4147 = vpack.c.b16 %v4023, %v4021
    %v4148 = vpack.c.b16 %v4024, %v4022
    %v4149 = vpack.c.b16 %v4027, %v4025
    %v4150 = vpack.c.b16 %v4028, %v4026
    %v4151 = vpack.c.b16 %v4031, %v4029
    %v4152 = vpack.c.b16 %v4032, %v4030
    %v4153 = vpack.c.b16 %v4035, %v4033
    %v4154 = vpack.c.b16 %v4036, %v4034
    %v4155 = vpack.c.b16 %v4039, %v4037
    %v4156 = vpack.c.b16 %v4040, %v4038
    %v4157 = vpack.c.b16 %v4043, %v4041
    %v4158 = vpack.c.b16 %v4044, %v4042
    %v4159 = vpack.c.b16 %v4047, %v4045
    %v4160 = vpack.c.b16 %v4048, %v4046
    %v4161 = vpack.c.b16 %v4051, %v4049
    %v4162 = vpack.c.b16 %v4052, %v4050
    %v4163 = vpack.c.b16 %v4055, %v4053
    %v4164 = vpack.c.b16 %v4056, %v4054
    %v4165 = vpack.c.b16 %v4059, %v4057
    %v4166 = vpack.c.b16 %v4060, %v4058
    %v4167 = vpack.c.b16 %v4063, %v4061
    %v4168 = vpack.c.b16 %v4064, %v4062
    %v4169 = vpack.c.b16 %v4067, %v4065
    %v4170 = vpack.c.b16 %v4068, %v4066
    %v4171 = vpack.c.b16 %v4071, %v4069
    %v4172 = vpack.c.b16 %v4072, %v4070
    %v4173 = vpack.c.b16 %v4075, %v4073
    %v4174 = vpack.c.b16 %v4076, %v4074
    %v4175 = vpack.c.b16 %v4079, %v4077
    %v4176 = vpack.c.b16 %v4080, %v4078
    %4273 = vmatprep.subr.bf16.mxu0 %v4082
    %4274 = vmatpush1.bf16.msra.mxu0 %v4081
    %4275 = vmatprep.subr.bf16.mxu0 %v4084
    %4276 = vmatpush1.bf16.msra.mxu0 %v4083
    %4277 = vmatprep.subr.bf16.mxu0 %v4086
    %4278 = vmatpush1.bf16.msra.mxu0 %v4085
    %4279 = vmatprep.subr.bf16.mxu0 %v4088
    %4280 = vmatpush1.bf16.msra.mxu0 %v4087
    %4281 = vmatprep.subr.bf16.mxu0 %v4090
    %4282 = vmatpush1.bf16.msra.mxu0 %v4089
    %4283 = vmatprep.subr.bf16.mxu0 %v4092
    %4284 = vmatpush1.bf16.msra.mxu0 %v4091
    %4285 = vmatprep.subr.bf16.mxu0 %v4094
    %4286 = vmatpush1.bf16.msra.mxu0 %v4093
    %4287 = vmatprep.subr.bf16.mxu0 %v4096
    %4288 = vmatpush1.bf16.msra.mxu0 %v4095
    %4289 = vmatprep.subr.bf16.mxu0 %v4098
    %4290 = vmatpush1.bf16.msra.mxu0 %v4097
    %4291 = vmatprep.subr.bf16.mxu0 %v4100
    %4292 = vmatpush1.bf16.msra.mxu0 %v4099
    %4293 = vmatprep.subr.bf16.mxu0 %v4102
    %4294 = vmatpush1.bf16.msra.mxu0 %v4101
    %4295 = vmatprep.subr.bf16.mxu0 %v4104
    %4296 = vmatpush1.bf16.msra.mxu0 %v4103
    %4297 = vmatprep.subr.bf16.mxu0 %v4106
    %4298 = vmatpush1.bf16.msra.mxu0 %v4105
    %4299 = vmatprep.subr.bf16.mxu0 %v4108
    %4300 = vmatpush1.bf16.msra.mxu0 %v4107
    %4301 = vmatprep.subr.bf16.mxu0 %v4110
    %4302 = vmatpush1.bf16.msra.mxu0 %v4109
    %4303 = vmatprep.subr.bf16.mxu0 %v4112
    %4304 = vmatpush1.bf16.msra.mxu0 %v4111
    %4305 = vmatprep.mubr.bf16.mxu0 %v3591
    %4306 = vmatmul.mubr.bf16.gmra.mrb[0].mxu0 %v3590
    %v4307 = vpop.f32.mrb[0].mxu0
    %v4308 = vadd.f32 %v3786, %v4307
    %v4309 = vpop.f32.mrb[0].mxu0
    %v4310 = vadd.f32 %v3790, %v4309
    %v4311 = vpop.f32.mrb[0].mxu0
    %v4312 = vadd.f32 %v3786, %v4311
    %v4313 = vpop.f32.mrb[0].mxu0
    %v4314 = vadd.f32 %v3790, %v4313
    %4315 = vmatprep.mubr.bf16.mxu0 %v3597
    %4316 = vmatmul.mubr.bf16.gmra.mrb[0].mxu0 %v3596
    %v4317 = vpop.f32.mrb[0].mxu0
    %v4318 = vadd.f32 %v3786, %v4317
    %v4319 = vpop.f32.mrb[0].mxu0
    %v4320 = vadd.f32 %v3790, %v4319
    %v4321 = vpop.f32.mrb[0].mxu0
    %v4322 = vadd.f32 %v3786, %v4321
    %v4323 = vpop.f32.mrb[0].mxu0
    %v4324 = vadd.f32 %v3790, %v4323
    %4325 = vmatprep.mubr.bf16.mxu0 %v3603
    %4326 = vmatmul.mubr.bf16.gmra.mrb[0].mxu0 %v3602
    %v4327 = vpop.f32.mrb[0].mxu0
    %v4328 = vadd.f32 %v3786, %v4327
    %v4329 = vpop.f32.mrb[0].mxu0
    %v4330 = vadd.f32 %v3790, %v4329
    %v4331 = vpop.f32.mrb[0].mxu0
    %v4332 = vadd.f32 %v3786, %v4331
    %v4333 = vpop.f32.mrb[0].mxu0
    %v4334 = vadd.f32 %v3790, %v4333
    %4335 = vmatprep.mubr.bf16.mxu0 %v3609
    %4336 = vmatmul.mubr.bf16.gmra.mrb[0].mxu0 %v3608
    %v4337 = vpop.f32.mrb[0].mxu0
    %v4338 = vadd.f32 %v3786, %v4337
    %v4339 = vpop.f32.mrb[0].mxu0
    %v4340 = vadd.f32 %v3790, %v4339
    %v4341 = vpop.f32.mrb[0].mxu0
    %v4342 = vadd.f32 %v3786, %v4341
    %v4343 = vpop.f32.mrb[0].mxu0
    %v4344 = vadd.f32 %v3790, %v4343
    %4345 = vmatprep.mubr.bf16.mxu0 %v3615
    %4346 = vmatmul.mubr.bf16.gmra.mrb[0].mxu0 %v3614
    %v4347 = vpop.f32.mrb[0].mxu0
    %v4348 = vadd.f32 %v3786, %v4347
    %v4349 = vpop.f32.mrb[0].mxu0
    %v4350 = vadd.f32 %v3790, %v4349
    %v4351 = vpop.f32.mrb[0].mxu0
    %v4352 = vadd.f32 %v3786, %v4351
    %v4353 = vpop.f32.mrb[0].mxu0
    %v4354 = vadd.f32 %v3790, %v4353
    %4355 = vmatprep.mubr.bf16.mxu0 %v3621
    %4356 = vmatmul.mubr.bf16.gmra.mrb[0].mxu0 %v3620
    %v4357 = vpop.f32.mrb[0].mxu0
    %v4358 = vadd.f32 %v3786, %v4357
    %v4359 = vpop.f32.mrb[0].mxu0
    %v4360 = vadd.f32 %v3790, %v4359
    %v4361 = vpop.f32.mrb[0].mxu0
    %v4362 = vadd.f32 %v3786, %v4361
    %v4363 = vpop.f32.mrb[0].mxu0
    %v4364 = vadd.f32 %v3790, %v4363
    %4365 = vmatprep.mubr.bf16.mxu0 %v3627
    %4366 = vmatmul.mubr.bf16.gmra.mrb[0].mxu0 %v3626
    %v4367 = vpop.f32.mrb[0].mxu0
    %v4368 = vadd.f32 %v3786, %v4367
    %v4369 = vpop.f32.mrb[0].mxu0
    %v4370 = vadd.f32 %v3790, %v4369
    %v4371 = vpop.f32.mrb[0].mxu0
    %v4372 = vadd.f32 %v3786, %v4371
    %v4373 = vpop.f32.mrb[0].mxu0
    %v4374 = vadd.f32 %v3790, %v4373
    %4375 = vmatprep.mubr.bf16.mxu0 %v3633
    %4376 = vmatmul.mubr.bf16.gmra.mrb[0].mxu0 %v3632
    %v4377 = vpop.f32.mrb[0].mxu0
    %v4378 = vadd.f32 %v3786, %v4377
    %v4379 = vpop.f32.mrb[0].mxu0
    %v4380 = vadd.f32 %v3790, %v4379
    %v4381 = vpop.f32.mrb[0].mxu0
    %v4382 = vadd.f32 %v3786, %v4381
    %v4383 = vpop.f32.mrb[0].mxu0
    %v4384 = vadd.f32 %v3790, %v4383
    %4385 = vmatprep.mubr.bf16.mxu0 %v3639
    %4386 = vmatmul.mubr.bf16.gmra.mrb[0].mxu0 %v3638
    %v4387 = vpop.f32.mrb[0].mxu0
    %v4388 = vadd.f32 %v3786, %v4387
    %v4389 = vpop.f32.mrb[0].mxu0
    %v4390 = vadd.f32 %v3790, %v4389
    %v4391 = vpop.f32.mrb[0].mxu0
    %v4392 = vadd.f32 %v3786, %v4391
    %v4393 = vpop.f32.mrb[0].mxu0
    %v4394 = vadd.f32 %v3790, %v4393
    %4395 = vmatprep.mubr.bf16.mxu0 %v3645
    %4396 = vmatmul.mubr.bf16.gmra.mrb[0].mxu0 %v3644
    %v4397 = vpop.f32.mrb[0].mxu0
    %v4398 = vadd.f32 %v3786, %v4397
    %v4399 = vpop.f32.mrb[0].mxu0
    %v4400 = vadd.f32 %v3790, %v4399
    %v4401 = vpop.f32.mrb[0].mxu0
    %v4402 = vadd.f32 %v3786, %v4401
    %v4403 = vpop.f32.mrb[0].mxu0
    %v4404 = vadd.f32 %v3790, %v4403
    %4405 = vmatprep.mubr.bf16.mxu0 %v3651
    %4406 = vmatmul.mubr.bf16.gmra.mrb[0].mxu0 %v3650
    %v4407 = vpop.f32.mrb[0].mxu0
    %v4408 = vadd.f32 %v3786, %v4407
    %v4409 = vpop.f32.mrb[0].mxu0
    %v4410 = vadd.f32 %v3790, %v4409
    %v4411 = vpop.f32.mrb[0].mxu0
    %v4412 = vadd.f32 %v3786, %v4411
    %v4413 = vpop.f32.mrb[0].mxu0
    %v4414 = vadd.f32 %v3790, %v4413
    %4415 = vmatprep.mubr.bf16.mxu0 %v3657
    %4416 = vmatmul.mubr.bf16.gmra.mrb[0].mxu0 %v3656
    %v4417 = vpop.f32.mrb[0].mxu0
    %v4418 = vadd.f32 %v3786, %v4417
    %v4419 = vpop.f32.mrb[0].mxu0
    %v4420 = vadd.f32 %v3790, %v4419
    %v4421 = vpop.f32.mrb[0].mxu0
    %v4422 = vadd.f32 %v3786, %v4421
    %v4423 = vpop.f32.mrb[0].mxu0
    %v4424 = vadd.f32 %v3790, %v4423
    %4425 = vmatprep.mubr.bf16.mxu0 %v3663
    %4426 = vmatmul.mubr.bf16.gmra.mrb[0].mxu0 %v3662
    %v4427 = vpop.f32.mrb[0].mxu0
    %v4428 = vadd.f32 %v3786, %v4427
    %v4429 = vpop.f32.mrb[0].mxu0
    %v4430 = vadd.f32 %v3790, %v4429
    %v4431 = vpop.f32.mrb[0].mxu0
    %v4432 = vadd.f32 %v3786, %v4431
    %v4433 = vpop.f32.mrb[0].mxu0
    %v4434 = vadd.f32 %v3790, %v4433
    %4435 = vmatprep.mubr.bf16.mxu0 %v3669
    %4436 = vmatmul.mubr.bf16.gmra.mrb[0].mxu0 %v3668
    %v4437 = vpop.f32.mrb[0].mxu0
    %v4438 = vadd.f32 %v3786, %v4437
    %v4439 = vpop.f32.mrb[0].mxu0
    %v4440 = vadd.f32 %v3790, %v4439
    %v4441 = vpop.f32.mrb[0].mxu0
    %v4442 = vadd.f32 %v3786, %v4441
    %v4443 = vpop.f32.mrb[0].mxu0
    %v4444 = vadd.f32 %v3790, %v4443
    %4445 = vmatprep.mubr.bf16.mxu0 %v3675
    %4446 = vmatmul.mubr.bf16.gmra.mrb[0].mxu0 %v3674
    %v4447 = vpop.f32.mrb[0].mxu0
    %v4448 = vadd.f32 %v3786, %v4447
    %v4449 = vpop.f32.mrb[0].mxu0
    %v4450 = vadd.f32 %v3790, %v4449
    %v4451 = vpop.f32.mrb[0].mxu0
    %v4452 = vadd.f32 %v3786, %v4451
    %v4453 = vpop.f32.mrb[0].mxu0
    %v4454 = vadd.f32 %v3790, %v4453
    %4455 = vmatprep.mubr.bf16.mxu0 %v3681
    %4456 = vmatmul.mubr.bf16.gmra.mrb[0].mxu0 %v3680
    %v4457 = vpop.f32.mrb[0].mxu0
    %v4458 = vadd.f32 %v3786, %v4457
    %v4459 = vpop.f32.mrb[0].mxu0
    %v4460 = vadd.f32 %v3790, %v4459
    %v4461 = vpop.f32.mrb[0].mxu0
    %v4462 = vadd.f32 %v3786, %v4461
    %v4463 = vpop.f32.mrb[0].mxu0
    %v4464 = vadd.f32 %v3790, %v4463
    %4465 = vdwg.mxu0
    %4466 = vmatprep.subr.bf16.mxu0 %v4114
    %4467 = vmatpush1.bf16.msra.mxu0 %v4113
    %4468 = vmatprep.subr.bf16.mxu0 %v4116
    %4469 = vmatpush1.bf16.msra.mxu0 %v4115
    %4470 = vmatprep.subr.bf16.mxu0 %v4118
    %4471 = vmatpush1.bf16.msra.mxu0 %v4117
    %4472 = vmatprep.subr.bf16.mxu0 %v4120
    %4473 = vmatpush1.bf16.msra.mxu0 %v4119
    %4474 = vmatprep.subr.bf16.mxu0 %v4122
    %4475 = vmatpush1.bf16.msra.mxu0 %v4121
    %4476 = vmatprep.subr.bf16.mxu0 %v4124
    %4477 = vmatpush1.bf16.msra.mxu0 %v4123
    %4478 = vmatprep.subr.bf16.mxu0 %v4126
    %4479 = vmatpush1.bf16.msra.mxu0 %v4125
    %4480 = vmatprep.subr.bf16.mxu0 %v4128
    %4481 = vmatpush1.bf16.msra.mxu0 %v4127
    %4482 = vmatprep.subr.bf16.mxu0 %v4130
    %4483 = vmatpush1.bf16.msra.mxu0 %v4129
    %4484 = vmatprep.subr.bf16.mxu0 %v4132
    %4485 = vmatpush1.bf16.msra.mxu0 %v4131
    %4486 = vmatprep.subr.bf16.mxu0 %v4134
    %4487 = vmatpush1.bf16.msra.mxu0 %v4133
    %4488 = vmatprep.subr.bf16.mxu0 %v4136
    %4489 = vmatpush1.bf16.msra.mxu0 %v4135
    %4490 = vmatprep.subr.bf16.mxu0 %v4138
    %4491 = vmatpush1.bf16.msra.mxu0 %v4137
    %4492 = vmatprep.subr.bf16.mxu0 %v4140
    %4493 = vmatpush1.bf16.msra.mxu0 %v4139
    %4494 = vmatprep.subr.bf16.mxu0 %v4142
    %4495 = vmatpush1.bf16.msra.mxu0 %v4141
    %4496 = vmatprep.subr.bf16.mxu0 %v4144
    %4497 = vmatpush1.bf16.msra.mxu0 %v4143
    %4498 = vmatprep.mubr.bf16.mxu0 %v3593
    %4499 = vmatmul.mubr.bf16.gmra.mrb[0].mxu0 %v3592
    %v4500 = vpop.f32.mrb[0].mxu0
    %v4501 = vadd.f32 %v4308, %v4500
    %v4502 = vpop.f32.mrb[0].mxu0
    %v4503 = vadd.f32 %v4310, %v4502
    %v4504 = vpop.f32.mrb[0].mxu0
    %v4505 = vadd.f32 %v4312, %v4504
    %v4506 = vpop.f32.mrb[0].mxu0
    %v4507 = vadd.f32 %v4314, %v4506
    %4508 = vmatprep.mubr.bf16.mxu0 %v3599
    %4509 = vmatmul.mubr.bf16.gmra.mrb[0].mxu0 %v3598
    %v4510 = vpop.f32.mrb[0].mxu0
    %v4511 = vadd.f32 %v4318, %v4510
    %v4512 = vpop.f32.mrb[0].mxu0
    %v4513 = vadd.f32 %v4320, %v4512
    %v4514 = vpop.f32.mrb[0].mxu0
    %v4515 = vadd.f32 %v4322, %v4514
    %v4516 = vpop.f32.mrb[0].mxu0
    %v4517 = vadd.f32 %v4324, %v4516
    %4518 = vmatprep.mubr.bf16.mxu0 %v3605
    %4519 = vmatmul.mubr.bf16.gmra.mrb[0].mxu0 %v3604
    %v4520 = vpop.f32.mrb[0].mxu0
    %v4521 = vadd.f32 %v4328, %v4520
    %v4522 = vpop.f32.mrb[0].mxu0
    %v4523 = vadd.f32 %v4330, %v4522
    %v4524 = vpop.f32.mrb[0].mxu0
    %v4525 = vadd.f32 %v4332, %v4524
    %v4526 = vpop.f32.mrb[0].mxu0
    %v4527 = vadd.f32 %v4334, %v4526
    %4528 = vmatprep.mubr.bf16.mxu0 %v3611
    %4529 = vmatmul.mubr.bf16.gmra.mrb[0].mxu0 %v3610
    %v4530 = vpop.f32.mrb[0].mxu0
    %v4531 = vadd.f32 %v4338, %v4530
    %v4532 = vpop.f32.mrb[0].mxu0
    %v4533 = vadd.f32 %v4340, %v4532
    %v4534 = vpop.f32.mrb[0].mxu0
    %v4535 = vadd.f32 %v4342, %v4534
    %v4536 = vpop.f32.mrb[0].mxu0
    %v4537 = vadd.f32 %v4344, %v4536
    %4538 = vmatprep.mubr.bf16.mxu0 %v3617
    %4539 = vmatmul.mubr.bf16.gmra.mrb[0].mxu0 %v3616
    %v4540 = vpop.f32.mrb[0].mxu0
    %v4541 = vadd.f32 %v4348, %v4540
    %v4542 = vpop.f32.mrb[0].mxu0
    %v4543 = vadd.f32 %v4350, %v4542
    %v4544 = vpop.f32.mrb[0].mxu0
    %v4545 = vadd.f32 %v4352, %v4544
    %v4546 = vpop.f32.mrb[0].mxu0
    %v4547 = vadd.f32 %v4354, %v4546
    %4548 = vmatprep.mubr.bf16.mxu0 %v3623
    %4549 = vmatmul.mubr.bf16.gmra.mrb[0].mxu0 %v3622
    %v4550 = vpop.f32.mrb[0].mxu0
    %v4551 = vadd.f32 %v4358, %v4550
    %v4552 = vpop.f32.mrb[0].mxu0
    %v4553 = vadd.f32 %v4360, %v4552
    %v4554 = vpop.f32.mrb[0].mxu0
    %v4555 = vadd.f32 %v4362, %v4554
    %v4556 = vpop.f32.mrb[0].mxu0
    %v4557 = vadd.f32 %v4364, %v4556
    %4558 = vmatprep.mubr.bf16.mxu0 %v3629
    %4559 = vmatmul.mubr.bf16.gmra.mrb[0].mxu0 %v3628
    %v4560 = vpop.f32.mrb[0].mxu0
    %v4561 = vadd.f32 %v4368, %v4560
    %v4562 = vpop.f32.mrb[0].mxu0
    %v4563 = vadd.f32 %v4370, %v4562
    %v4564 = vpop.f32.mrb[0].mxu0
    %v4565 = vadd.f32 %v4372, %v4564
    %v4566 = vpop.f32.mrb[0].mxu0
    %v4567 = vadd.f32 %v4374, %v4566
    %4568 = vmatprep.mubr.bf16.mxu0 %v3635
    %4569 = vmatmul.mubr.bf16.gmra.mrb[0].mxu0 %v3634
    %v4570 = vpop.f32.mrb[0].mxu0
    %v4571 = vadd.f32 %v4378, %v4570
    %v4572 = vpop.f32.mrb[0].mxu0
    %v4573 = vadd.f32 %v4380, %v4572
    %v4574 = vpop.f32.mrb[0].mxu0
    %v4575 = vadd.f32 %v4382, %v4574
    %v4576 = vpop.f32.mrb[0].mxu0
    %v4577 = vadd.f32 %v4384, %v4576
    %4578 = vmatprep.mubr.bf16.mxu0 %v3641
    %4579 = vmatmul.mubr.bf16.gmra.mrb[0].mxu0 %v3640
    %v4580 = vpop.f32.mrb[0].mxu0
    %v4581 = vadd.f32 %v4388, %v4580
    %v4582 = vpop.f32.mrb[0].mxu0
    %v4583 = vadd.f32 %v4390, %v4582
    %v4584 = vpop.f32.mrb[0].mxu0
    %v4585 = vadd.f32 %v4392, %v4584
    %v4586 = vpop.f32.mrb[0].mxu0
    %v4587 = vadd.f32 %v4394, %v4586
    %4588 = vmatprep.mubr.bf16.mxu0 %v3647
    %4589 = vmatmul.mubr.bf16.gmra.mrb[0].mxu0 %v3646
    %v4590 = vpop.f32.mrb[0].mxu0
    %v4591 = vadd.f32 %v4398, %v4590
    %v4592 = vpop.f32.mrb[0].mxu0
    %v4593 = vadd.f32 %v4400, %v4592
    %v4594 = vpop.f32.mrb[0].mxu0
    %v4595 = vadd.f32 %v4402, %v4594
    %v4596 = vpop.f32.mrb[0].mxu0
    %v4597 = vadd.f32 %v4404, %v4596
    %4598 = vmatprep.mubr.bf16.mxu0 %v3653
    %4599 = vmatmul.mubr.bf16.gmra.mrb[0].mxu0 %v3652
    %v4600 = vpop.f32.mrb[0].mxu0
    %v4601 = vadd.f32 %v4408, %v4600
    %v4602 = vpop.f32.mrb[0].mxu0
    %v4603 = vadd.f32 %v4410, %v4602
    %v4604 = vpop.f32.mrb[0].mxu0
    %v4605 = vadd.f32 %v4412, %v4604
    %v4606 = vpop.f32.mrb[0].mxu0
    %v4607 = vadd.f32 %v4414, %v4606
    %4608 = vmatprep.mubr.bf16.mxu0 %v3659
    %4609 = vmatmul.mubr.bf16.gmra.mrb[0].mxu0 %v3658
    %v4610 = vpop.f32.mrb[0].mxu0
    %v4611 = vadd.f32 %v4418, %v4610
    %v4612 = vpop.f32.mrb[0].mxu0
    %v4613 = vadd.f32 %v4420, %v4612
    %v4614 = vpop.f32.mrb[0].mxu0
    %v4615 = vadd.f32 %v4422, %v4614
    %v4616 = vpop.f32.mrb[0].mxu0
    %v4617 = vadd.f32 %v4424, %v4616
    %4618 = vmatprep.mubr.bf16.mxu0 %v3665
    %4619 = vmatmul.mubr.bf16.gmra.mrb[0].mxu0 %v3664
    %v4620 = vpop.f32.mrb[0].mxu0
    %v4621 = vadd.f32 %v4428, %v4620
    %v4622 = vpop.f32.mrb[0].mxu0
    %v4623 = vadd.f32 %v4430, %v4622
    %v4624 = vpop.f32.mrb[0].mxu0
    %v4625 = vadd.f32 %v4432, %v4624
    %v4626 = vpop.f32.mrb[0].mxu0
    %v4627 = vadd.f32 %v4434, %v4626
    %4628 = vmatprep.mubr.bf16.mxu0 %v3671
    %4629 = vmatmul.mubr.bf16.gmra.mrb[0].mxu0 %v3670
    %v4630 = vpop.f32.mrb[0].mxu0
    %v4631 = vadd.f32 %v4438, %v4630
    %v4632 = vpop.f32.mrb[0].mxu0
    %v4633 = vadd.f32 %v4440, %v4632
    %v4634 = vpop.f32.mrb[0].mxu0
    %v4635 = vadd.f32 %v4442, %v4634
    %v4636 = vpop.f32.mrb[0].mxu0
    %v4637 = vadd.f32 %v4444, %v4636
    %4638 = vmatprep.mubr.bf16.mxu0 %v3677
    %4639 = vmatmul.mubr.bf16.gmra.mrb[0].mxu0 %v3676
    %v4640 = vpop.f32.mrb[0].mxu0
    %v4641 = vadd.f32 %v4448, %v4640
    %v4642 = vpop.f32.mrb[0].mxu0
    %v4643 = vadd.f32 %v4450, %v4642
    %v4644 = vpop.f32.mrb[0].mxu0
    %v4645 = vadd.f32 %v4452, %v4644
    %v4646 = vpop.f32.mrb[0].mxu0
    %v4647 = vadd.f32 %v4454, %v4646
    %4648 = vmatprep.mubr.bf16.mxu0 %v3683
    %4649 = vmatmul.mubr.bf16.gmra.mrb[0].mxu0 %v3682
    %v4650 = vpop.f32.mrb[0].mxu0
    %v4651 = vadd.f32 %v4458, %v4650
    %v4652 = vpop.f32.mrb[0].mxu0
    %v4653 = vadd.f32 %v4460, %v4652
    %v4654 = vpop.f32.mrb[0].mxu0
    %v4655 = vadd.f32 %v4462, %v4654
    %v4656 = vpop.f32.mrb[0].mxu0
    %v4657 = vadd.f32 %v4464, %v4656
    %4658 = vdwg.mxu0
    %4659 = vmatprep.subr.bf16.mxu0 %v4146
    %4660 = vmatpush1.bf16.msra.mxu0 %v4145
    %4661 = vmatprep.subr.bf16.mxu0 %v4148
    %4662 = vmatpush1.bf16.msra.mxu0 %v4147
    %4663 = vmatprep.subr.bf16.mxu0 %v4150
    %4664 = vmatpush1.bf16.msra.mxu0 %v4149
    %4665 = vmatprep.subr.bf16.mxu0 %v4152
    %4666 = vmatpush1.bf16.msra.mxu0 %v4151
    %4667 = vmatprep.subr.bf16.mxu0 %v4154
    %4668 = vmatpush1.bf16.msra.mxu0 %v4153
    %4669 = vmatprep.subr.bf16.mxu0 %v4156
    %4670 = vmatpush1.bf16.msra.mxu0 %v4155
    %4671 = vmatprep.subr.bf16.mxu0 %v4158
    %4672 = vmatpush1.bf16.msra.mxu0 %v4157
    %4673 = vmatprep.subr.bf16.mxu0 %v4160
    %4674 = vmatpush1.bf16.msra.mxu0 %v4159
    %4675 = vmatprep.subr.bf16.mxu0 %v4162
    %4676 = vmatpush1.bf16.msra.mxu0 %v4161
    %4677 = vmatprep.subr.bf16.mxu0 %v4164
    %4678 = vmatpush1.bf16.msra.mxu0 %v4163
    %4679 = vmatprep.subr.bf16.mxu0 %v4166
    %4680 = vmatpush1.bf16.msra.mxu0 %v4165
    %4681 = vmatprep.subr.bf16.mxu0 %v4168
    %4682 = vmatpush1.bf16.msra.mxu0 %v4167
    %4683 = vmatprep.subr.bf16.mxu0 %v4170
    %4684 = vmatpush1.bf16.msra.mxu0 %v4169
    %4685 = vmatprep.subr.bf16.mxu0 %v4172
    %4686 = vmatpush1.bf16.msra.mxu0 %v4171
    %4687 = vmatprep.subr.bf16.mxu0 %v4174
    %4688 = vmatpush1.bf16.msra.mxu0 %v4173
    %4689 = vmatprep.subr.bf16.mxu0 %v4176
    %4690 = vmatpush1.bf16.msra.mxu0 %v4175
    %4691 = vmatprep.mubr.bf16.mxu0 %v3595
    %4692 = vmatmul.mubr.bf16.gmra.mrb[0].mxu0 %v3594
    %v4693 = vpop.f32.mrb[0].mxu0
    %v4694 = vadd.f32 %v4501, %v4693
    %v4695 = vpop.f32.mrb[0].mxu0
    %v4696 = vadd.f32 %v4503, %v4695
    %v4697 = vpop.f32.mrb[0].mxu0
    %v4698 = vadd.f32 %v4505, %v4697
    %v4699 = vpop.f32.mrb[0].mxu0
    %v4700 = vadd.f32 %v4507, %v4699
    %4701 = vmatprep.mubr.bf16.mxu0 %v3601
    %4702 = vmatmul.mubr.bf16.gmra.mrb[0].mxu0 %v3600
    %v4703 = vpop.f32.mrb[0].mxu0
    %v4704 = vadd.f32 %v4511, %v4703
    %v4705 = vpop.f32.mrb[0].mxu0
    %v4706 = vadd.f32 %v4513, %v4705
    %v4707 = vpop.f32.mrb[0].mxu0
    %v4708 = vadd.f32 %v4515, %v4707
    %v4709 = vpop.f32.mrb[0].mxu0
    %v4710 = vadd.f32 %v4517, %v4709
    %4711 = vmatprep.mubr.bf16.mxu0 %v3607
    %4712 = vmatmul.mubr.bf16.gmra.mrb[0].mxu0 %v3606
    %v4713 = vpop.f32.mrb[0].mxu0
    %v4714 = vadd.f32 %v4521, %v4713
    %v4715 = vpop.f32.mrb[0].mxu0
    %v4716 = vadd.f32 %v4523, %v4715
    %v4717 = vpop.f32.mrb[0].mxu0
    %v4718 = vadd.f32 %v4525, %v4717
    %v4719 = vpop.f32.mrb[0].mxu0
    %v4720 = vadd.f32 %v4527, %v4719
    %4721 = vmatprep.mubr.bf16.mxu0 %v3613
    %4722 = vmatmul.mubr.bf16.gmra.mrb[0].mxu0 %v3612
    %v4723 = vpop.f32.mrb[0].mxu0
    %v4724 = vadd.f32 %v4531, %v4723
    %v4725 = vpop.f32.mrb[0].mxu0
    %v4726 = vadd.f32 %v4533, %v4725
    %v4727 = vpop.f32.mrb[0].mxu0
    %v4728 = vadd.f32 %v4535, %v4727
    %v4729 = vpop.f32.mrb[0].mxu0
    %v4730 = vadd.f32 %v4537, %v4729
    %4731 = vmatprep.mubr.bf16.mxu0 %v3619
    %4732 = vmatmul.mubr.bf16.gmra.mrb[0].mxu0 %v3618
    %v4733 = vpop.f32.mrb[0].mxu0
    %v4734 = vadd.f32 %v4541, %v4733
    %v4735 = vpop.f32.mrb[0].mxu0
    %v4736 = vadd.f32 %v4543, %v4735
    %v4737 = vpop.f32.mrb[0].mxu0
    %v4738 = vadd.f32 %v4545, %v4737
    %v4739 = vpop.f32.mrb[0].mxu0
    %v4740 = vadd.f32 %v4547, %v4739
    %4741 = vmatprep.mubr.bf16.mxu0 %v3625
    %4742 = vmatmul.mubr.bf16.gmra.mrb[0].mxu0 %v3624
    %v4743 = vpop.f32.mrb[0].mxu0
    %v4744 = vadd.f32 %v4551, %v4743
    %v4745 = vpop.f32.mrb[0].mxu0
    %v4746 = vadd.f32 %v4553, %v4745
    %v4747 = vpop.f32.mrb[0].mxu0
    %v4748 = vadd.f32 %v4555, %v4747
    %v4749 = vpop.f32.mrb[0].mxu0
    %v4750 = vadd.f32 %v4557, %v4749
    %4751 = vmatprep.mubr.bf16.mxu0 %v3631
    %4752 = vmatmul.mubr.bf16.gmra.mrb[0].mxu0 %v3630
    %v4753 = vpop.f32.mrb[0].mxu0
    %v4754 = vadd.f32 %v4561, %v4753
    %v4755 = vpop.f32.mrb[0].mxu0
    %v4756 = vadd.f32 %v4563, %v4755
    %v4757 = vpop.f32.mrb[0].mxu0
    %v4758 = vadd.f32 %v4565, %v4757
    %v4759 = vpop.f32.mrb[0].mxu0
    %v4760 = vadd.f32 %v4567, %v4759
    %4761 = vmatprep.mubr.bf16.mxu0 %v3637
    %4762 = vmatmul.mubr.bf16.gmra.mrb[0].mxu0 %v3636
    %v4763 = vpop.f32.mrb[0].mxu0
    %v4764 = vadd.f32 %v4571, %v4763
    %v4765 = vpop.f32.mrb[0].mxu0
    %v4766 = vadd.f32 %v4573, %v4765
    %v4767 = vpop.f32.mrb[0].mxu0
    %v4768 = vadd.f32 %v4575, %v4767
    %v4769 = vpop.f32.mrb[0].mxu0
    %v4770 = vadd.f32 %v4577, %v4769
    %4771 = vmatprep.mubr.bf16.mxu0 %v3643
    %4772 = vmatmul.mubr.bf16.gmra.mrb[0].mxu0 %v3642
    %v4773 = vpop.f32.mrb[0].mxu0
    %v4774 = vadd.f32 %v4581, %v4773
    %v4775 = vpop.f32.mrb[0].mxu0
    %v4776 = vadd.f32 %v4583, %v4775
    %v4777 = vpop.f32.mrb[0].mxu0
    %v4778 = vadd.f32 %v4585, %v4777
    %v4779 = vpop.f32.mrb[0].mxu0
    %v4780 = vadd.f32 %v4587, %v4779
    %4781 = vmatprep.mubr.bf16.mxu0 %v3649
    %4782 = vmatmul.mubr.bf16.gmra.mrb[0].mxu0 %v3648
    %v4783 = vpop.f32.mrb[0].mxu0
    %v4784 = vadd.f32 %v4591, %v4783
    %v4785 = vpop.f32.mrb[0].mxu0
    %v4786 = vadd.f32 %v4593, %v4785
    %v4787 = vpop.f32.mrb[0].mxu0
    %v4788 = vadd.f32 %v4595, %v4787
    %v4789 = vpop.f32.mrb[0].mxu0
    %v4790 = vadd.f32 %v4597, %v4789
    %4791 = vmatprep.mubr.bf16.mxu0 %v3655
    %4792 = vmatmul.mubr.bf16.gmra.mrb[0].mxu0 %v3654
    %v4793 = vpop.f32.mrb[0].mxu0
    %v4794 = vadd.f32 %v4601, %v4793
    %v4795 = vpop.f32.mrb[0].mxu0
    %v4796 = vadd.f32 %v4603, %v4795
    %v4797 = vpop.f32.mrb[0].mxu0
    %v4798 = vadd.f32 %v4605, %v4797
    %v4799 = vpop.f32.mrb[0].mxu0
    %v4800 = vadd.f32 %v4607, %v4799
    %4801 = vmatprep.mubr.bf16.mxu0 %v3661
    %4802 = vmatmul.mubr.bf16.gmra.mrb[0].mxu0 %v3660
    %v4803 = vpop.f32.mrb[0].mxu0
    %v4804 = vadd.f32 %v4611, %v4803
    %v4805 = vpop.f32.mrb[0].mxu0
    %v4806 = vadd.f32 %v4613, %v4805
    %v4807 = vpop.f32.mrb[0].mxu0
    %v4808 = vadd.f32 %v4615, %v4807
    %v4809 = vpop.f32.mrb[0].mxu0
    %v4810 = vadd.f32 %v4617, %v4809
    %4811 = vmatprep.mubr.bf16.mxu0 %v3667
    %4812 = vmatmul.mubr.bf16.gmra.mrb[0].mxu0 %v3666
    %v4813 = vpop.f32.mrb[0].mxu0
    %v4814 = vadd.f32 %v4621, %v4813
    %v4815 = vpop.f32.mrb[0].mxu0
    %v4816 = vadd.f32 %v4623, %v4815
    %v4817 = vpop.f32.mrb[0].mxu0
    %v4818 = vadd.f32 %v4625, %v4817
    %v4819 = vpop.f32.mrb[0].mxu0
    %v4820 = vadd.f32 %v4627, %v4819
    %4821 = vmatprep.mubr.bf16.mxu0 %v3673
    %4822 = vmatmul.mubr.bf16.gmra.mrb[0].mxu0 %v3672
    %v4823 = vpop.f32.mrb[0].mxu0
    %v4824 = vadd.f32 %v4631, %v4823
    %v4825 = vpop.f32.mrb[0].mxu0
    %v4826 = vadd.f32 %v4633, %v4825
    %v4827 = vpop.f32.mrb[0].mxu0
    %v4828 = vadd.f32 %v4635, %v4827
    %v4829 = vpop.f32.mrb[0].mxu0
    %v4830 = vadd.f32 %v4637, %v4829
    %4831 = vmatprep.mubr.bf16.mxu0 %v3679
    %4832 = vmatmul.mubr.bf16.gmra.mrb[0].mxu0 %v3678
    %v4833 = vpop.f32.mrb[0].mxu0
    %v4834 = vadd.f32 %v4641, %v4833
    %v4835 = vpop.f32.mrb[0].mxu0
    %v4836 = vadd.f32 %v4643, %v4835
    %v4837 = vpop.f32.mrb[0].mxu0
    %v4838 = vadd.f32 %v4645, %v4837
    %v4839 = vpop.f32.mrb[0].mxu0
    %v4840 = vadd.f32 %v4647, %v4839
    %4841 = vmatprep.mubr.bf16.mxu0 %v3685
    %4842 = vmatmul.mubr.bf16.gmra.mrb[0].mxu0 %v3684
    %v4843 = vpop.f32.mrb[0].mxu0
    %v4844 = vadd.f32 %v4651, %v4843
    %v4845 = vpop.f32.mrb[0].mxu0
    %v4846 = vadd.f32 %v4653, %v4845
    %v4847 = vpop.f32.mrb[0].mxu0
    %v4848 = vadd.f32 %v4655, %v4847
    %v4849 = vpop.f32.mrb[0].mxu0
    %v4850 = vadd.f32 %v4657, %v4849
    %4851 = vdwg.mxu0
    %v4852 = vmax.f32 %v4694, 0.0
    %v4853 = vmax.f32 %v4696, 0.0
    %v4854 = vmax.f32 %v4698, 0.0
    %v4855 = vmax.f32 %v4700, 0.0
    %v4856 = vmax.f32 %v4704, 0.0
    %v4857 = vmax.f32 %v4706, 0.0
    %v4858 = vmax.f32 %v4708, 0.0
    %v4859 = vmax.f32 %v4710, 0.0
    %v4860 = vmax.f32 %v4714, 0.0
    %v4861 = vmax.f32 %v4716, 0.0
    %v4862 = vmax.f32 %v4718, 0.0
    %v4863 = vmax.f32 %v4720, 0.0
    %v4864 = vmax.f32 %v4724, 0.0
    %v4865 = vmax.f32 %v4726, 0.0
    %v4866 = vmax.f32 %v4728, 0.0
    %v4867 = vmax.f32 %v4730, 0.0
    %v4868 = vmax.f32 %v4734, 0.0
    %v4869 = vmax.f32 %v4736, 0.0
    %v4870 = vmax.f32 %v4738, 0.0
    %v4871 = vmax.f32 %v4740, 0.0
    %v4872 = vmax.f32 %v4744, 0.0
    %v4873 = vmax.f32 %v4746, 0.0
    %v4874 = vmax.f32 %v4748, 0.0
    %v4875 = vmax.f32 %v4750, 0.0
    %v4876 = vmax.f32 %v4754, 0.0
    %v4877 = vmax.f32 %v4756, 0.0
    %v4878 = vmax.f32 %v4758, 0.0
    %v4879 = vmax.f32 %v4760, 0.0
    %v4880 = vmax.f32 %v4764, 0.0
    %v4881 = vmax.f32 %v4766, 0.0
    %v4882 = vmax.f32 %v4768, 0.0
    %v4883 = vmax.f32 %v4770, 0.0
    %v4884 = vmax.f32 %v4774, 0.0
    %v4885 = vmax.f32 %v4776, 0.0
    %v4886 = vmax.f32 %v4778, 0.0
    %v4887 = vmax.f32 %v4780, 0.0
    %v4888 = vmax.f32 %v4784, 0.0
    %v4889 = vmax.f32 %v4786, 0.0
    %v4890 = vmax.f32 %v4788, 0.0
    %v4891 = vmax.f32 %v4790, 0.0
    %v4892 = vmax.f32 %v4794, 0.0
    %v4893 = vmax.f32 %v4796, 0.0
    %v4894 = vmax.f32 %v4798, 0.0
    %v4895 = vmax.f32 %v4800, 0.0
    %v4896 = vmax.f32 %v4804, 0.0
    %v4897 = vmax.f32 %v4806, 0.0
    %v4898 = vmax.f32 %v4808, 0.0
    %v4899 = vmax.f32 %v4810, 0.0
    %v4900 = vmax.f32 %v4814, 0.0
    %v4901 = vmax.f32 %v4816, 0.0
    %v4902 = vmax.f32 %v4818, 0.0
    %v4903 = vmax.f32 %v4820, 0.0
    %v4904 = vmax.f32 %v4824, 0.0
    %v4905 = vmax.f32 %v4826, 0.0
    %v4906 = vmax.f32 %v4828, 0.0
    %v4907 = vmax.f32 %v4830, 0.0
    %v4908 = vmax.f32 %v4834, 0.0
    %v4909 = vmax.f32 %v4836, 0.0
    %v4910 = vmax.f32 %v4838, 0.0
    %v4911 = vmax.f32 %v4840, 0.0
    %v4912 = vmax.f32 %v4844, 0.0
    %v4913 = vmax.f32 %v4846, 0.0
    %v4914 = vmax.f32 %v4848, 0.0
    %v4915 = vmax.f32 %v4850, 0.0
    %v4916 = vpack.c.bf16 %v4854, %v4852
    %v4917 = vpack.c.bf16 %v4855, %v4853
    %v4918 = vpack.c.bf16 %v4858, %v4856
    %v4919 = vpack.c.bf16 %v4859, %v4857
    %v4920 = vpack.c.bf16 %v4862, %v4860
    %v4921 = vpack.c.bf16 %v4863, %v4861
    %v4922 = vpack.c.bf16 %v4866, %v4864
    %v4923 = vpack.c.bf16 %v4867, %v4865
    %v4924 = vpack.c.bf16 %v4870, %v4868
    %v4925 = vpack.c.bf16 %v4871, %v4869
    %v4926 = vpack.c.bf16 %v4874, %v4872
    %v4927 = vpack.c.bf16 %v4875, %v4873
    %v4928 = vpack.c.bf16 %v4878, %v4876
    %v4929 = vpack.c.bf16 %v4879, %v4877
    %v4930 = vpack.c.bf16 %v4882, %v4880
    %v4931 = vpack.c.bf16 %v4883, %v4881
    %v4932 = vpack.c.bf16 %v4886, %v4884
    %v4933 = vpack.c.bf16 %v4887, %v4885
    %v4934 = vpack.c.bf16 %v4890, %v4888
    %v4935 = vpack.c.bf16 %v4891, %v4889
    %v4936 = vpack.c.bf16 %v4894, %v4892
    %v4937 = vpack.c.bf16 %v4895, %v4893
    %v4938 = vpack.c.bf16 %v4898, %v4896
    %v4939 = vpack.c.bf16 %v4899, %v4897
    %v4940 = vpack.c.bf16 %v4902, %v4900
    %v4941 = vpack.c.bf16 %v4903, %v4901
    %v4942 = vpack.c.bf16 %v4906, %v4904
    %v4943 = vpack.c.bf16 %v4907, %v4905
    %v4944 = vpack.c.bf16 %v4910, %v4908
    %v4945 = vpack.c.bf16 %v4911, %v4909
    %v4946 = vpack.c.bf16 %v4914, %v4912
    %v4947 = vpack.c.bf16 %v4915, %v4913
    %v4948 = vld [vmem:[#allocation6] sm:$0xff]
    %v4949 = vld [vmem:[#allocation6 + $0x8] sm:$0xff]
    %v4950 = vld [vmem:[#allocation6 + $0x10] sm:$0xff]
    %v4951 = vld [vmem:[#allocation6 + $0x18] sm:$0xff]
    %v4952 = vld [vmem:[#allocation6 + $0x20] sm:$0xff]
    %v4953 = vld [vmem:[#allocation6 + $0x28] sm:$0xff]
    %v4954 = vld [vmem:[#allocation6 + $0x30] sm:$0xff]
    %v4955 = vld [vmem:[#allocation6 + $0x38] sm:$0xff]
    %v4956 = vld [vmem:[#allocation6 + $0x40] sm:$0xff]
    %v4957 = vld [vmem:[#allocation6 + $0x48] sm:$0xff]
    %v4958 = vld [vmem:[#allocation6 + $0x50] sm:$0xff]
    %v4959 = vld [vmem:[#allocation6 + $0x58] sm:$0xff]
    %v4960 = vld [vmem:[#allocation6 + $0x60] sm:$0xff]
    %v4961 = vld [vmem:[#allocation6 + $0x68] sm:$0xff]
    %v4962 = vld [vmem:[#allocation6 + $0x70] sm:$0xff]
    %v4963 = vld [vmem:[#allocation6 + $0x78] sm:$0xff]
    %v4964 = vld [vmem:[#allocation6 + $0x80] sm:$0xff]
    %v4965 = vld [vmem:[#allocation6 + $0x88] sm:$0xff]
    %v4966 = vld [vmem:[#allocation6 + $0x90] sm:$0xff]
    %v4967 = vld [vmem:[#allocation6 + $0x98] sm:$0xff]
    %v4968 = vld [vmem:[#allocation6 + $0xa0] sm:$0xff]
    %v4969 = vld [vmem:[#allocation6 + $0xa8] sm:$0xff]
    %v4970 = vld [vmem:[#allocation6 + $0xb0] sm:$0xff]
    %v4971 = vld [vmem:[#allocation6 + $0xb8] sm:$0xff]
    %v4972 = vld [vmem:[#allocation6 + $0xc0] sm:$0xff]
    %v4973 = vld [vmem:[#allocation6 + $0xc8] sm:$0xff]
    %v4974 = vld [vmem:[#allocation6 + $0xd0] sm:$0xff]
    %v4975 = vld [vmem:[#allocation6 + $0xd8] sm:$0xff]
    %v4976 = vld [vmem:[#allocation6 + $0xe0] sm:$0xff]
    %v4977 = vld [vmem:[#allocation6 + $0xe8] sm:$0xff]
    %v4978 = vld [vmem:[#allocation6 + $0xf0] sm:$0xff]
    %v4979 = vld [vmem:[#allocation6 + $0xf8] sm:$0xff]
    %v4981 = vlaneseq
    %v4982 = vshrl.u32 %v4981, 7
    %v4983 = vsub.s32 0, %v4982
    %v4984 = vrot.slane %v71, %v4983
    %v4985 = vlaneseq
    %v4986 = vshrl.u32 %v4985, 7
    %v4987 = vsub.s32 1, %v4986
    %v4988 = vrot.slane %v71, %v4987
    %v5023 = vunpack.c.l.b16 %v4948
    %v5024 = vunpack.c.h.b16 %v4948
    %v5025 = vunpack.c.l.b16 %v4949
    %v5026 = vunpack.c.h.b16 %v4949
    %v5027 = vunpack.c.l.b16 %v4950
    %v5028 = vunpack.c.h.b16 %v4950
    %v5029 = vunpack.c.l.b16 %v4951
    %v5030 = vunpack.c.h.b16 %v4951
    %v5031 = vunpack.c.l.b16 %v4952
    %v5032 = vunpack.c.h.b16 %v4952
    %v5033 = vunpack.c.l.b16 %v4953
    %v5034 = vunpack.c.h.b16 %v4953
    %v5035 = vunpack.c.l.b16 %v4954
    %v5036 = vunpack.c.h.b16 %v4954
    %v5037 = vunpack.c.l.b16 %v4955
    %v5038 = vunpack.c.h.b16 %v4955
    %v5039 = vunpack.c.l.b16 %v4956
    %v5040 = vunpack.c.h.b16 %v4956
    %v5041 = vunpack.c.l.b16 %v4957
    %v5042 = vunpack.c.h.b16 %v4957
    %v5043 = vunpack.c.l.b16 %v4958
    %v5044 = vunpack.c.h.b16 %v4958
    %v5045 = vunpack.c.l.b16 %v4959
    %v5046 = vunpack.c.h.b16 %v4959
    %v5047 = vunpack.c.l.b16 %v4960
    %v5048 = vunpack.c.h.b16 %v4960
    %v5049 = vunpack.c.l.b16 %v4961
    %v5050 = vunpack.c.h.b16 %v4961
    %v5051 = vunpack.c.l.b16 %v4962
    %v5052 = vunpack.c.h.b16 %v4962
    %v5053 = vunpack.c.l.b16 %v4963
    %v5054 = vunpack.c.h.b16 %v4963
    %v5055 = vunpack.c.l.b16 %v4964
    %v5056 = vunpack.c.h.b16 %v4964
    %v5057 = vunpack.c.l.b16 %v4965
    %v5058 = vunpack.c.h.b16 %v4965
    %v5059 = vunpack.c.l.b16 %v4966
    %v5060 = vunpack.c.h.b16 %v4966
    %v5061 = vunpack.c.l.b16 %v4967
    %v5062 = vunpack.c.h.b16 %v4967
    %v5063 = vunpack.c.l.b16 %v4968
    %v5064 = vunpack.c.h.b16 %v4968
    %v5065 = vunpack.c.l.b16 %v4969
    %v5066 = vunpack.c.h.b16 %v4969
    %v5067 = vunpack.c.l.b16 %v4970
    %v5068 = vunpack.c.h.b16 %v4970
    %v5069 = vunpack.c.l.b16 %v4971
    %v5070 = vunpack.c.h.b16 %v4971
    %v5071 = vunpack.c.l.b16 %v4972
    %v5072 = vunpack.c.h.b16 %v4972
    %v5073 = vunpack.c.l.b16 %v4973
    %v5074 = vunpack.c.h.b16 %v4973
    %v5075 = vunpack.c.l.b16 %v4974
    %v5076 = vunpack.c.h.b16 %v4974
    %v5077 = vunpack.c.l.b16 %v4975
    %v5078 = vunpack.c.h.b16 %v4975
    %v5079 = vunpack.c.l.b16 %v4976
    %v5080 = vunpack.c.h.b16 %v4976
    %v5081 = vunpack.c.l.b16 %v4977
    %v5082 = vunpack.c.h.b16 %v4977
    %v5083 = vunpack.c.l.b16 %v4978
    %v5084 = vunpack.c.h.b16 %v4978
    %v5085 = vunpack.c.l.b16 %v4979
    %v5086 = vunpack.c.h.b16 %v4979
    %v5087 = vpack.c.b16 %v5025, %v5023
    %v5088 = vpack.c.b16 %v5026, %v5024
    %v5089 = vpack.c.b16 %v5029, %v5027
    %v5090 = vpack.c.b16 %v5030, %v5028
    %v5091 = vpack.c.b16 %v5033, %v5031
    %v5092 = vpack.c.b16 %v5034, %v5032
    %v5093 = vpack.c.b16 %v5037, %v5035
    %v5094 = vpack.c.b16 %v5038, %v5036
    %v5095 = vpack.c.b16 %v5041, %v5039
    %v5096 = vpack.c.b16 %v5042, %v5040
    %v5097 = vpack.c.b16 %v5045, %v5043
    %v5098 = vpack.c.b16 %v5046, %v5044
    %v5099 = vpack.c.b16 %v5049, %v5047
    %v5100 = vpack.c.b16 %v5050, %v5048
    %v5101 = vpack.c.b16 %v5053, %v5051
    %v5102 = vpack.c.b16 %v5054, %v5052
    %v5103 = vpack.c.b16 %v5057, %v5055
    %v5104 = vpack.c.b16 %v5058, %v5056
    %v5105 = vpack.c.b16 %v5061, %v5059
    %v5106 = vpack.c.b16 %v5062, %v5060
    %v5107 = vpack.c.b16 %v5065, %v5063
    %v5108 = vpack.c.b16 %v5066, %v5064
    %v5109 = vpack.c.b16 %v5069, %v5067
    %v5110 = vpack.c.b16 %v5070, %v5068
    %v5111 = vpack.c.b16 %v5073, %v5071
    %v5112 = vpack.c.b16 %v5074, %v5072
    %v5113 = vpack.c.b16 %v5077, %v5075
    %v5114 = vpack.c.b16 %v5078, %v5076
    %v5115 = vpack.c.b16 %v5081, %v5079
    %v5116 = vpack.c.b16 %v5082, %v5080
    %v5117 = vpack.c.b16 %v5085, %v5083
    %v5118 = vpack.c.b16 %v5086, %v5084
    %5151 = vmatprep.subr.bf16.mxu0 %v5088
    %5152 = vmatpush1.bf16.msra.mxu0 %v5087
    %5153 = vmatprep.subr.bf16.mxu0 %v5090
    %5154 = vmatpush1.bf16.msra.mxu0 %v5089
    %5155 = vmatprep.subr.bf16.mxu0 %v5092
    %5156 = vmatpush1.bf16.msra.mxu0 %v5091
    %5157 = vmatprep.subr.bf16.mxu0 %v5094
    %5158 = vmatpush1.bf16.msra.mxu0 %v5093
    %5159 = vmatprep.subr.bf16.mxu0 %v5096
    %5160 = vmatpush1.bf16.msra.mxu0 %v5095
    %5161 = vmatprep.subr.bf16.mxu0 %v5098
    %5162 = vmatpush1.bf16.msra.mxu0 %v5097
    %5163 = vmatprep.subr.bf16.mxu0 %v5100
    %5164 = vmatpush1.bf16.msra.mxu0 %v5099
    %5165 = vmatprep.subr.bf16.mxu0 %v5102
    %5166 = vmatpush1.bf16.msra.mxu0 %v5101
    %5167 = vmatprep.subr.bf16.mxu0 %v5104
    %5168 = vmatpush1.bf16.msra.mxu0 %v5103
    %5169 = vmatprep.subr.bf16.mxu0 %v5106
    %5170 = vmatpush1.bf16.msra.mxu0 %v5105
    %5171 = vmatprep.subr.bf16.mxu0 %v5108
    %5172 = vmatpush1.bf16.msra.mxu0 %v5107
    %5173 = vmatprep.subr.bf16.mxu0 %v5110
    %5174 = vmatpush1.bf16.msra.mxu0 %v5109
    %5175 = vmatprep.subr.bf16.mxu0 %v5112
    %5176 = vmatpush1.bf16.msra.mxu0 %v5111
    %5177 = vmatprep.subr.bf16.mxu0 %v5114
    %5178 = vmatpush1.bf16.msra.mxu0 %v5113
    %5179 = vmatprep.subr.bf16.mxu0 %v5116
    %5180 = vmatpush1.bf16.msra.mxu0 %v5115
    %5181 = vmatprep.subr.bf16.mxu0 %v5118
    %5182 = vmatpush1.bf16.msra.mxu0 %v5117
    %5183 = vmatprep.mubr.bf16.mxu0 %v4917
    %5184 = vmatmul.mubr.bf16.gmra.mrb[0].mxu0 %v4916
    %v5185 = vpop.f32.mrb[0].mxu0
    %v5186 = vadd.f32 %v4984, %v5185
    %v5187 = vpop.f32.mrb[0].mxu0
    %v5188 = vadd.f32 %v4988, %v5187
    %v5189 = vpop.f32.mrb[0].mxu0
    %v5190 = vadd.f32 %v4984, %v5189
    %v5191 = vpop.f32.mrb[0].mxu0
    %v5192 = vadd.f32 %v4988, %v5191
    %5193 = vmatprep.mubr.bf16.mxu0 %v4919
    %5194 = vmatmul.mubr.bf16.gmra.mrb[0].mxu0 %v4918
    %v5195 = vpop.f32.mrb[0].mxu0
    %v5196 = vadd.f32 %v4984, %v5195
    %v5197 = vpop.f32.mrb[0].mxu0
    %v5198 = vadd.f32 %v4988, %v5197
    %v5199 = vpop.f32.mrb[0].mxu0
    %v5200 = vadd.f32 %v4984, %v5199
    %v5201 = vpop.f32.mrb[0].mxu0
    %v5202 = vadd.f32 %v4988, %v5201
    %5203 = vmatprep.mubr.bf16.mxu0 %v4921
    %5204 = vmatmul.mubr.bf16.gmra.mrb[0].mxu0 %v4920
    %v5205 = vpop.f32.mrb[0].mxu0
    %v5206 = vadd.f32 %v4984, %v5205
    %v5207 = vpop.f32.mrb[0].mxu0
    %v5208 = vadd.f32 %v4988, %v5207
    %v5209 = vpop.f32.mrb[0].mxu0
    %v5210 = vadd.f32 %v4984, %v5209
    %v5211 = vpop.f32.mrb[0].mxu0
    %v5212 = vadd.f32 %v4988, %v5211
    %5213 = vmatprep.mubr.bf16.mxu0 %v4923
    %5214 = vmatmul.mubr.bf16.gmra.mrb[0].mxu0 %v4922
    %v5215 = vpop.f32.mrb[0].mxu0
    %v5216 = vadd.f32 %v4984, %v5215
    %v5217 = vpop.f32.mrb[0].mxu0
    %v5218 = vadd.f32 %v4988, %v5217
    %v5219 = vpop.f32.mrb[0].mxu0
    %v5220 = vadd.f32 %v4984, %v5219
    %v5221 = vpop.f32.mrb[0].mxu0
    %v5222 = vadd.f32 %v4988, %v5221
    %5223 = vmatprep.mubr.bf16.mxu0 %v4925
    %5224 = vmatmul.mubr.bf16.gmra.mrb[0].mxu0 %v4924
    %v5225 = vpop.f32.mrb[0].mxu0
    %v5226 = vadd.f32 %v4984, %v5225
    %v5227 = vpop.f32.mrb[0].mxu0
    %v5228 = vadd.f32 %v4988, %v5227
    %v5229 = vpop.f32.mrb[0].mxu0
    %v5230 = vadd.f32 %v4984, %v5229
    %v5231 = vpop.f32.mrb[0].mxu0
    %v5232 = vadd.f32 %v4988, %v5231
    %5233 = vmatprep.mubr.bf16.mxu0 %v4927
    %5234 = vmatmul.mubr.bf16.gmra.mrb[0].mxu0 %v4926
    %v5235 = vpop.f32.mrb[0].mxu0
    %v5236 = vadd.f32 %v4984, %v5235
    %v5237 = vpop.f32.mrb[0].mxu0
    %v5238 = vadd.f32 %v4988, %v5237
    %v5239 = vpop.f32.mrb[0].mxu0
    %v5240 = vadd.f32 %v4984, %v5239
    %v5241 = vpop.f32.mrb[0].mxu0
    %v5242 = vadd.f32 %v4988, %v5241
    %5243 = vmatprep.mubr.bf16.mxu0 %v4929
    %5244 = vmatmul.mubr.bf16.gmra.mrb[0].mxu0 %v4928
    %v5245 = vpop.f32.mrb[0].mxu0
    %v5246 = vadd.f32 %v4984, %v5245
    %v5247 = vpop.f32.mrb[0].mxu0
    %v5248 = vadd.f32 %v4988, %v5247
    %v5249 = vpop.f32.mrb[0].mxu0
    %v5250 = vadd.f32 %v4984, %v5249
    %v5251 = vpop.f32.mrb[0].mxu0
    %v5252 = vadd.f32 %v4988, %v5251
    %5253 = vmatprep.mubr.bf16.mxu0 %v4931
    %5254 = vmatmul.mubr.bf16.gmra.mrb[0].mxu0 %v4930
    %v5255 = vpop.f32.mrb[0].mxu0
    %v5256 = vadd.f32 %v4984, %v5255
    %v5257 = vpop.f32.mrb[0].mxu0
    %v5258 = vadd.f32 %v4988, %v5257
    %v5259 = vpop.f32.mrb[0].mxu0
    %v5260 = vadd.f32 %v4984, %v5259
    %v5261 = vpop.f32.mrb[0].mxu0
    %v5262 = vadd.f32 %v4988, %v5261
    %5263 = vmatprep.mubr.bf16.mxu0 %v4933
    %5264 = vmatmul.mubr.bf16.gmra.mrb[0].mxu0 %v4932
    %v5265 = vpop.f32.mrb[0].mxu0
    %v5266 = vadd.f32 %v4984, %v5265
    %v5267 = vpop.f32.mrb[0].mxu0
    %v5268 = vadd.f32 %v4988, %v5267
    %v5269 = vpop.f32.mrb[0].mxu0
    %v5270 = vadd.f32 %v4984, %v5269
    %v5271 = vpop.f32.mrb[0].mxu0
    %v5272 = vadd.f32 %v4988, %v5271
    %5273 = vmatprep.mubr.bf16.mxu0 %v4935
    %5274 = vmatmul.mubr.bf16.gmra.mrb[0].mxu0 %v4934
    %v5275 = vpop.f32.mrb[0].mxu0
    %v5276 = vadd.f32 %v4984, %v5275
    %v5277 = vpop.f32.mrb[0].mxu0
    %v5278 = vadd.f32 %v4988, %v5277
    %v5279 = vpop.f32.mrb[0].mxu0
    %v5280 = vadd.f32 %v4984, %v5279
    %v5281 = vpop.f32.mrb[0].mxu0
    %v5282 = vadd.f32 %v4988, %v5281
    %5283 = vmatprep.mubr.bf16.mxu0 %v4937
    %5284 = vmatmul.mubr.bf16.gmra.mrb[0].mxu0 %v4936
    %v5285 = vpop.f32.mrb[0].mxu0
    %v5286 = vadd.f32 %v4984, %v5285
    %v5287 = vpop.f32.mrb[0].mxu0
    %v5288 = vadd.f32 %v4988, %v5287
    %v5289 = vpop.f32.mrb[0].mxu0
    %v5290 = vadd.f32 %v4984, %v5289
    %v5291 = vpop.f32.mrb[0].mxu0
    %v5292 = vadd.f32 %v4988, %v5291
    %5293 = vmatprep.mubr.bf16.mxu0 %v4939
    %5294 = vmatmul.mubr.bf16.gmra.mrb[0].mxu0 %v4938
    %v5295 = vpop.f32.mrb[0].mxu0
    %v5296 = vadd.f32 %v4984, %v5295
    %v5297 = vpop.f32.mrb[0].mxu0
    %v5298 = vadd.f32 %v4988, %v5297
    %v5299 = vpop.f32.mrb[0].mxu0
    %v5300 = vadd.f32 %v4984, %v5299
    %v5301 = vpop.f32.mrb[0].mxu0
    %v5302 = vadd.f32 %v4988, %v5301
    %5303 = vmatprep.mubr.bf16.mxu0 %v4941
    %5304 = vmatmul.mubr.bf16.gmra.mrb[0].mxu0 %v4940
    %v5305 = vpop.f32.mrb[0].mxu0
    %v5306 = vadd.f32 %v4984, %v5305
    %v5307 = vpop.f32.mrb[0].mxu0
    %v5308 = vadd.f32 %v4988, %v5307
    %v5309 = vpop.f32.mrb[0].mxu0
    %v5310 = vadd.f32 %v4984, %v5309
    %v5311 = vpop.f32.mrb[0].mxu0
    %v5312 = vadd.f32 %v4988, %v5311
    %5313 = vmatprep.mubr.bf16.mxu0 %v4943
    %5314 = vmatmul.mubr.bf16.gmra.mrb[0].mxu0 %v4942
    %v5315 = vpop.f32.mrb[0].mxu0
    %v5316 = vadd.f32 %v4984, %v5315
    %v5317 = vpop.f32.mrb[0].mxu0
    %v5318 = vadd.f32 %v4988, %v5317
    %v5319 = vpop.f32.mrb[0].mxu0
    %v5320 = vadd.f32 %v4984, %v5319
    %v5321 = vpop.f32.mrb[0].mxu0
    %v5322 = vadd.f32 %v4988, %v5321
    %5323 = vmatprep.mubr.bf16.mxu0 %v4945
    %5324 = vmatmul.mubr.bf16.gmra.mrb[0].mxu0 %v4944
    %v5325 = vpop.f32.mrb[0].mxu0
    %v5326 = vadd.f32 %v4984, %v5325
    %v5327 = vpop.f32.mrb[0].mxu0
    %v5328 = vadd.f32 %v4988, %v5327
    %v5329 = vpop.f32.mrb[0].mxu0
    %v5330 = vadd.f32 %v4984, %v5329
    %v5331 = vpop.f32.mrb[0].mxu0
    %v5332 = vadd.f32 %v4988, %v5331
    %5333 = vmatprep.mubr.bf16.mxu0 %v4947
    %5334 = vmatmul.mubr.bf16.gmra.mrb[0].mxu0 %v4946
    %v5335 = vpop.f32.mrb[0].mxu0
    %v5336 = vadd.f32 %v4984, %v5335
    %v5337 = vpop.f32.mrb[0].mxu0
    %v5338 = vadd.f32 %v4988, %v5337
    %v5339 = vpop.f32.mrb[0].mxu0
    %v5340 = vadd.f32 %v4984, %v5339
    %v5341 = vpop.f32.mrb[0].mxu0
    %v5342 = vadd.f32 %v4988, %v5341
    %5343 = vdwg.mxu0
    %v5344 = vmax.f32 %v5186, 0.0
    %v5345 = vmax.f32 %v5188, 0.0
    %v5346 = vmax.f32 %v5190, 0.0
    %v5347 = vmax.f32 %v5192, 0.0
    %v5348 = vmax.f32 %v5196, 0.0
    %v5349 = vmax.f32 %v5198, 0.0
    %v5350 = vmax.f32 %v5200, 0.0
    %v5351 = vmax.f32 %v5202, 0.0
    %v5352 = vmax.f32 %v5206, 0.0
    %v5353 = vmax.f32 %v5208, 0.0
    %v5354 = vmax.f32 %v5210, 0.0
    %v5355 = vmax.f32 %v5212, 0.0
    %v5356 = vmax.f32 %v5216, 0.0
    %v5357 = vmax.f32 %v5218, 0.0
    %v5358 = vmax.f32 %v5220, 0.0
    %v5359 = vmax.f32 %v5222, 0.0
    %v5360 = vmax.f32 %v5226, 0.0
    %v5361 = vmax.f32 %v5228, 0.0
    %v5362 = vmax.f32 %v5230, 0.0
    %v5363 = vmax.f32 %v5232, 0.0
    %v5364 = vmax.f32 %v5236, 0.0
    %v5365 = vmax.f32 %v5238, 0.0
    %v5366 = vmax.f32 %v5240, 0.0
    %v5367 = vmax.f32 %v5242, 0.0
    %v5368 = vmax.f32 %v5246, 0.0
    %v5369 = vmax.f32 %v5248, 0.0
    %v5370 = vmax.f32 %v5250, 0.0
    %v5371 = vmax.f32 %v5252, 0.0
    %v5372 = vmax.f32 %v5256, 0.0
    %v5373 = vmax.f32 %v5258, 0.0
    %v5374 = vmax.f32 %v5260, 0.0
    %v5375 = vmax.f32 %v5262, 0.0
    %v5376 = vmax.f32 %v5266, 0.0
    %v5377 = vmax.f32 %v5268, 0.0
    %v5378 = vmax.f32 %v5270, 0.0
    %v5379 = vmax.f32 %v5272, 0.0
    %v5380 = vmax.f32 %v5276, 0.0
    %v5381 = vmax.f32 %v5278, 0.0
    %v5382 = vmax.f32 %v5280, 0.0
    %v5383 = vmax.f32 %v5282, 0.0
    %v5384 = vmax.f32 %v5286, 0.0
    %v5385 = vmax.f32 %v5288, 0.0
    %v5386 = vmax.f32 %v5290, 0.0
    %v5387 = vmax.f32 %v5292, 0.0
    %v5388 = vmax.f32 %v5296, 0.0
    %v5389 = vmax.f32 %v5298, 0.0
    %v5390 = vmax.f32 %v5300, 0.0
    %v5391 = vmax.f32 %v5302, 0.0
    %v5392 = vmax.f32 %v5306, 0.0
    %v5393 = vmax.f32 %v5308, 0.0
    %v5394 = vmax.f32 %v5310, 0.0
    %v5395 = vmax.f32 %v5312, 0.0
    %v5396 = vmax.f32 %v5316, 0.0
    %v5397 = vmax.f32 %v5318, 0.0
    %v5398 = vmax.f32 %v5320, 0.0
    %v5399 = vmax.f32 %v5322, 0.0
    %v5400 = vmax.f32 %v5326, 0.0
    %v5401 = vmax.f32 %v5328, 0.0
    %v5402 = vmax.f32 %v5330, 0.0
    %v5403 = vmax.f32 %v5332, 0.0
    %v5404 = vmax.f32 %v5336, 0.0
    %v5405 = vmax.f32 %v5338, 0.0
    %v5406 = vmax.f32 %v5340, 0.0
    %v5407 = vmax.f32 %v5342, 0.0
    %v5408 = vld [vmem:[%s5] sm:$0x3]
    %v5410 = vlaneseq
    %v5411 = vshrl.u32 %v5410, 7
    %v5412 = vsub.s32 0, %v5411
    %v5413 = vrot.slane %v5408, %v5412
    %v5414 = vlaneseq
    %v5415 = vshrl.u32 %v5414, 7
    %v5416 = vsub.s32 1, %v5415
    %v5417 = vrot.slane %v5408, %v5416
    %v5420 = vmul.f32 %v5344, %v5413
    %v5421 = vmul.f32 %v5345, %v5417
    %v5422 = vmul.f32 %v5346, %v5413
    %v5423 = vmul.f32 %v5347, %v5417
    %v5424 = vmul.f32 %v5348, %v5413
    %v5425 = vmul.f32 %v5349, %v5417
    %v5426 = vmul.f32 %v5350, %v5413
    %v5427 = vmul.f32 %v5351, %v5417
    %v5428 = vmul.f32 %v5352, %v5413
    %v5429 = vmul.f32 %v5353, %v5417
    %v5430 = vmul.f32 %v5354, %v5413
    %v5431 = vmul.f32 %v5355, %v5417
    %v5432 = vmul.f32 %v5356, %v5413
    %v5433 = vmul.f32 %v5357, %v5417
    %v5434 = vmul.f32 %v5358, %v5413
    %v5435 = vmul.f32 %v5359, %v5417
    %v5436 = vmul.f32 %v5360, %v5413
    %v5437 = vmul.f32 %v5361, %v5417
    %v5438 = vmul.f32 %v5362, %v5413
    %v5439 = vmul.f32 %v5363, %v5417
    %v5440 = vmul.f32 %v5364, %v5413
    %v5441 = vmul.f32 %v5365, %v5417
    %v5442 = vmul.f32 %v5366, %v5413
    %v5443 = vmul.f32 %v5367, %v5417
    %v5444 = vmul.f32 %v5368, %v5413
    %v5445 = vmul.f32 %v5369, %v5417
    %v5446 = vmul.f32 %v5370, %v5413
    %v5447 = vmul.f32 %v5371, %v5417
    %v5448 = vmul.f32 %v5372, %v5413
    %v5449 = vmul.f32 %v5373, %v5417
    %v5450 = vmul.f32 %v5374, %v5413
    %v5451 = vmul.f32 %v5375, %v5417
    %v5452 = vmul.f32 %v5376, %v5413
    %v5453 = vmul.f32 %v5377, %v5417
    %v5454 = vmul.f32 %v5378, %v5413
    %v5455 = vmul.f32 %v5379, %v5417
    %v5456 = vmul.f32 %v5380, %v5413
    %v5457 = vmul.f32 %v5381, %v5417
    %v5458 = vmul.f32 %v5382, %v5413
    %v5459 = vmul.f32 %v5383, %v5417
    %v5460 = vmul.f32 %v5384, %v5413
    %v5461 = vmul.f32 %v5385, %v5417
    %v5462 = vmul.f32 %v5386, %v5413
    %v5463 = vmul.f32 %v5387, %v5417
    %v5464 = vmul.f32 %v5388, %v5413
    %v5465 = vmul.f32 %v5389, %v5417
    %v5466 = vmul.f32 %v5390, %v5413
    %v5467 = vmul.f32 %v5391, %v5417
    %v5468 = vmul.f32 %v5392, %v5413
    %v5469 = vmul.f32 %v5393, %v5417
    %v5470 = vmul.f32 %v5394, %v5413
    %v5471 = vmul.f32 %v5395, %v5417
    %v5472 = vmul.f32 %v5396, %v5413
    %v5473 = vmul.f32 %v5397, %v5417
    %v5474 = vmul.f32 %v5398, %v5413
    %v5475 = vmul.f32 %v5399, %v5417
    %v5476 = vmul.f32 %v5400, %v5413
    %v5477 = vmul.f32 %v5401, %v5417
    %v5478 = vmul.f32 %v5402, %v5413
    %v5479 = vmul.f32 %v5403, %v5417
    %v5480 = vmul.f32 %v5404, %v5413
    %v5481 = vmul.f32 %v5405, %v5417
    %v5482 = vmul.f32 %v5406, %v5413
    %v5483 = vmul.f32 %v5407, %v5417
    %v5484 = vadd.f32 %v5420, %v5421
    %5485 = vadd.xlane.f32.xlu0 %v5484
    %v5486 = vpop.xlane.xlu0 %5485
    %v5487 = vadd.f32 %v5422, %v5423
    %5488 = vadd.xlane.f32.xlu0 %v5487
    %v5489 = vpop.xlane.xlu0 %5488
    %v5490 = vadd.f32 %v5424, %v5425
    %5491 = vadd.xlane.f32.xlu0 %v5490
    %v5492 = vpop.xlane.xlu0 %5491
    %v5493 = vadd.f32 %v5426, %v5427
    %5494 = vadd.xlane.f32.xlu0 %v5493
    %v5495 = vpop.xlane.xlu0 %5494
    %v5496 = vadd.f32 %v5428, %v5429
    %5497 = vadd.xlane.f32.xlu0 %v5496
    %v5498 = vpop.xlane.xlu0 %5497
    %v5499 = vadd.f32 %v5430, %v5431
    %5500 = vadd.xlane.f32.xlu0 %v5499
    %v5501 = vpop.xlane.xlu0 %5500
    %v5502 = vadd.f32 %v5432, %v5433
    %5503 = vadd.xlane.f32.xlu0 %v5502
    %v5504 = vpop.xlane.xlu0 %5503
    %v5505 = vadd.f32 %v5434, %v5435
    %5506 = vadd.xlane.f32.xlu0 %v5505
    %v5507 = vpop.xlane.xlu0 %5506
    %v5508 = vadd.f32 %v5436, %v5437
    %5509 = vadd.xlane.f32.xlu0 %v5508
    %v5510 = vpop.xlane.xlu0 %5509
    %v5511 = vadd.f32 %v5438, %v5439
    %5512 = vadd.xlane.f32.xlu0 %v5511
    %v5513 = vpop.xlane.xlu0 %5512
    %v5514 = vadd.f32 %v5440, %v5441
    %5515 = vadd.xlane.f32.xlu0 %v5514
    %v5516 = vpop.xlane.xlu0 %5515
    %v5517 = vadd.f32 %v5442, %v5443
    %5518 = vadd.xlane.f32.xlu0 %v5517
    %v5519 = vpop.xlane.xlu0 %5518
    %v5520 = vadd.f32 %v5444, %v5445
    %5521 = vadd.xlane.f32.xlu0 %v5520
    %v5522 = vpop.xlane.xlu0 %5521
    %v5523 = vadd.f32 %v5446, %v5447
    %5524 = vadd.xlane.f32.xlu0 %v5523
    %v5525 = vpop.xlane.xlu0 %5524
    %v5526 = vadd.f32 %v5448, %v5449
    %5527 = vadd.xlane.f32.xlu0 %v5526
    %v5528 = vpop.xlane.xlu0 %5527
    %v5529 = vadd.f32 %v5450, %v5451
    %5530 = vadd.xlane.f32.xlu0 %v5529
    %v5531 = vpop.xlane.xlu0 %5530
    %v5532 = vadd.f32 %v5452, %v5453
    %5533 = vadd.xlane.f32.xlu0 %v5532
    %v5534 = vpop.xlane.xlu0 %5533
    %v5535 = vadd.f32 %v5454, %v5455
    %5536 = vadd.xlane.f32.xlu0 %v5535
    %v5537 = vpop.xlane.xlu0 %5536
    %v5538 = vadd.f32 %v5456, %v5457
    %5539 = vadd.xlane.f32.xlu0 %v5538
    %v5540 = vpop.xlane.xlu0 %5539
    %v5541 = vadd.f32 %v5458, %v5459
    %5542 = vadd.xlane.f32.xlu0 %v5541
    %v5543 = vpop.xlane.xlu0 %5542
    %v5544 = vadd.f32 %v5460, %v5461
    %5545 = vadd.xlane.f32.xlu0 %v5544
    %v5546 = vpop.xlane.xlu0 %5545
    %v5547 = vadd.f32 %v5462, %v5463
    %5548 = vadd.xlane.f32.xlu0 %v5547
    %v5549 = vpop.xlane.xlu0 %5548
    %v5550 = vadd.f32 %v5464, %v5465
    %5551 = vadd.xlane.f32.xlu0 %v5550
    %v5552 = vpop.xlane.xlu0 %5551
    %v5553 = vadd.f32 %v5466, %v5467
    %5554 = vadd.xlane.f32.xlu0 %v5553
    %v5555 = vpop.xlane.xlu0 %5554
    %v5556 = vadd.f32 %v5468, %v5469
    %5557 = vadd.xlane.f32.xlu0 %v5556
    %v5558 = vpop.xlane.xlu0 %5557
    %v5559 = vadd.f32 %v5470, %v5471
    %5560 = vadd.xlane.f32.xlu0 %v5559
    %v5561 = vpop.xlane.xlu0 %5560
    %v5562 = vadd.f32 %v5472, %v5473
    %5563 = vadd.xlane.f32.xlu0 %v5562
    %v5564 = vpop.xlane.xlu0 %5563
    %v5565 = vadd.f32 %v5474, %v5475
    %5566 = vadd.xlane.f32.xlu0 %v5565
    %v5567 = vpop.xlane.xlu0 %5566
    %v5568 = vadd.f32 %v5476, %v5477
    %5569 = vadd.xlane.f32.xlu0 %v5568
    %v5570 = vpop.xlane.xlu0 %5569
    %v5571 = vadd.f32 %v5478, %v5479
    %5572 = vadd.xlane.f32.xlu0 %v5571
    %v5573 = vpop.xlane.xlu0 %5572
    %v5574 = vadd.f32 %v5480, %v5481
    %5575 = vadd.xlane.f32.xlu0 %v5574
    %v5576 = vpop.xlane.xlu0 %5575
    %v5577 = vadd.f32 %v5482, %v5483
    %5578 = vadd.xlane.f32.xlu0 %v5577
    %v5579 = vpop.xlane.xlu0 %5578
    %v5581 = vlaneseq
    %v5582 = vshrl.u32 %v5581, 7
    %v5583 = vsub.s32 0, %v5582
    %v5584 = vrot.slane %v72, %v5583
    %v5586 = vadd.f32 %v5486, %v5584
    %v5587 = vadd.f32 %v5489, %v5584
    %v5588 = vadd.f32 %v5492, %v5584
    %v5589 = vadd.f32 %v5495, %v5584
    %v5590 = vadd.f32 %v5498, %v5584
    %v5591 = vadd.f32 %v5501, %v5584
    %v5592 = vadd.f32 %v5504, %v5584
    %v5593 = vadd.f32 %v5507, %v5584
    %v5594 = vadd.f32 %v5510, %v5584
    %v5595 = vadd.f32 %v5513, %v5584
    %v5596 = vadd.f32 %v5516, %v5584
    %v5597 = vadd.f32 %v5519, %v5584
    %v5598 = vadd.f32 %v5522, %v5584
    %v5599 = vadd.f32 %v5525, %v5584
    %v5600 = vadd.f32 %v5528, %v5584
    %v5601 = vadd.f32 %v5531, %v5584
    %v5602 = vadd.f32 %v5534, %v5584
    %v5603 = vadd.f32 %v5537, %v5584
    %v5604 = vadd.f32 %v5540, %v5584
    %v5605 = vadd.f32 %v5543, %v5584
    %v5606 = vadd.f32 %v5546, %v5584
    %v5607 = vadd.f32 %v5549, %v5584
    %v5608 = vadd.f32 %v5552, %v5584
    %v5609 = vadd.f32 %v5555, %v5584
    %v5610 = vadd.f32 %v5558, %v5584
    %v5611 = vadd.f32 %v5561, %v5584
    %v5612 = vadd.f32 %v5564, %v5584
    %v5613 = vadd.f32 %v5567, %v5584
    %v5614 = vadd.f32 %v5570, %v5584
    %v5615 = vadd.f32 %v5573, %v5584
    %v5616 = vadd.f32 %v5576, %v5584
    %v5617 = vadd.f32 %v5579, %v5584
    %vm5618 = vcmask 7168
    %5619 = vst.msk [vmem:[%s7] sm:$0xff] %vm5618, %v5586
    %5620 = vst.msk [vmem:[%s7 + $0x8] sm:$0xff] %vm5618, %v5587
    %5621 = vst.msk [vmem:[%s7 + $0x10] sm:$0xff] %vm5618, %v5588
    %5622 = vst.msk [vmem:[%s7 + $0x18] sm:$0xff] %vm5618, %v5589
    %5623 = vst.msk [vmem:[%s7 + $0x20] sm:$0xff] %vm5618, %v5590
    %5624 = vst.msk [vmem:[%s7 + $0x28] sm:$0xff] %vm5618, %v5591
    %5625 = vst.msk [vmem:[%s7 + $0x30] sm:$0xff] %vm5618, %v5592
    %5626 = vst.msk [vmem:[%s7 + $0x38] sm:$0xff] %vm5618, %v5593
    %5627 = vst.msk [vmem:[%s7 + $0x40] sm:$0xff] %vm5618, %v5594
    %5628 = vst.msk [vmem:[%s7 + $0x48] sm:$0xff] %vm5618, %v5595
    %5629 = vst.msk [vmem:[%s7 + $0x50] sm:$0xff] %vm5618, %v5596
    %5630 = vst.msk [vmem:[%s7 + $0x58] sm:$0xff] %vm5618, %v5597
    %5631 = vst.msk [vmem:[%s7 + $0x60] sm:$0xff] %vm5618, %v5598
    %5632 = vst.msk [vmem:[%s7 + $0x68] sm:$0xff] %vm5618, %v5599
    %5633 = vst.msk [vmem:[%s7 + $0x70] sm:$0xff] %vm5618, %v5600
    %5634 = vst.msk [vmem:[%s7 + $0x78] sm:$0xff] %vm5618, %v5601
    %5635 = vst.msk [vmem:[%s7 + $0x80] sm:$0xff] %vm5618, %v5602
    %5636 = vst.msk [vmem:[%s7 + $0x88] sm:$0xff] %vm5618, %v5603
    %5637 = vst.msk [vmem:[%s7 + $0x90] sm:$0xff] %vm5618, %v5604
    %5638 = vst.msk [vmem:[%s7 + $0x98] sm:$0xff] %vm5618, %v5605
    %5639 = vst.msk [vmem:[%s7 + $0xa0] sm:$0xff] %vm5618, %v5606
    %5640 = vst.msk [vmem:[%s7 + $0xa8] sm:$0xff] %vm5618, %v5607
    %5641 = vst.msk [vmem:[%s7 + $0xb0] sm:$0xff] %vm5618, %v5608
    %5642 = vst.msk [vmem:[%s7 + $0xb8] sm:$0xff] %vm5618, %v5609
    %5643 = vst.msk [vmem:[%s7 + $0xc0] sm:$0xff] %vm5618, %v5610
    %5644 = vst.msk [vmem:[%s7 + $0xc8] sm:$0xff] %vm5618, %v5611
    %5645 = vst.msk [vmem:[%s7 + $0xd0] sm:$0xff] %vm5618, %v5612
    %5646 = vst.msk [vmem:[%s7 + $0xd8] sm:$0xff] %vm5618, %v5613
    %5647 = vst.msk [vmem:[%s7 + $0xe0] sm:$0xff] %vm5618, %v5614
    %5648 = vst.msk [vmem:[%s7 + $0xe8] sm:$0xff] %vm5618, %v5615
    %5649 = vst.msk [vmem:[%s7 + $0xf0] sm:$0xff] %vm5618, %v5616
    %5650 = vst.msk [vmem:[%s7 + $0xf8] sm:$0xff] %vm5618, %v5617
    // Predicated region
    $region42: #{cnn_smem_forward.1} parent=1 // pred_check
      _
    $region43: #{cnn_smem_forward.1} parent=1 // pred_check_branch
      %5652 = sbr.rel (0) target = $region45
    $region44: #{cnn_smem_forward.1} parent=1 // pred_region
      _
    $region45: #{cnn_smem_forward.1} parent=1 // pred_fallthru
      _
    // Predicated region
    $region46: #{cnn_smem_forward.1} parent=1 // pred_check
      _
    $region47: #{cnn_smem_forward.1} parent=1 // pred_check_branch
      %5654 = sbr.rel (0) target = $region49
    $region48: #{cnn_smem_forward.1} parent=1 // pred_region
      _
    $region49: #{cnn_smem_forward.1} parent=1 // pred_fallthru
      _
    %5655 = vsyncpa [#allocation3], 1
    %5656 = vsyncpa [#allocation5], 1

</llo_original>
